<compile_context>
chip_gen: v5e
topology: v5e:2x2
jax: 0.10.0
libtpu: 0.0.40
codegen_flags: <defaults>
</compile_context>

<pallas_src>
import functools

import jax
import jax.numpy as jnp
from jax.experimental import pallas as pl
from jax.experimental.pallas import tpu as pltpu  # noqa: F401  (kept for TPU-specific tuning hooks)

# ----------------- small synthetic config (consistent with the module) -----------------
B = 2
PATCH = 4
FLAT = PATCH * PATCH * 3          # flatten_patch_size = patch_size^2 * 3 = 48
N_PATCH = 7                       # patches per image
V_LEN = N_PATCH + 1               # + visual CLS token   (max_n_patches + 1)
T_LEN = 8                         # text length          (max_n_words + 2)
N_TOK = T_LEN + V_LEN             # 16 total tokens
D = 32                            # embed_dim
NUM_HEADS = 4
HEAD_DIM = D // NUM_HEADS         # 8
HIDDEN = 4 * D                    # ViT MLP hidden = 128
DEPTH = 2                         # number of transformer blocks
VOCAB = 100
SCALE = HEAD_DIM ** -0.5
EMB_EPS = 1e-5                    # nn.LayerNorm default (v_emb_norm / t_emb_norm)
BLK_EPS = 1e-6                    # timm ViT block LayerNorm eps
MASK_VAL = -1e30                  # _MASKING_VALUE for float32

# ---- packed-slab layout constants ----
WIDE = 128                        # lane-dense slab width (== HIDDEN, >= 3*D)
WP_ROWS = 56                      # patch-proj rows: FLAT(48) + 1 cls-selector row + 7 zero pad
OFF_VPE = WP_ROWS                 # 56  visual pos+mod(+patch bias) rows, tiled over batch
OFF_TPE = OFF_VPE + B * V_LEN     # 72  text pos+mod rows, tiled over batch
OFF_EVEC = OFF_TPE + B * T_LEN    # 88  vg / vb / tg / tb
EMBW_ROWS = OFF_EVEC + 4          # 92
VEC_ROW = 2 * D                   # row offset of the per-block 1-row vectors in the wide slab

assert HIDDEN == WIDE and 3 * D <= WIDE
assert B * NUM_HEADS * N_TOK == 128          # softmax slab is exactly 128 sublanes


def _layernorm(x, g, b, eps):
    mu = jnp.mean(x, axis=-1, keepdims=True)
    var = jnp.mean((x - mu) ** 2, axis=-1, keepdims=True)
    return (x - mu) * jax.lax.rsqrt(var + eps) * g + b


# ----------------------------------- fused Pallas kernel -----------------------------------
def vilt_fused_kernel(vis_aug_ref, temb_ref, bias_ref, embw_ref,
                      blk_wide_ref, blk_narrow_ref, out_ref):
    """Whole ViLT forward: embeddings + DEPTH masked ViT blocks, activations kept on-chip."""
    f32 = jnp.float32

    # ---- embeddings -------------------------------------------------------------------
    embw = embw_ref[...]                                   # [EMBW_ROWS, D]
    wp = embw[0:WP_ROWS]                                   # patch proj (+ cls row, zero pad)
    vpe = embw[OFF_VPE:OFF_VPE + B * V_LEN]                # v_pos + v_mod + patch bias (tiled)
    tpe = embw[OFF_TPE:OFF_TPE + B * T_LEN]                # t_pos + t_mod (tiled)
    vg = embw[OFF_EVEC + 0:OFF_EVEC + 1]
    vb = embw[OFF_EVEC + 1:OFF_EVEC + 2]
    tg = embw[OFF_EVEC + 2:OFF_EVEC + 3]
    tb = embw[OFF_EVEC + 3:OFF_EVEC + 4]

    # Patch projection; the CLS-selector column makes the same matmul emit the CLS row, so the
    # visual block is produced 8-sublane aligned with no in-kernel prepend.
    v = jnp.dot(vis_aug_ref[...], wp, preferred_element_type=f32) + vpe          # [B*V_LEN, D]
    v = _layernorm(v, vg, vb, EMB_EPS)
    t = _layernorm(temb_ref[...] + tpe, tg, tb, EMB_EPS)                          # [B*T_LEN, D]

    # Interleave per batch: [text_b ; vision_b].  All offsets are multiples of 8 sublanes.
    parts = []
    for b in range(B):
        parts.append(t[b * T_LEN:(b + 1) * T_LEN])
        parts.append(v[b * V_LEN:(b + 1) * V_LEN])
    x = jnp.concatenate(parts, axis=0)                                            # [B*N_TOK, D]

    bias = bias_ref[...]                                   # [B*H*N, N] additive 0 / MASK_VAL

    # ---- transformer blocks (fully unrolled; weights indexed with static ints) ---------
    for d in range(DEPTH):
        bw = blk_wide_ref[d]                               # [2D+8, WIDE]: Wqkv | Wf1 | vectors
        bn = blk_narrow_ref[d]                             # [D+HIDDEN, D]: Wo | Wf2
        w_qkv = bw[0:D]                                    # [D, WIDE] (q-part pre-scaled)
        w_f1 = bw[D:2 * D]                                 # [D, HIDDEN]
        ln1g = bw[VEC_ROW + 0:VEC_ROW + 1, 0:D]
        ln1b = bw[VEC_ROW + 1:VEC_ROW + 2, 0:D]
        b_qkv = bw[VEC_ROW + 2:VEC_ROW + 3, :]             # [1, WIDE] (pad lanes are zero)
        bo = bw[VEC_ROW + 3:VEC_ROW + 4, 0:D]
        ln2g = bw[VEC_ROW + 4:VEC_ROW + 5, 0:D]
        ln2b = bw[VEC_ROW + 5:VEC_ROW + 6, 0:D]
        bf1 = bw[VEC_ROW + 6:VEC_ROW + 7, :]               # [1, HIDDEN]
        bf2 = bw[VEC_ROW + 7:VEC_ROW + 8, 0:D]

        h = _layernorm(x, ln1g, ln1b, BLK_EPS)

        # One fused, lane-dense QKV matmul (softmax scale folded into the q columns/bias).
        qkv = jnp.dot(h, w_qkv, preferred_element_type=f32) + b_qkv               # [B*N, WIDE]

        # Per-(batch, head) score tiles, sublane-stacked -> ONE softmax over [128, 16].
        s_tiles = []
        for b in range(B):
            r0, r1 = b * N_TOK, (b + 1) * N_TOK
            for hh in range(NUM_HEADS):
                c = hh * HEAD_DIM
                q_bh = qkv[r0:r1, c:c + HEAD_DIM]                                 # [N, hd]
                k_bh = qkv[r0:r1, D + c:D + c + HEAD_DIM]                         # [N, hd]
                s_tiles.append(jax.lax.dot_general(
                    q_bh, k_bh, (((1,), (1,)), ((), ())),
                    preferred_element_type=f32))                                  # [N, N]
        s = jnp.concatenate(s_tiles, axis=0) + bias                               # [B*H*N, N]
        m = jnp.max(s, axis=-1, keepdims=True)
        e = jnp.exp(s - m)
        den = jnp.sum(e, axis=-1, keepdims=True)
        p_attn = e * pl.reciprocal(den, approx=True)                              # EUP slot

        # PV per (batch, head); recombine heads on lanes, batches on sublanes -> [B*N, D],
        # then ONE full [D, D] output projection.
        o_rows = []
        for b in range(B):
            r0, r1 = b * N_TOK, (b + 1) * N_TOK
            cols = []
            for hh in range(NUM_HEADS):
                blk_i = b * NUM_HEADS + hh
                p_tile = p_attn[blk_i * N_TOK:(blk_i + 1) * N_TOK]                # [N, N]
                v_bh = qkv[r0:r1, 2 * D + hh * HEAD_DIM:2 * D + (hh + 1) * HEAD_DIM]
                cols.append(jnp.dot(p_tile, v_bh, preferred_element_type=f32))    # [N, hd]
            o_rows.append(jnp.concatenate(cols, axis=1))                          # [N, D]
        o = jnp.concatenate(o_rows, axis=0)                                       # [B*N, D]

        x = x + jnp.dot(o, bn[0:D], preferred_element_type=f32) + bo

        h2 = _layernorm(x, ln2g, ln2b, BLK_EPS)
        ff = jnp.dot(h2, w_f1, preferred_element_type=f32) + bf1                  # [B*N, HIDDEN]
        # TODO(synk): timm ViT uses exact (erf) GELU; tanh approximation used for portable lowering.
        ff = jax.nn.gelu(ff, approximate=True)
        x = x + jnp.dot(ff, bn[D:D + HIDDEN], preferred_element_type=f32) + bf2

    out_ref[...] = x


# ----------------------------------- weight packing (run ONCE) -----------------------------------
def pack_weights(p):
    """Data-independent packing of all weights into 3 slabs.  Hoisted out of the per-call path."""
    # Embedding-stage slab [EMBW_ROWS, D]:
    #   rows 0:48  patch-proj weight (transposed), row 48 = cls - bp (bp is folded into vpe),
    #   rows 49:56 zero pad, 56:72 vpe (+bp +vmod, tiled over B), 72:88 tpe (+tmod, tiled),
    #   rows 88:92 vg, vb, tg, tb.
    wp_blk = jnp.concatenate([
        p['wp_T'],
        p['cls'] - p['bp'],
        jnp.zeros((WP_ROWS - FLAT - 1, D), jnp.float32)], axis=0)                 # [WP_ROWS, D]
    vpe = jnp.tile(p['vpos'] + p['vmod'] + p['bp'], (B, 1))                       # [B*V_LEN, D]
    tpe = jnp.tile(p['tpos'] + p['tmod'], (B, 1))                                 # [B*T_LEN, D]
    embw = jnp.concatenate([wp_blk, vpe, tpe, p['vg'], p['vb'], p['tg'], p['tb']], axis=0)

    def padw(a):   # pad a [rows, w<=WIDE] tensor to WIDE lanes with zeros
        return jnp.pad(a, ((0, 0), (0, WIDE - a.shape[1])))

    wide, narrow = [], []
    for blk in p['blocks']:
        w_qkv = jnp.concatenate([blk['wq_T'] * SCALE, blk['wk_T'], blk['wv_T']], axis=1)  # [D, 3D]
        b_qkv = jnp.concatenate([blk['bq'] * SCALE, blk['bk'], blk['bv']], axis=1)        # [1, 3D]
        vec = jnp.concatenate([
            padw(blk['ln1g']), padw(blk['ln1b']), padw(b_qkv), padw(blk['bo']),
            padw(blk['ln2g']), padw(blk['ln2b']), padw(blk['bf1']), padw(blk['bf2'])],
            axis=0)                                                                        # [8, WIDE]
        wide.append(jnp.concatenate([padw(w_qkv), blk['wf1_T'], vec], axis=0))             # [2D+8, WIDE]
        narrow.append(jnp.concatenate([blk['wo_T'], blk['wf2_T']], axis=0))                # [D+HIDDEN, D]

    return embw, jnp.stack(wide, axis=0), jnp.stack(narrow, axis=0)


# ----------------------------------- forward wrapper -----------------------------------
@jax.jit
def vilt_forward(vis_in, txt_in, vis_mask, txt_mask, w_embed, packed):
    """Per-call path: embedding gather + vis_aug + mask-bias construction, then one pallas_call."""
    embw, blk_wide, blk_narrow = packed

    # Text embedding gather (padding_idx rows of w_embed are zero).
    t_emb = jnp.take(w_embed, txt_in, axis=0).reshape(B * T_LEN, D)

    # Vision: prepend a CLS-selector row per batch and pad lanes to WP_ROWS so the patch-proj
    # matmul also emits the CLS token (no in-kernel concat, 8-row aligned).
    sel = jnp.zeros((B, V_LEN, 1), jnp.float32).at[:, 0, 0].set(1.0)
    patches = jnp.concatenate([jnp.zeros((B, 1, FLAT), jnp.float32), vis_in], axis=1)
    lane_pad = jnp.zeros((B, V_LEN, WP_ROWS - FLAT - 1), jnp.float32)
    vis_aug = jnp.concatenate([patches, sel, lane_pad], axis=-1).reshape(B * V_LEN, WP_ROWS)

    # Attention mask as an additive 0 / MASK_VAL bias, pre-expanded over heads to the
    # sublane-stacked score layout [B*H*N, N] used inside the kernel.
    am = jnp.concatenate([txt_mask.astype(jnp.float32), jnp.ones((B, 1), jnp.float32),
                          vis_mask.astype(jnp.float32)], axis=-1)                 # [B, N]
    valid = am[:, :, None] * am[:, None, :]                                       # [B, N, N]
    bias = jnp.where(valid == 0.0, jnp.float32(MASK_VAL), jnp.float32(0.0))
    bias = jnp.broadcast_to(bias[:, None], (B, NUM_HEADS, N_TOK, N_TOK))
    bias = bias.reshape(B * NUM_HEADS * N_TOK, N_TOK)                             # [128, 16]

    out_flat = pl.pallas_call(
        vilt_fused_kernel,
        out_shape=jax.ShapeDtypeStruct((B * N_TOK, D), jnp.float32),
        # No grid: single invocation; every operand is a whole-array VMEM block (~150 KiB total).
    )(vis_aug, t_emb, bias, embw, blk_wide, blk_narrow)
    return out_flat.reshape(B, N_TOK, D)        # (self.norm not applied, as in forward())


# ----------------------------------- reference (plain JAX) -----------------------------------
def ref_forward(vis_in, txt_in, vis_mask, txt_mask, p):
    dot = functools.partial(jnp.matmul, precision=jax.lax.Precision.HIGHEST)

    def ln(x, g, b, eps):
        mu = x.mean(-1, keepdims=True)
        var = ((x - mu) ** 2).mean(-1, keepdims=True)
        return (x - mu) / jnp.sqrt(var + eps) * g + b

    t_emb = jnp.take(p['w_embed'], txt_in, axis=0)
    v_emb = dot(vis_in, p['wp_T']) + p['bp']
    cls = jnp.broadcast_to(p['cls'][None], (B, 1, D))
    v_emb = jnp.concatenate([cls, v_emb], axis=1)
    v_emb = ln(v_emb + p['vpos'][None] + p['vmod'][None], p['vg'], p['vb'], EMB_EPS)
    t_emb = ln(t_emb + p['tpos'][None] + p['tmod'][None], p['tg'], p['tb'], EMB_EPS)
    x = jnp.concatenate([t_emb, v_emb], axis=1)
    am = jnp.concatenate([txt_mask.astype(jnp.float32), jnp.ones((B, 1), jnp.float32),
                          vis_mask.astype(jnp.float32)], axis=-1)
    mask2d = am[:, :, None] * am[:, None, :]
    for bp in p['blocks']:
        h = ln(x, bp['ln1g'], bp['ln1b'], BLK_EPS)
        q = dot(h, bp['wq_T']) + bp['bq']
        k = dot(h, bp['wk_T']) + bp['bk']
        v = dot(h, bp['wv_T']) + bp['bv']
        qh = q.reshape(B, N_TOK, NUM_HEADS, HEAD_DIM).transpose(0, 2, 1, 3)
        kh = k.reshape(B, N_TOK, NUM_HEADS, HEAD_DIM).transpose(0, 2, 1, 3)
        vh = v.reshape(B, N_TOK, NUM_HEADS, HEAD_DIM).transpose(0, 2, 1, 3)
        s = jnp.einsum('bhqd,bhkd->bhqk', qh, kh,
                       precision=jax.lax.Precision.HIGHEST) * SCALE
        s = jnp.where(mask2d[:, None] == 0.0, MASK_VAL, s)
        pr = jax.nn.softmax(s, axis=-1)
        o = jnp.einsum('bhqk,bhkd->bhqd', pr, vh, precision=jax.lax.Precision.HIGHEST)
        o = o.transpose(0, 2, 1, 3).reshape(B, N_TOK, D)
        x = x + dot(o, bp['wo_T']) + bp['bo']
        h2 = ln(x, bp['ln2g'], bp['ln2b'], BLK_EPS)
        ff = jax.nn.gelu(dot(h2, bp['wf1_T']) + bp['bf1'], approximate=True)
        x = x + dot(ff, bp['wf2_T']) + bp['bf2']
    return x


# ----------------------------------- params -----------------------------------
def init_params(key):
    keys = list(jax.random.split(key, 64))
    it = iter(keys)

    def nrm(shape, scale=0.02):
        return (scale * jax.random.normal(next(it), shape)).astype(jnp.float32)

    w_embed = nrm((VOCAB, D))
    w_embed = w_embed.at[0].set(0.0)                          # padding_idx = 0
    p = dict(
        w_embed=w_embed,
        wp_T=nrm((FLAT, D)),                                  # patch_proj weight (transposed)
        bp=nrm((1, D)),
        cls=nrm((1, D)),                                      # v_cls token
        vpos=nrm((V_LEN, D)),                                 # v_pos_embed[:, :V_LEN]
        vmod=nrm((1, D)),                                     # v_mod_emb
        tpos=nrm((T_LEN, D)),                                 # t_pos_embed[:T_LEN]
        tmod=nrm((1, D)),                                     # t_mod_emb
        vg=jnp.ones((1, D), jnp.float32), vb=jnp.zeros((1, D), jnp.float32),
        tg=jnp.ones((1, D), jnp.float32), tb=jnp.zeros((1, D), jnp.float32),
        blocks=[],
    )
    for _ in range(DEPTH):
        p['blocks'].append(dict(
            ln1g=jnp.ones((1, D), jnp.float32), ln1b=jnp.zeros((1, D), jnp.float32),
            wq_T=nrm((D, D)), bq=nrm((1, D)),
            wk_T=nrm((D, D)), bk=nrm((1, D)),
            wv_T=nrm((D, D)), bv=nrm((1, D)),
            wo_T=nrm((D, D)), bo=nrm((1, D)),
            ln2g=jnp.ones((1, D), jnp.float32), ln2b=jnp.zeros((1, D), jnp.float32),
            wf1_T=nrm((D, HIDDEN)), bf1=nrm((1, HIDDEN)),
            wf2_T=nrm((HIDDEN, D)), bf2=nrm((1, D)),
        ))
    return p


if __name__ == "__main__":
    key = jax.random.PRNGKey(0)
    kp, kv, kt = jax.random.split(key, 3)
    params = init_params(kp)

    # Weight packing is data-independent: done ONCE here, not inside the jitted forward.
    packed = pack_weights(params)
    assert packed[0].shape == (EMBW_ROWS, D)
    assert packed[1].shape == (DEPTH, 2 * D + 8, WIDE)
    assert packed[2].shape == (DEPTH, D + HIDDEN, D)

    vis_mask = jnp.array([[1] * N_PATCH, [1] * 5 + [0] * 2], jnp.int32)      # [B, Np]
    txt_mask = jnp.array([[1] * T_LEN, [1] * 6 + [0] * 2], jnp.int32)        # [B, T]
    vis_in = jax.random.normal(kv, (B, N_PATCH, FLAT), jnp.float32)
    vis_in = vis_in * vis_mask[:, :, None].astype(jnp.float32)               # zero-padded patches
    txt_in = jax.random.randint(kt, (B, T_LEN), 1, VOCAB).astype(jnp.int32)
    txt_in = txt_in * txt_mask                                               # pad id = 0

    out = vilt_forward(vis_in, txt_in, vis_mask, txt_mask, params['w_embed'], packed)
    out = jax.block_until_ready(out)

    ref = ref_forward(vis_in, txt_in, vis_mask, txt_mask, params)
    assert out.shape == (B, N_TOK, D)
    assert bool(jnp.all(jnp.isfinite(out)))
    max_err = float(jnp.max(jnp.abs(out - ref)))
    assert max_err < 5e-2, f"mismatch vs reference: {max_err}"
    print("KERNEL_OK")
</pallas_src>

<mosaic_0001>
module attributes {stable_mosaic.version = 11 : i64} {
  func.func @vilt_fused_kernel(%arg0: memref<16x56xf32, #tpu.memory_space<vmem>>, %arg1: memref<16x32xf32, #tpu.memory_space<vmem>>, %arg2: memref<128x16xf32, #tpu.memory_space<vmem>>, %arg3: memref<92x32xf32, #tpu.memory_space<vmem>>, %arg4: memref<2x72x128xf32, #tpu.memory_space<vmem>>, %arg5: memref<2x160x32xf32, #tpu.memory_space<vmem>>, %arg6: memref<32x32xf32, #tpu.memory_space<vmem>>) attributes {dimension_semantics = [], scalar_prefetch = 0 : i64, scratch_operands = 0 : i64, tpu.core_type = #tpu.core_type<tc>} {
    %c0 = arith.constant 0 : index
    %c0_0 = arith.constant 0 : index
    %0 = vector.load %arg3[%c0, %c0_0] : memref<92x32xf32, #tpu.memory_space<vmem>>, vector<92x32xf32>
    %1 = vector.extract_strided_slice %0 {offsets = [0, 0], sizes = [56, 32], strides = [1, 1]} : vector<92x32xf32> to vector<56x32xf32>
    %2 = vector.extract_strided_slice %0 {offsets = [56, 0], sizes = [16, 32], strides = [1, 1]} : vector<92x32xf32> to vector<16x32xf32>
    %3 = vector.extract_strided_slice %0 {offsets = [72, 0], sizes = [16, 32], strides = [1, 1]} : vector<92x32xf32> to vector<16x32xf32>
    %4 = vector.extract_strided_slice %0 {offsets = [88, 0], sizes = [1, 32], strides = [1, 1]} : vector<92x32xf32> to vector<1x32xf32>
    %5 = vector.extract_strided_slice %0 {offsets = [89, 0], sizes = [1, 32], strides = [1, 1]} : vector<92x32xf32> to vector<1x32xf32>
    %6 = vector.extract_strided_slice %0 {offsets = [90, 0], sizes = [1, 32], strides = [1, 1]} : vector<92x32xf32> to vector<1x32xf32>
    %7 = vector.extract_strided_slice %0 {offsets = [91, 0], sizes = [1, 32], strides = [1, 1]} : vector<92x32xf32> to vector<1x32xf32>
    %c0_1 = arith.constant 0 : index
    %c0_2 = arith.constant 0 : index
    %8 = vector.load %arg0[%c0_1, %c0_2] : memref<16x56xf32, #tpu.memory_space<vmem>>, vector<16x56xf32>
    %cst = arith.constant dense<0.000000e+00> : vector<16x32xf32>
    %9 = tpu.matmul %8, %1, %cst {dimension_numbers = #tpu.dot_dimension_numbers<[1], [0], [0], [1], [0, 0, 1, 1], [], []>} : vector<16x56xf32>, vector<56x32xf32>, vector<16x32xf32> -> vector<16x32xf32>
    %10 = arith.addf %9, %2 : vector<16x32xf32>
    %cst_3 = arith.constant dense<0.000000e+00> : vector<16xf32>
    %11 = vector.multi_reduction <add>, %10, %cst_3 [1] : vector<16x32xf32> to vector<16xf32>
    %12 = vector.shape_cast %11 : vector<16xf32> to vector<16x1xf32>
    %cst_4 = arith.constant 3.200000e+01 : f32
    %13 = vector.broadcast %cst_4 : f32 to vector<16x1xf32>
    %14 = arith.divf %12, %13 : vector<16x1xf32>
    %15 = vector.broadcast %14 : vector<16x1xf32> to vector<16x32xf32>
    %16 = arith.subf %10, %15 : vector<16x32xf32>
    %17 = arith.mulf %16, %16 : vector<16x32xf32>
    %cst_5 = arith.constant dense<0.000000e+00> : vector<16xf32>
    %18 = vector.multi_reduction <add>, %17, %cst_5 [1] : vector<16x32xf32> to vector<16xf32>
    %19 = vector.shape_cast %18 : vector<16xf32> to vector<16x1xf32>
    %cst_6 = arith.constant 3.200000e+01 : f32
    %20 = vector.broadcast %cst_6 : f32 to vector<16x1xf32>
    %21 = arith.divf %19, %20 : vector<16x1xf32>
    %22 = vector.broadcast %14 : vector<16x1xf32> to vector<16x32xf32>
    %23 = arith.subf %10, %22 : vector<16x32xf32>
    %cst_7 = arith.constant 9.99999974E-6 : f32
    %24 = vector.broadcast %cst_7 : f32 to vector<16x1xf32>
    %25 = arith.addf %21, %24 : vector<16x1xf32>
    %26 = math.rsqrt %25 : vector<16x1xf32>
    %27 = vector.broadcast %26 : vector<16x1xf32> to vector<16x32xf32>
    %28 = arith.mulf %23, %27 : vector<16x32xf32>
    %29 = vector.broadcast %4 : vector<1x32xf32> to vector<16x32xf32>
    %30 = arith.mulf %28, %29 : vector<16x32xf32>
    %31 = vector.broadcast %5 : vector<1x32xf32> to vector<16x32xf32>
    %32 = arith.addf %30, %31 : vector<16x32xf32>
    %c0_8 = arith.constant 0 : index
    %c0_9 = arith.constant 0 : index
    %33 = vector.load %arg1[%c0_8, %c0_9] : memref<16x32xf32, #tpu.memory_space<vmem>>, vector<16x32xf32>
    %34 = arith.addf %33, %3 : vector<16x32xf32>
    %cst_10 = arith.constant dense<0.000000e+00> : vector<16xf32>
    %35 = vector.multi_reduction <add>, %34, %cst_10 [1] : vector<16x32xf32> to vector<16xf32>
    %36 = vector.shape_cast %35 : vector<16xf32> to vector<16x1xf32>
    %cst_11 = arith.constant 3.200000e+01 : f32
    %37 = vector.broadcast %cst_11 : f32 to vector<16x1xf32>
    %38 = arith.divf %36, %37 : vector<16x1xf32>
    %39 = vector.broadcast %38 : vector<16x1xf32> to vector<16x32xf32>
    %40 = arith.subf %34, %39 : vector<16x32xf32>
    %41 = arith.mulf %40, %40 : vector<16x32xf32>
    %cst_12 = arith.constant dense<0.000000e+00> : vector<16xf32>
    %42 = vector.multi_reduction <add>, %41, %cst_12 [1] : vector<16x32xf32> to vector<16xf32>
    %43 = vector.shape_cast %42 : vector<16xf32> to vector<16x1xf32>
    %cst_13 = arith.constant 3.200000e+01 : f32
    %44 = vector.broadcast %cst_13 : f32 to vector<16x1xf32>
    %45 = arith.divf %43, %44 : vector<16x1xf32>
    %46 = vector.broadcast %38 : vector<16x1xf32> to vector<16x32xf32>
    %47 = arith.subf %34, %46 : vector<16x32xf32>
    %cst_14 = arith.constant 9.99999974E-6 : f32
    %48 = vector.broadcast %cst_14 : f32 to vector<16x1xf32>
    %49 = arith.addf %45, %48 : vector<16x1xf32>
    %50 = math.rsqrt %49 : vector<16x1xf32>
    %51 = vector.broadcast %50 : vector<16x1xf32> to vector<16x32xf32>
    %52 = arith.mulf %47, %51 : vector<16x32xf32>
    %53 = vector.broadcast %6 : vector<1x32xf32> to vector<16x32xf32>
    %54 = arith.mulf %52, %53 : vector<16x32xf32>
    %55 = vector.broadcast %7 : vector<1x32xf32> to vector<16x32xf32>
    %56 = arith.addf %54, %55 : vector<16x32xf32>
    %57 = vector.extract_strided_slice %56 {offsets = [0, 0], sizes = [8, 32], strides = [1, 1]} : vector<16x32xf32> to vector<8x32xf32>
    %58 = vector.extract_strided_slice %32 {offsets = [0, 0], sizes = [8, 32], strides = [1, 1]} : vector<16x32xf32> to vector<8x32xf32>
    %59 = vector.extract_strided_slice %56 {offsets = [8, 0], sizes = [8, 32], strides = [1, 1]} : vector<16x32xf32> to vector<8x32xf32>
    %60 = vector.extract_strided_slice %32 {offsets = [8, 0], sizes = [8, 32], strides = [1, 1]} : vector<16x32xf32> to vector<8x32xf32>
    %61 = tpu.concatenate %57, %58, %59, %60 in 0 : vector<8x32xf32>, vector<8x32xf32>, vector<8x32xf32>, vector<8x32xf32> -> vector<32x32xf32>
    %c0_15 = arith.constant 0 : index
    %c0_16 = arith.constant 0 : index
    %62 = vector.load %arg2[%c0_15, %c0_16] : memref<128x16xf32, #tpu.memory_space<vmem>>, vector<128x16xf32>
    %c0_17 = arith.constant 0 : index
    %c0_18 = arith.constant 0 : index
    %c0_19 = arith.constant 0 : index
    %63 = vector.load %arg4[%c0_17, %c0_18, %c0_19] : memref<2x72x128xf32, #tpu.memory_space<vmem>>, vector<1x72x128xf32>
    %64 = vector.shape_cast %63 : vector<1x72x128xf32> to vector<72x128xf32>
    %c0_20 = arith.constant 0 : index
    %c0_21 = arith.constant 0 : index
    %c0_22 = arith.constant 0 : index
    %65 = vector.load %arg5[%c0_20, %c0_21, %c0_22] : memref<2x160x32xf32, #tpu.memory_space<vmem>>, vector<1x160x32xf32>
    %66 = vector.shape_cast %65 : vector<1x160x32xf32> to vector<160x32xf32>
    %67 = vector.extract_strided_slice %64 {offsets = [0, 0], sizes = [32, 128], strides = [1, 1]} : vector<72x128xf32> to vector<32x128xf32>
    %68 = vector.extract_strided_slice %64 {offsets = [32, 0], sizes = [32, 128], strides = [1, 1]} : vector<72x128xf32> to vector<32x128xf32>
    %69 = vector.extract_strided_slice %64 {offsets = [64, 0], sizes = [1, 32], strides = [1, 1]} : vector<72x128xf32> to vector<1x32xf32>
    %70 = vector.extract_strided_slice %64 {offsets = [65, 0], sizes = [1, 32], strides = [1, 1]} : vector<72x128xf32> to vector<1x32xf32>
    %71 = vector.extract_strided_slice %64 {offsets = [66, 0], sizes = [1, 128], strides = [1, 1]} : vector<72x128xf32> to vector<1x128xf32>
    %72 = vector.extract_strided_slice %64 {offsets = [67, 0], sizes = [1, 32], strides = [1, 1]} : vector<72x128xf32> to vector<1x32xf32>
    %73 = vector.extract_strided_slice %64 {offsets = [68, 0], sizes = [1, 32], strides = [1, 1]} : vector<72x128xf32> to vector<1x32xf32>
    %74 = vector.extract_strided_slice %64 {offsets = [69, 0], sizes = [1, 32], strides = [1, 1]} : vector<72x128xf32> to vector<1x32xf32>
    %75 = vector.extract_strided_slice %64 {offsets = [70, 0], sizes = [1, 128], strides = [1, 1]} : vector<72x128xf32> to vector<1x128xf32>
    %76 = vector.extract_strided_slice %64 {offsets = [71, 0], sizes = [1, 32], strides = [1, 1]} : vector<72x128xf32> to vector<1x32xf32>
    %cst_23 = arith.constant dense<0.000000e+00> : vector<32xf32>
    %77 = vector.multi_reduction <add>, %61, %cst_23 [1] : vector<32x32xf32> to vector<32xf32>
    %78 = vector.shape_cast %77 : vector<32xf32> to vector<32x1xf32>
    %cst_24 = arith.constant 3.200000e+01 : f32
    %79 = vector.broadcast %cst_24 : f32 to vector<32x1xf32>
    %80 = arith.divf %78, %79 : vector<32x1xf32>
    %81 = vector.broadcast %80 : vector<32x1xf32> to vector<32x32xf32>
    %82 = arith.subf %61, %81 : vector<32x32xf32>
    %83 = arith.mulf %82, %82 : vector<32x32xf32>
    %cst_25 = arith.constant dense<0.000000e+00> : vector<32xf32>
    %84 = vector.multi_reduction <add>, %83, %cst_25 [1] : vector<32x32xf32> to vector<32xf32>
    %85 = vector.shape_cast %84 : vector<32xf32> to vector<32x1xf32>
    %cst_26 = arith.constant 3.200000e+01 : f32
    %86 = vector.broadcast %cst_26 : f32 to vector<32x1xf32>
    %87 = arith.divf %85, %86 : vector<32x1xf32>
    %88 = vector.broadcast %80 : vector<32x1xf32> to vector<32x32xf32>
    %89 = arith.subf %61, %88 : vector<32x32xf32>
    %cst_27 = arith.constant 9.99999997E-7 : f32
    %90 = vector.broadcast %cst_27 : f32 to vector<32x1xf32>
    %91 = arith.addf %87, %90 : vector<32x1xf32>
    %92 = math.rsqrt %91 : vector<32x1xf32>
    %93 = vector.broadcast %92 : vector<32x1xf32> to vector<32x32xf32>
    %94 = arith.mulf %89, %93 : vector<32x32xf32>
    %95 = vector.broadcast %69 : vector<1x32xf32> to vector<32x32xf32>
    %96 = arith.mulf %94, %95 : vector<32x32xf32>
    %97 = vector.broadcast %70 : vector<1x32xf32> to vector<32x32xf32>
    %98 = arith.addf %96, %97 : vector<32x32xf32>
    %cst_28 = arith.constant dense<0.000000e+00> : vector<32x128xf32>
    %99 = tpu.matmul %98, %67, %cst_28 {dimension_numbers = #tpu.dot_dimension_numbers<[1], [0], [0], [1], [0, 0, 1, 1], [], []>} : vector<32x32xf32>, vector<32x128xf32>, vector<32x128xf32> -> vector<32x128xf32>
    %100 = vector.broadcast %71 : vector<1x128xf32> to vector<32x128xf32>
    %101 = arith.addf %99, %100 : vector<32x128xf32>
    %102 = vector.extract_strided_slice %101 {offsets = [0, 0], sizes = [16, 8], strides = [1, 1]} : vector<32x128xf32> to vector<16x8xf32>
    %103 = vector.extract_strided_slice %101 {offsets = [0, 32], sizes = [16, 8], strides = [1, 1]} : vector<32x128xf32> to vector<16x8xf32>
    %cst_29 = arith.constant dense<0.000000e+00> : vector<16x16xf32>
    %104 = tpu.matmul %102, %103, %cst_29 {dimension_numbers = #tpu.dot_dimension_numbers<[1], [1], [0], [0], [0, 0, 1, 0], [], []>} : vector<16x8xf32>, vector<16x8xf32>, vector<16x16xf32> -> vector<16x16xf32>
    %105 = vector.extract_strided_slice %101 {offsets = [0, 8], sizes = [16, 8], strides = [1, 1]} : vector<32x128xf32> to vector<16x8xf32>
    %106 = vector.extract_strided_slice %101 {offsets = [0, 40], sizes = [16, 8], strides = [1, 1]} : vector<32x128xf32> to vector<16x8xf32>
    %cst_30 = arith.constant dense<0.000000e+00> : vector<16x16xf32>
    %107 = tpu.matmul %105, %106, %cst_30 {dimension_numbers = #tpu.dot_dimension_numbers<[1], [1], [0], [0], [0, 0, 1, 0], [], []>} : vector<16x8xf32>, vector<16x8xf32>, vector<16x16xf32> -> vector<16x16xf32>
    %108 = vector.extract_strided_slice %101 {offsets = [0, 16], sizes = [16, 8], strides = [1, 1]} : vector<32x128xf32> to vector<16x8xf32>
    %109 = vector.extract_strided_slice %101 {offsets = [0, 48], sizes = [16, 8], strides = [1, 1]} : vector<32x128xf32> to vector<16x8xf32>
    %cst_31 = arith.constant dense<0.000000e+00> : vector<16x16xf32>
    %110 = tpu.matmul %108, %109, %cst_31 {dimension_numbers = #tpu.dot_dimension_numbers<[1], [1], [0], [0], [0, 0, 1, 0], [], []>} : vector<16x8xf32>, vector<16x8xf32>, vector<16x16xf32> -> vector<16x16xf32>
    %111 = vector.extract_strided_slice %101 {offsets = [0, 24], sizes = [16, 8], strides = [1, 1]} : vector<32x128xf32> to vector<16x8xf32>
    %112 = vector.extract_strided_slice %101 {offsets = [0, 56], sizes = [16, 8], strides = [1, 1]} : vector<32x128xf32> to vector<16x8xf32>
    %cst_32 = arith.constant dense<0.000000e+00> : vector<16x16xf32>
    %113 = tpu.matmul %111, %112, %cst_32 {dimension_numbers = #tpu.dot_dimension_numbers<[1], [1], [0], [0], [0, 0, 1, 0], [], []>} : vector<16x8xf32>, vector<16x8xf32>, vector<16x16xf32> -> vector<16x16xf32>
    %114 = vector.extract_strided_slice %101 {offsets = [16, 0], sizes = [16, 8], strides = [1, 1]} : vector<32x128xf32> to vector<16x8xf32>
    %115 = vector.extract_strided_slice %101 {offsets = [16, 32], sizes = [16, 8], strides = [1, 1]} : vector<32x128xf32> to vector<16x8xf32>
    %cst_33 = arith.constant dense<0.000000e+00> : vector<16x16xf32>
    %116 = tpu.matmul %114, %115, %cst_33 {dimension_numbers = #tpu.dot_dimension_numbers<[1], [1], [0], [0], [0, 0, 1, 0], [], []>} : vector<16x8xf32>, vector<16x8xf32>, vector<16x16xf32> -> vector<16x16xf32>
    %117 = vector.extract_strided_slice %101 {offsets = [16, 8], sizes = [16, 8], strides = [1, 1]} : vector<32x128xf32> to vector<16x8xf32>
    %118 = vector.extract_strided_slice %101 {offsets = [16, 40], sizes = [16, 8], strides = [1, 1]} : vector<32x128xf32> to vector<16x8xf32>
    %cst_34 = arith.constant dense<0.000000e+00> : vector<16x16xf32>
    %119 = tpu.matmul %117, %118, %cst_34 {dimension_numbers = #tpu.dot_dimension_numbers<[1], [1], [0], [0], [0, 0, 1, 0], [], []>} : vector<16x8xf32>, vector<16x8xf32>, vector<16x16xf32> -> vector<16x16xf32>
    %120 = vector.extract_strided_slice %101 {offsets = [16, 16], sizes = [16, 8], strides = [1, 1]} : vector<32x128xf32> to vector<16x8xf32>
    %121 = vector.extract_strided_slice %101 {offsets = [16, 48], sizes = [16, 8], strides = [1, 1]} : vector<32x128xf32> to vector<16x8xf32>
    %cst_35 = arith.constant dense<0.000000e+00> : vector<16x16xf32>
    %122 = tpu.matmul %120, %121, %cst_35 {dimension_numbers = #tpu.dot_dimension_numbers<[1], [1], [0], [0], [0, 0, 1, 0], [], []>} : vector<16x8xf32>, vector<16x8xf32>, vector<16x16xf32> -> vector<16x16xf32>
    %123 = vector.extract_strided_slice %101 {offsets = [16, 24], sizes = [16, 8], strides = [1, 1]} : vector<32x128xf32> to vector<16x8xf32>
    %124 = vector.extract_strided_slice %101 {offsets = [16, 56], sizes = [16, 8], strides = [1, 1]} : vector<32x128xf32> to vector<16x8xf32>
    %cst_36 = arith.constant dense<0.000000e+00> : vector<16x16xf32>
    %125 = tpu.matmul %123, %124, %cst_36 {dimension_numbers = #tpu.dot_dimension_numbers<[1], [1], [0], [0], [0, 0, 1, 0], [], []>} : vector<16x8xf32>, vector<16x8xf32>, vector<16x16xf32> -> vector<16x16xf32>
    %126 = tpu.concatenate %104, %107, %110, %113, %116, %119, %122, %125 in 0 : vector<16x16xf32>, vector<16x16xf32>, vector<16x16xf32>, vector<16x16xf32>, vector<16x16xf32>, vector<16x16xf32>, vector<16x16xf32>, vector<16x16xf32> -> vector<128x16xf32>
    %127 = arith.addf %126, %62 : vector<128x16xf32>
    %cst_37 = arith.constant dense<0xFF800000> : vector<128xf32>
    %128 = vector.multi_reduction <maximumf>, %127, %cst_37 [1] : vector<128x16xf32> to vector<128xf32>
    %129 = vector.shape_cast %128 : vector<128xf32> to vector<128x1xf32>
    %130 = vector.broadcast %129 : vector<128x1xf32> to vector<128x16xf32>
    %131 = arith.subf %127, %130 : vector<128x16xf32>
    %132 = math.exp %131 : vector<128x16xf32>
    %cst_38 = arith.constant dense<0.000000e+00> : vector<128xf32>
    %133 = vector.multi_reduction <add>, %132, %cst_38 [1] : vector<128x16xf32> to vector<128xf32>
    %134 = vector.shape_cast %133 : vector<128xf32> to vector<128x1xf32>
    %135 = tpu.reciprocal %134 {approx = true} : vector<128x1xf32> -> vector<128x1xf32>
    %136 = vector.broadcast %135 : vector<128x1xf32> to vector<128x16xf32>
    %137 = arith.mulf %132, %136 : vector<128x16xf32>
    %138 = vector.extract_strided_slice %137 {offsets = [0, 0], sizes = [16, 16], strides = [1, 1]} : vector<128x16xf32> to vector<16x16xf32>
    %139 = vector.extract_strided_slice %101 {offsets = [0, 64], sizes = [16, 8], strides = [1, 1]} : vector<32x128xf32> to vector<16x8xf32>
    %cst_39 = arith.constant dense<0.000000e+00> : vector<16x8xf32>
    %140 = tpu.matmul %138, %139, %cst_39 {dimension_numbers = #tpu.dot_dimension_numbers<[1], [0], [0], [1], [0, 0, 1, 1], [], []>} : vector<16x16xf32>, vector<16x8xf32>, vector<16x8xf32> -> vector<16x8xf32>
    %141 = vector.extract_strided_slice %137 {offsets = [16, 0], sizes = [16, 16], strides = [1, 1]} : vector<128x16xf32> to vector<16x16xf32>
    %142 = vector.extract_strided_slice %101 {offsets = [0, 72], sizes = [16, 8], strides = [1, 1]} : vector<32x128xf32> to vector<16x8xf32>
    %cst_40 = arith.constant dense<0.000000e+00> : vector<16x8xf32>
    %143 = tpu.matmul %141, %142, %cst_40 {dimension_numbers = #tpu.dot_dimension_numbers<[1], [0], [0], [1], [0, 0, 1, 1], [], []>} : vector<16x16xf32>, vector<16x8xf32>, vector<16x8xf32> -> vector<16x8xf32>
    %144 = vector.extract_strided_slice %137 {offsets = [32, 0], sizes = [16, 16], strides = [1, 1]} : vector<128x16xf32> to vector<16x16xf32>
    %145 = vector.extract_strided_slice %101 {offsets = [0, 80], sizes = [16, 8], strides = [1, 1]} : vector<32x128xf32> to vector<16x8xf32>
    %cst_41 = arith.constant dense<0.000000e+00> : vector<16x8xf32>
    %146 = tpu.matmul %144, %145, %cst_41 {dimension_numbers = #tpu.dot_dimension_numbers<[1], [0], [0], [1], [0, 0, 1, 1], [], []>} : vector<16x16xf32>, vector<16x8xf32>, vector<16x8xf32> -> vector<16x8xf32>
    %147 = vector.extract_strided_slice %137 {offsets = [48, 0], sizes = [16, 16], strides = [1, 1]} : vector<128x16xf32> to vector<16x16xf32>
    %148 = vector.extract_strided_slice %101 {offsets = [0, 88], sizes = [16, 8], strides = [1, 1]} : vector<32x128xf32> to vector<16x8xf32>
    %cst_42 = arith.constant dense<0.000000e+00> : vector<16x8xf32>
    %149 = tpu.matmul %147, %148, %cst_42 {dimension_numbers = #tpu.dot_dimension_numbers<[1], [0], [0], [1], [0, 0, 1, 1], [], []>} : vector<16x16xf32>, vector<16x8xf32>, vector<16x8xf32> -> vector<16x8xf32>
    %150 = tpu.concatenate %140, %143, %146, %149 in 1 : vector<16x8xf32>, vector<16x8xf32>, vector<16x8xf32>, vector<16x8xf32> -> vector<16x32xf32>
    %151 = vector.extract_strided_slice %137 {offsets = [64, 0], sizes = [16, 16], strides = [1, 1]} : vector<128x16xf32> to vector<16x16xf32>
    %152 = vector.extract_strided_slice %101 {offsets = [16, 64], sizes = [16, 8], strides = [1, 1]} : vector<32x128xf32> to vector<16x8xf32>
    %cst_43 = arith.constant dense<0.000000e+00> : vector<16x8xf32>
    %153 = tpu.matmul %151, %152, %cst_43 {dimension_numbers = #tpu.dot_dimension_numbers<[1], [0], [0], [1], [0, 0, 1, 1], [], []>} : vector<16x16xf32>, vector<16x8xf32>, vector<16x8xf32> -> vector<16x8xf32>
    %154 = vector.extract_strided_slice %137 {offsets = [80, 0], sizes = [16, 16], strides = [1, 1]} : vector<128x16xf32> to vector<16x16xf32>
    %155 = vector.extract_strided_slice %101 {offsets = [16, 72], sizes = [16, 8], strides = [1, 1]} : vector<32x128xf32> to vector<16x8xf32>
    %cst_44 = arith.constant dense<0.000000e+00> : vector<16x8xf32>
    %156 = tpu.matmul %154, %155, %cst_44 {dimension_numbers = #tpu.dot_dimension_numbers<[1], [0], [0], [1], [0, 0, 1, 1], [], []>} : vector<16x16xf32>, vector<16x8xf32>, vector<16x8xf32> -> vector<16x8xf32>
    %157 = vector.extract_strided_slice %137 {offsets = [96, 0], sizes = [16, 16], strides = [1, 1]} : vector<128x16xf32> to vector<16x16xf32>
    %158 = vector.extract_strided_slice %101 {offsets = [16, 80], sizes = [16, 8], strides = [1, 1]} : vector<32x128xf32> to vector<16x8xf32>
    %cst_45 = arith.constant dense<0.000000e+00> : vector<16x8xf32>
    %159 = tpu.matmul %157, %158, %cst_45 {dimension_numbers = #tpu.dot_dimension_numbers<[1], [0], [0], [1], [0, 0, 1, 1], [], []>} : vector<16x16xf32>, vector<16x8xf32>, vector<16x8xf32> -> vector<16x8xf32>
    %160 = vector.extract_strided_slice %137 {offsets = [112, 0], sizes = [16, 16], strides = [1, 1]} : vector<128x16xf32> to vector<16x16xf32>
    %161 = vector.extract_strided_slice %101 {offsets = [16, 88], sizes = [16, 8], strides = [1, 1]} : vector<32x128xf32> to vector<16x8xf32>
    %cst_46 = arith.constant dense<0.000000e+00> : vector<16x8xf32>
    %162 = tpu.matmul %160, %161, %cst_46 {dimension_numbers = #tpu.dot_dimension_numbers<[1], [0], [0], [1], [0, 0, 1, 1], [], []>} : vector<16x16xf32>, vector<16x8xf32>, vector<16x8xf32> -> vector<16x8xf32>
    %163 = tpu.concatenate %153, %156, %159, %162 in 1 : vector<16x8xf32>, vector<16x8xf32>, vector<16x8xf32>, vector<16x8xf32> -> vector<16x32xf32>
    %164 = tpu.concatenate %150, %163 in 0 : vector<16x32xf32>, vector<16x32xf32> -> vector<32x32xf32>
    %165 = vector.extract_strided_slice %66 {offsets = [0, 0], sizes = [32, 32], strides = [1, 1]} : vector<160x32xf32> to vector<32x32xf32>
    %cst_47 = arith.constant dense<0.000000e+00> : vector<32x32xf32>
    %166 = tpu.matmul %164, %165, %cst_47 {dimension_numbers = #tpu.dot_dimension_numbers<[1], [0], [0], [1], [0, 0, 1, 1], [], []>} : vector<32x32xf32>, vector<32x32xf32>, vector<32x32xf32> -> vector<32x32xf32>
    %167 = arith.addf %61, %166 : vector<32x32xf32>
    %168 = vector.broadcast %72 : vector<1x32xf32> to vector<32x32xf32>
    %169 = arith.addf %167, %168 : vector<32x32xf32>
    %cst_48 = arith.constant dense<0.000000e+00> : vector<32xf32>
    %170 = vector.multi_reduction <add>, %169, %cst_48 [1] : vector<32x32xf32> to vector<32xf32>
    %171 = vector.shape_cast %170 : vector<32xf32> to vector<32x1xf32>
    %cst_49 = arith.constant 3.200000e+01 : f32
    %172 = vector.broadcast %cst_49 : f32 to vector<32x1xf32>
    %173 = arith.divf %171, %172 : vector<32x1xf32>
    %174 = vector.broadcast %173 : vector<32x1xf32> to vector<32x32xf32>
    %175 = arith.subf %169, %174 : vector<32x32xf32>
    %176 = arith.mulf %175, %175 : vector<32x32xf32>
    %cst_50 = arith.constant dense<0.000000e+00> : vector<32xf32>
    %177 = vector.multi_reduction <add>, %176, %cst_50 [1] : vector<32x32xf32> to vector<32xf32>
    %178 = vector.shape_cast %177 : vector<32xf32> to vector<32x1xf32>
    %cst_51 = arith.constant 3.200000e+01 : f32
    %179 = vector.broadcast %cst_51 : f32 to vector<32x1xf32>
    %180 = arith.divf %178, %179 : vector<32x1xf32>
    %181 = vector.broadcast %173 : vector<32x1xf32> to vector<32x32xf32>
    %182 = arith.subf %169, %181 : vector<32x32xf32>
    %cst_52 = arith.constant 9.99999997E-7 : f32
    %183 = vector.broadcast %cst_52 : f32 to vector<32x1xf32>
    %184 = arith.addf %180, %183 : vector<32x1xf32>
    %185 = math.rsqrt %184 : vector<32x1xf32>
    %186 = vector.broadcast %185 : vector<32x1xf32> to vector<32x32xf32>
    %187 = arith.mulf %182, %186 : vector<32x32xf32>
    %188 = vector.broadcast %73 : vector<1x32xf32> to vector<32x32xf32>
    %189 = arith.mulf %187, %188 : vector<32x32xf32>
    %190 = vector.broadcast %74 : vector<1x32xf32> to vector<32x32xf32>
    %191 = arith.addf %189, %190 : vector<32x32xf32>
    %cst_53 = arith.constant dense<0.000000e+00> : vector<32x128xf32>
    %192 = tpu.matmul %191, %68, %cst_53 {dimension_numbers = #tpu.dot_dimension_numbers<[1], [0], [0], [1], [0, 0, 1, 1], [], []>} : vector<32x32xf32>, vector<32x128xf32>, vector<32x128xf32> -> vector<32x128xf32>
    %193 = vector.broadcast %75 : vector<1x128xf32> to vector<32x128xf32>
    %194 = arith.addf %192, %193 : vector<32x128xf32>
    %195 = arith.mulf %194, %194 : vector<32x128xf32>
    %196 = arith.mulf %194, %195 : vector<32x128xf32>
    %cst_54 = arith.constant 4.471500e-02 : f32
    %197 = vector.broadcast %cst_54 : f32 to vector<32x128xf32>
    %198 = arith.mulf %197, %196 : vector<32x128xf32>
    %199 = arith.addf %194, %198 : vector<32x128xf32>
    %cst_55 = arith.constant 0.797884583 : f32
    %200 = vector.broadcast %cst_55 : f32 to vector<32x128xf32>
    %201 = arith.mulf %200, %199 : vector<32x128xf32>
    %202 = math.tanh %201 : vector<32x128xf32>
    %cst_56 = arith.constant 1.000000e+00 : f32
    %203 = vector.broadcast %cst_56 : f32 to vector<32x128xf32>
    %204 = arith.addf %203, %202 : vector<32x128xf32>
    %cst_57 = arith.constant 5.000000e-01 : f32
    %205 = vector.broadcast %cst_57 : f32 to vector<32x128xf32>
    %206 = arith.mulf %205, %204 : vector<32x128xf32>
    %207 = arith.mulf %194, %206 : vector<32x128xf32>
    %208 = vector.extract_strided_slice %66 {offsets = [32, 0], sizes = [128, 32], strides = [1, 1]} : vector<160x32xf32> to vector<128x32xf32>
    %cst_58 = arith.constant dense<0.000000e+00> : vector<32x32xf32>
    %209 = tpu.matmul %207, %208, %cst_58 {dimension_numbers = #tpu.dot_dimension_numbers<[1], [0], [0], [1], [0, 0, 1, 1], [], []>} : vector<32x128xf32>, vector<128x32xf32>, vector<32x32xf32> -> vector<32x32xf32>
    %210 = arith.addf %169, %209 : vector<32x32xf32>
    %211 = vector.broadcast %76 : vector<1x32xf32> to vector<32x32xf32>
    %212 = arith.addf %210, %211 : vector<32x32xf32>
    %c1 = arith.constant 1 : index
    %c0_59 = arith.constant 0 : index
    %c0_60 = arith.constant 0 : index
    %213 = vector.load %arg4[%c1, %c0_59, %c0_60] : memref<2x72x128xf32, #tpu.memory_space<vmem>>, vector<1x72x128xf32>
    %214 = vector.shape_cast %213 : vector<1x72x128xf32> to vector<72x128xf32>
    %c1_61 = arith.constant 1 : index
    %c0_62 = arith.constant 0 : index
    %c0_63 = arith.constant 0 : index
    %215 = vector.load %arg5[%c1_61, %c0_62, %c0_63] : memref<2x160x32xf32, #tpu.memory_space<vmem>>, vector<1x160x32xf32>
    %216 = vector.shape_cast %215 : vector<1x160x32xf32> to vector<160x32xf32>
    %217 = vector.extract_strided_slice %214 {offsets = [0, 0], sizes = [32, 128], strides = [1, 1]} : vector<72x128xf32> to vector<32x128xf32>
    %218 = vector.extract_strided_slice %214 {offsets = [32, 0], sizes = [32, 128], strides = [1, 1]} : vector<72x128xf32> to vector<32x128xf32>
    %219 = vector.extract_strided_slice %214 {offsets = [64, 0], sizes = [1, 32], strides = [1, 1]} : vector<72x128xf32> to vector<1x32xf32>
    %220 = vector.extract_strided_slice %214 {offsets = [65, 0], sizes = [1, 32], strides = [1, 1]} : vector<72x128xf32> to vector<1x32xf32>
    %221 = vector.extract_strided_slice %214 {offsets = [66, 0], sizes = [1, 128], strides = [1, 1]} : vector<72x128xf32> to vector<1x128xf32>
    %222 = vector.extract_strided_slice %214 {offsets = [67, 0], sizes = [1, 32], strides = [1, 1]} : vector<72x128xf32> to vector<1x32xf32>
    %223 = vector.extract_strided_slice %214 {offsets = [68, 0], sizes = [1, 32], strides = [1, 1]} : vector<72x128xf32> to vector<1x32xf32>
    %224 = vector.extract_strided_slice %214 {offsets = [69, 0], sizes = [1, 32], strides = [1, 1]} : vector<72x128xf32> to vector<1x32xf32>
    %225 = vector.extract_strided_slice %214 {offsets = [70, 0], sizes = [1, 128], strides = [1, 1]} : vector<72x128xf32> to vector<1x128xf32>
    %226 = vector.extract_strided_slice %214 {offsets = [71, 0], sizes = [1, 32], strides = [1, 1]} : vector<72x128xf32> to vector<1x32xf32>
    %cst_64 = arith.constant dense<0.000000e+00> : vector<32xf32>
    %227 = vector.multi_reduction <add>, %212, %cst_64 [1] : vector<32x32xf32> to vector<32xf32>
    %228 = vector.shape_cast %227 : vector<32xf32> to vector<32x1xf32>
    %cst_65 = arith.constant 3.200000e+01 : f32
    %229 = vector.broadcast %cst_65 : f32 to vector<32x1xf32>
    %230 = arith.divf %228, %229 : vector<32x1xf32>
    %231 = vector.broadcast %230 : vector<32x1xf32> to vector<32x32xf32>
    %232 = arith.subf %212, %231 : vector<32x32xf32>
    %233 = arith.mulf %232, %232 : vector<32x32xf32>
    %cst_66 = arith.constant dense<0.000000e+00> : vector<32xf32>
    %234 = vector.multi_reduction <add>, %233, %cst_66 [1] : vector<32x32xf32> to vector<32xf32>
    %235 = vector.shape_cast %234 : vector<32xf32> to vector<32x1xf32>
    %cst_67 = arith.constant 3.200000e+01 : f32
    %236 = vector.broadcast %cst_67 : f32 to vector<32x1xf32>
    %237 = arith.divf %235, %236 : vector<32x1xf32>
    %238 = vector.broadcast %230 : vector<32x1xf32> to vector<32x32xf32>
    %239 = arith.subf %212, %238 : vector<32x32xf32>
    %cst_68 = arith.constant 9.99999997E-7 : f32
    %240 = vector.broadcast %cst_68 : f32 to vector<32x1xf32>
    %241 = arith.addf %237, %240 : vector<32x1xf32>
    %242 = math.rsqrt %241 : vector<32x1xf32>
    %243 = vector.broadcast %242 : vector<32x1xf32> to vector<32x32xf32>
    %244 = arith.mulf %239, %243 : vector<32x32xf32>
    %245 = vector.broadcast %219 : vector<1x32xf32> to vector<32x32xf32>
    %246 = arith.mulf %244, %245 : vector<32x32xf32>
    %247 = vector.broadcast %220 : vector<1x32xf32> to vector<32x32xf32>
    %248 = arith.addf %246, %247 : vector<32x32xf32>
    %cst_69 = arith.constant dense<0.000000e+00> : vector<32x128xf32>
    %249 = tpu.matmul %248, %217, %cst_69 {dimension_numbers = #tpu.dot_dimension_numbers<[1], [0], [0], [1], [0, 0, 1, 1], [], []>} : vector<32x32xf32>, vector<32x128xf32>, vector<32x128xf32> -> vector<32x128xf32>
    %250 = vector.broadcast %221 : vector<1x128xf32> to vector<32x128xf32>
    %251 = arith.addf %249, %250 : vector<32x128xf32>
    %252 = vector.extract_strided_slice %251 {offsets = [0, 0], sizes = [16, 8], strides = [1, 1]} : vector<32x128xf32> to vector<16x8xf32>
    %253 = vector.extract_strided_slice %251 {offsets = [0, 32], sizes = [16, 8], strides = [1, 1]} : vector<32x128xf32> to vector<16x8xf32>
    %cst_70 = arith.constant dense<0.000000e+00> : vector<16x16xf32>
    %254 = tpu.matmul %252, %253, %cst_70 {dimension_numbers = #tpu.dot_dimension_numbers<[1], [1], [0], [0], [0, 0, 1, 0], [], []>} : vector<16x8xf32>, vector<16x8xf32>, vector<16x16xf32> -> vector<16x16xf32>
    %255 = vector.extract_strided_slice %251 {offsets = [0, 8], sizes = [16, 8], strides = [1, 1]} : vector<32x128xf32> to vector<16x8xf32>
    %256 = vector.extract_strided_slice %251 {offsets = [0, 40], sizes = [16, 8], strides = [1, 1]} : vector<32x128xf32> to vector<16x8xf32>
    %cst_71 = arith.constant dense<0.000000e+00> : vector<16x16xf32>
    %257 = tpu.matmul %255, %256, %cst_71 {dimension_numbers = #tpu.dot_dimension_numbers<[1], [1], [0], [0], [0, 0, 1, 0], [], []>} : vector<16x8xf32>, vector<16x8xf32>, vector<16x16xf32> -> vector<16x16xf32>
    %258 = vector.extract_strided_slice %251 {offsets = [0, 16], sizes = [16, 8], strides = [1, 1]} : vector<32x128xf32> to vector<16x8xf32>
    %259 = vector.extract_strided_slice %251 {offsets = [0, 48], sizes = [16, 8], strides = [1, 1]} : vector<32x128xf32> to vector<16x8xf32>
    %cst_72 = arith.constant dense<0.000000e+00> : vector<16x16xf32>
    %260 = tpu.matmul %258, %259, %cst_72 {dimension_numbers = #tpu.dot_dimension_numbers<[1], [1], [0], [0], [0, 0, 1, 0], [], []>} : vector<16x8xf32>, vector<16x8xf32>, vector<16x16xf32> -> vector<16x16xf32>
    %261 = vector.extract_strided_slice %251 {offsets = [0, 24], sizes = [16, 8], strides = [1, 1]} : vector<32x128xf32> to vector<16x8xf32>
    %262 = vector.extract_strided_slice %251 {offsets = [0, 56], sizes = [16, 8], strides = [1, 1]} : vector<32x128xf32> to vector<16x8xf32>
    %cst_73 = arith.constant dense<0.000000e+00> : vector<16x16xf32>
    %263 = tpu.matmul %261, %262, %cst_73 {dimension_numbers = #tpu.dot_dimension_numbers<[1], [1], [0], [0], [0, 0, 1, 0], [], []>} : vector<16x8xf32>, vector<16x8xf32>, vector<16x16xf32> -> vector<16x16xf32>
    %264 = vector.extract_strided_slice %251 {offsets = [16, 0], sizes = [16, 8], strides = [1, 1]} : vector<32x128xf32> to vector<16x8xf32>
    %265 = vector.extract_strided_slice %251 {offsets = [16, 32], sizes = [16, 8], strides = [1, 1]} : vector<32x128xf32> to vector<16x8xf32>
    %cst_74 = arith.constant dense<0.000000e+00> : vector<16x16xf32>
    %266 = tpu.matmul %264, %265, %cst_74 {dimension_numbers = #tpu.dot_dimension_numbers<[1], [1], [0], [0], [0, 0, 1, 0], [], []>} : vector<16x8xf32>, vector<16x8xf32>, vector<16x16xf32> -> vector<16x16xf32>
    %267 = vector.extract_strided_slice %251 {offsets = [16, 8], sizes = [16, 8], strides = [1, 1]} : vector<32x128xf32> to vector<16x8xf32>
    %268 = vector.extract_strided_slice %251 {offsets = [16, 40], sizes = [16, 8], strides = [1, 1]} : vector<32x128xf32> to vector<16x8xf32>
    %cst_75 = arith.constant dense<0.000000e+00> : vector<16x16xf32>
    %269 = tpu.matmul %267, %268, %cst_75 {dimension_numbers = #tpu.dot_dimension_numbers<[1], [1], [0], [0], [0, 0, 1, 0], [], []>} : vector<16x8xf32>, vector<16x8xf32>, vector<16x16xf32> -> vector<16x16xf32>
    %270 = vector.extract_strided_slice %251 {offsets = [16, 16], sizes = [16, 8], strides = [1, 1]} : vector<32x128xf32> to vector<16x8xf32>
    %271 = vector.extract_strided_slice %251 {offsets = [16, 48], sizes = [16, 8], strides = [1, 1]} : vector<32x128xf32> to vector<16x8xf32>
    %cst_76 = arith.constant dense<0.000000e+00> : vector<16x16xf32>
    %272 = tpu.matmul %270, %271, %cst_76 {dimension_numbers = #tpu.dot_dimension_numbers<[1], [1], [0], [0], [0, 0, 1, 0], [], []>} : vector<16x8xf32>, vector<16x8xf32>, vector<16x16xf32> -> vector<16x16xf32>
    %273 = vector.extract_strided_slice %251 {offsets = [16, 24], sizes = [16, 8], strides = [1, 1]} : vector<32x128xf32> to vector<16x8xf32>
    %274 = vector.extract_strided_slice %251 {offsets = [16, 56], sizes = [16, 8], strides = [1, 1]} : vector<32x128xf32> to vector<16x8xf32>
    %cst_77 = arith.constant dense<0.000000e+00> : vector<16x16xf32>
    %275 = tpu.matmul %273, %274, %cst_77 {dimension_numbers = #tpu.dot_dimension_numbers<[1], [1], [0], [0], [0, 0, 1, 0], [], []>} : vector<16x8xf32>, vector<16x8xf32>, vector<16x16xf32> -> vector<16x16xf32>
    %276 = tpu.concatenate %254, %257, %260, %263, %266, %269, %272, %275 in 0 : vector<16x16xf32>, vector<16x16xf32>, vector<16x16xf32>, vector<16x16xf32>, vector<16x16xf32>, vector<16x16xf32>, vector<16x16xf32>, vector<16x16xf32> -> vector<128x16xf32>
    %277 = arith.addf %276, %62 : vector<128x16xf32>
    %cst_78 = arith.constant dense<0xFF800000> : vector<128xf32>
    %278 = vector.multi_reduction <maximumf>, %277, %cst_78 [1] : vector<128x16xf32> to vector<128xf32>
    %279 = vector.shape_cast %278 : vector<128xf32> to vector<128x1xf32>
    %280 = vector.broadcast %279 : vector<128x1xf32> to vector<128x16xf32>
    %281 = arith.subf %277, %280 : vector<128x16xf32>
    %282 = math.exp %281 : vector<128x16xf32>
    %cst_79 = arith.constant dense<0.000000e+00> : vector<128xf32>
    %283 = vector.multi_reduction <add>, %282, %cst_79 [1] : vector<128x16xf32> to vector<128xf32>
    %284 = vector.shape_cast %283 : vector<128xf32> to vector<128x1xf32>
    %285 = tpu.reciprocal %284 {approx = true} : vector<128x1xf32> -> vector<128x1xf32>
    %286 = vector.broadcast %285 : vector<128x1xf32> to vector<128x16xf32>
    %287 = arith.mulf %282, %286 : vector<128x16xf32>
    %288 = vector.extract_strided_slice %287 {offsets = [0, 0], sizes = [16, 16], strides = [1, 1]} : vector<128x16xf32> to vector<16x16xf32>
    %289 = vector.extract_strided_slice %251 {offsets = [0, 64], sizes = [16, 8], strides = [1, 1]} : vector<32x128xf32> to vector<16x8xf32>
    %cst_80 = arith.constant dense<0.000000e+00> : vector<16x8xf32>
    %290 = tpu.matmul %288, %289, %cst_80 {dimension_numbers = #tpu.dot_dimension_numbers<[1], [0], [0], [1], [0, 0, 1, 1], [], []>} : vector<16x16xf32>, vector<16x8xf32>, vector<16x8xf32> -> vector<16x8xf32>
    %291 = vector.extract_strided_slice %287 {offsets = [16, 0], sizes = [16, 16], strides = [1, 1]} : vector<128x16xf32> to vector<16x16xf32>
    %292 = vector.extract_strided_slice %251 {offsets = [0, 72], sizes = [16, 8], strides = [1, 1]} : vector<32x128xf32> to vector<16x8xf32>
    %cst_81 = arith.constant dense<0.000000e+00> : vector<16x8xf32>
    %293 = tpu.matmul %291, %292, %cst_81 {dimension_numbers = #tpu.dot_dimension_numbers<[1], [0], [0], [1], [0, 0, 1, 1], [], []>} : vector<16x16xf32>, vector<16x8xf32>, vector<16x8xf32> -> vector<16x8xf32>
    %294 = vector.extract_strided_slice %287 {offsets = [32, 0], sizes = [16, 16], strides = [1, 1]} : vector<128x16xf32> to vector<16x16xf32>
    %295 = vector.extract_strided_slice %251 {offsets = [0, 80], sizes = [16, 8], strides = [1, 1]} : vector<32x128xf32> to vector<16x8xf32>
    %cst_82 = arith.constant dense<0.000000e+00> : vector<16x8xf32>
    %296 = tpu.matmul %294, %295, %cst_82 {dimension_numbers = #tpu.dot_dimension_numbers<[1], [0], [0], [1], [0, 0, 1, 1], [], []>} : vector<16x16xf32>, vector<16x8xf32>, vector<16x8xf32> -> vector<16x8xf32>
    %297 = vector.extract_strided_slice %287 {offsets = [48, 0], sizes = [16, 16], strides = [1, 1]} : vector<128x16xf32> to vector<16x16xf32>
    %298 = vector.extract_strided_slice %251 {offsets = [0, 88], sizes = [16, 8], strides = [1, 1]} : vector<32x128xf32> to vector<16x8xf32>
    %cst_83 = arith.constant dense<0.000000e+00> : vector<16x8xf32>
    %299 = tpu.matmul %297, %298, %cst_83 {dimension_numbers = #tpu.dot_dimension_numbers<[1], [0], [0], [1], [0, 0, 1, 1], [], []>} : vector<16x16xf32>, vector<16x8xf32>, vector<16x8xf32> -> vector<16x8xf32>
    %300 = tpu.concatenate %290, %293, %296, %299 in 1 : vector<16x8xf32>, vector<16x8xf32>, vector<16x8xf32>, vector<16x8xf32> -> vector<16x32xf32>
    %301 = vector.extract_strided_slice %287 {offsets = [64, 0], sizes = [16, 16], strides = [1, 1]} : vector<128x16xf32> to vector<16x16xf32>
    %302 = vector.extract_strided_slice %251 {offsets = [16, 64], sizes = [16, 8], strides = [1, 1]} : vector<32x128xf32> to vector<16x8xf32>
    %cst_84 = arith.constant dense<0.000000e+00> : vector<16x8xf32>
    %303 = tpu.matmul %301, %302, %cst_84 {dimension_numbers = #tpu.dot_dimension_numbers<[1], [0], [0], [1], [0, 0, 1, 1], [], []>} : vector<16x16xf32>, vector<16x8xf32>, vector<16x8xf32> -> vector<16x8xf32>
    %304 = vector.extract_strided_slice %287 {offsets = [80, 0], sizes = [16, 16], strides = [1, 1]} : vector<128x16xf32> to vector<16x16xf32>
    %305 = vector.extract_strided_slice %251 {offsets = [16, 72], sizes = [16, 8], strides = [1, 1]} : vector<32x128xf32> to vector<16x8xf32>
    %cst_85 = arith.constant dense<0.000000e+00> : vector<16x8xf32>
    %306 = tpu.matmul %304, %305, %cst_85 {dimension_numbers = #tpu.dot_dimension_numbers<[1], [0], [0], [1], [0, 0, 1, 1], [], []>} : vector<16x16xf32>, vector<16x8xf32>, vector<16x8xf32> -> vector<16x8xf32>
    %307 = vector.extract_strided_slice %287 {offsets = [96, 0], sizes = [16, 16], strides = [1, 1]} : vector<128x16xf32> to vector<16x16xf32>
    %308 = vector.extract_strided_slice %251 {offsets = [16, 80], sizes = [16, 8], strides = [1, 1]} : vector<32x128xf32> to vector<16x8xf32>
    %cst_86 = arith.constant dense<0.000000e+00> : vector<16x8xf32>
    %309 = tpu.matmul %307, %308, %cst_86 {dimension_numbers = #tpu.dot_dimension_numbers<[1], [0], [0], [1], [0, 0, 1, 1], [], []>} : vector<16x16xf32>, vector<16x8xf32>, vector<16x8xf32> -> vector<16x8xf32>
    %310 = vector.extract_strided_slice %287 {offsets = [112, 0], sizes = [16, 16], strides = [1, 1]} : vector<128x16xf32> to vector<16x16xf32>
    %311 = vector.extract_strided_slice %251 {offsets = [16, 88], sizes = [16, 8], strides = [1, 1]} : vector<32x128xf32> to vector<16x8xf32>
    %cst_87 = arith.constant dense<0.000000e+00> : vector<16x8xf32>
    %312 = tpu.matmul %310, %311, %cst_87 {dimension_numbers = #tpu.dot_dimension_numbers<[1], [0], [0], [1], [0, 0, 1, 1], [], []>} : vector<16x16xf32>, vector<16x8xf32>, vector<16x8xf32> -> vector<16x8xf32>
    %313 = tpu.concatenate %303, %306, %309, %312 in 1 : vector<16x8xf32>, vector<16x8xf32>, vector<16x8xf32>, vector<16x8xf32> -> vector<16x32xf32>
    %314 = tpu.concatenate %300, %313 in 0 : vector<16x32xf32>, vector<16x32xf32> -> vector<32x32xf32>
    %315 = vector.extract_strided_slice %216 {offsets = [0, 0], sizes = [32, 32], strides = [1, 1]} : vector<160x32xf32> to vector<32x32xf32>
    %cst_88 = arith.constant dense<0.000000e+00> : vector<32x32xf32>
    %316 = tpu.matmul %314, %315, %cst_88 {dimension_numbers = #tpu.dot_dimension_numbers<[1], [0], [0], [1], [0, 0, 1, 1], [], []>} : vector<32x32xf32>, vector<32x32xf32>, vector<32x32xf32> -> vector<32x32xf32>
    %317 = arith.addf %212, %316 : vector<32x32xf32>
    %318 = vector.broadcast %222 : vector<1x32xf32> to vector<32x32xf32>
    %319 = arith.addf %317, %318 : vector<32x32xf32>
    %cst_89 = arith.constant dense<0.000000e+00> : vector<32xf32>
    %320 = vector.multi_reduction <add>, %319, %cst_89 [1] : vector<32x32xf32> to vector<32xf32>
    %321 = vector.shape_cast %320 : vector<32xf32> to vector<32x1xf32>
    %cst_90 = arith.constant 3.200000e+01 : f32
    %322 = vector.broadcast %cst_90 : f32 to vector<32x1xf32>
    %323 = arith.divf %321, %322 : vector<32x1xf32>
    %324 = vector.broadcast %323 : vector<32x1xf32> to vector<32x32xf32>
    %325 = arith.subf %319, %324 : vector<32x32xf32>
    %326 = arith.mulf %325, %325 : vector<32x32xf32>
    %cst_91 = arith.constant dense<0.000000e+00> : vector<32xf32>
    %327 = vector.multi_reduction <add>, %326, %cst_91 [1] : vector<32x32xf32> to vector<32xf32>
    %328 = vector.shape_cast %327 : vector<32xf32> to vector<32x1xf32>
    %cst_92 = arith.constant 3.200000e+01 : f32
    %329 = vector.broadcast %cst_92 : f32 to vector<32x1xf32>
    %330 = arith.divf %328, %329 : vector<32x1xf32>
    %331 = vector.broadcast %323 : vector<32x1xf32> to vector<32x32xf32>
    %332 = arith.subf %319, %331 : vector<32x32xf32>
    %cst_93 = arith.constant 9.99999997E-7 : f32
    %333 = vector.broadcast %cst_93 : f32 to vector<32x1xf32>
    %334 = arith.addf %330, %333 : vector<32x1xf32>
    %335 = math.rsqrt %334 : vector<32x1xf32>
    %336 = vector.broadcast %335 : vector<32x1xf32> to vector<32x32xf32>
    %337 = arith.mulf %332, %336 : vector<32x32xf32>
    %338 = vector.broadcast %223 : vector<1x32xf32> to vector<32x32xf32>
    %339 = arith.mulf %337, %338 : vector<32x32xf32>
    %340 = vector.broadcast %224 : vector<1x32xf32> to vector<32x32xf32>
    %341 = arith.addf %339, %340 : vector<32x32xf32>
    %cst_94 = arith.constant dense<0.000000e+00> : vector<32x128xf32>
    %342 = tpu.matmul %341, %218, %cst_94 {dimension_numbers = #tpu.dot_dimension_numbers<[1], [0], [0], [1], [0, 0, 1, 1], [], []>} : vector<32x32xf32>, vector<32x128xf32>, vector<32x128xf32> -> vector<32x128xf32>
    %343 = vector.broadcast %225 : vector<1x128xf32> to vector<32x128xf32>
    %344 = arith.addf %342, %343 : vector<32x128xf32>
    %345 = arith.mulf %344, %344 : vector<32x128xf32>
    %346 = arith.mulf %344, %345 : vector<32x128xf32>
    %cst_95 = arith.constant 4.471500e-02 : f32
    %347 = vector.broadcast %cst_95 : f32 to vector<32x128xf32>
    %348 = arith.mulf %347, %346 : vector<32x128xf32>
    %349 = arith.addf %344, %348 : vector<32x128xf32>
    %cst_96 = arith.constant 0.797884583 : f32
    %350 = vector.broadcast %cst_96 : f32 to vector<32x128xf32>
    %351 = arith.mulf %350, %349 : vector<32x128xf32>
    %352 = math.tanh %351 : vector<32x128xf32>
    %cst_97 = arith.constant 1.000000e+00 : f32
    %353 = vector.broadcast %cst_97 : f32 to vector<32x128xf32>
    %354 = arith.addf %353, %352 : vector<32x128xf32>
    %cst_98 = arith.constant 5.000000e-01 : f32
    %355 = vector.broadcast %cst_98 : f32 to vector<32x128xf32>
    %356 = arith.mulf %355, %354 : vector<32x128xf32>
    %357 = arith.mulf %344, %356 : vector<32x128xf32>
    %358 = vector.extract_strided_slice %216 {offsets = [32, 0], sizes = [128, 32], strides = [1, 1]} : vector<160x32xf32> to vector<128x32xf32>
    %cst_99 = arith.constant dense<0.000000e+00> : vector<32x32xf32>
    %359 = tpu.matmul %357, %358, %cst_99 {dimension_numbers = #tpu.dot_dimension_numbers<[1], [0], [0], [1], [0, 0, 1, 1], [], []>} : vector<32x128xf32>, vector<128x32xf32>, vector<32x32xf32> -> vector<32x32xf32>
    %360 = arith.addf %319, %359 : vector<32x32xf32>
    %361 = vector.broadcast %226 : vector<1x32xf32> to vector<32x32xf32>
    %362 = arith.addf %360, %361 : vector<32x32xf32>
    %c0_100 = arith.constant 0 : index
    %c0_101 = arith.constant 0 : index
    %363 = vector.load %arg6[%c0_100, %c0_101] : memref<32x32xf32, #tpu.memory_space<vmem>>, vector<32x32xf32>
    tpu.vector_store %arg6[%c0_100, %c0_101], %362 {strides = array<i32>} : memref<32x32xf32, #tpu.memory_space<vmem>>, vector<32x32xf32>,
    return
  }
}

</mosaic_0001>

<llo_original>
// kernel: vilt_forward.1
$region0: #{vilt_forward.1}
  #allocation0 [shape = 'u32[]', space=smem, size = 0x4, offset = 0x4, fixed_abs, tag = 'smem constant byte address 0x4 - core index']
  #allocation1 [shape = 'u32[72,128]{1,0:T(1,128)}', space=vmem, size = 0x9000, scoped, tag = 'internal scratch']
  %s0 = inlined_call_operand.vmem [shape: f32[16,56], index: 0, kind: input, shape index: {}]
  %s1 = inlined_call_operand.vmem [shape: f32[16,32], index: 1, kind: input, shape index: {}]
  %s2 = inlined_call_operand.vmem [shape: f32[128,16], index: 2, kind: input, shape index: {}]
  %s3 = inlined_call_operand.vmem [shape: f32[92,32], index: 3, kind: input, shape index: {}]
  %s4 = inlined_call_operand.vmem [shape: f32[2,72,128], index: 4, kind: input, shape index: {}]
  %s5 = inlined_call_operand.vmem [shape: f32[2,160,32], index: 5, kind: input, shape index: {}]
  %s6 = inlined_call_operand.hbm [shape: f32[32,32], index: 6, kind: output, shape index: {}]
  %s7 = sld [smem:[#allocation0]]
  $region34: #{vilt_forward.1} parent=0
    _
  %s9 = ssub.s32 1, %s7
  %s10 = scalar_select 0, %s9, %s7
  $region1: #{vilt_forward.1} parent=0
    #allocation2 [shape = 'u8[16384]{0}', space=vmem, size = 0x4000, scoped, tag = 'output window, operand 0, single buffered']
    #allocation3 [shape = 's32[1]{0}', space=sflag, size = 0x4, scoped, tag = 'scoped memory for vilt_forward.1']
    %11 = vsyncpa [#allocation3], 0
    // Predicated region
    $region2: #{vilt_forward.1} parent=1 // pred_check
      _
    $region3: #{vilt_forward.1} parent=1 // pred_check_branch
      %13 = sbr.rel (0) target = $region5
    $region4: #{vilt_forward.1} parent=1 // pred_region
      _
    $region5: #{vilt_forward.1} parent=1 // pred_fallthru
      _
    // Predicated region
    $region6: #{vilt_forward.1} parent=1 // pred_check
      _
    $region7: #{vilt_forward.1} parent=1 // pred_check_branch
      %15 = sbr.rel (0) target = $region9
    $region8: #{vilt_forward.1} parent=1 // pred_region
      _
    $region9: #{vilt_forward.1} parent=1 // pred_fallthru
      _
    // Predicated region
    $region10: #{vilt_forward.1} parent=1 // pred_check
      _
    $region11: #{vilt_forward.1} parent=1 // pred_check_branch
      %17 = sbr.rel (0) target = $region13
    $region12: #{vilt_forward.1} parent=1 // pred_region
      _
    $region13: #{vilt_forward.1} parent=1 // pred_fallthru
      _
    // Predicated region
    $region14: #{vilt_forward.1} parent=1 // pred_check
      _
    $region15: #{vilt_forward.1} parent=1 // pred_check_branch
      %19 = sbr.rel (0) target = $region17
    $region16: #{vilt_forward.1} parent=1 // pred_region
      _
    $region17: #{vilt_forward.1} parent=1 // pred_fallthru
      _
    // Predicated region
    $region18: #{vilt_forward.1} parent=1 // pred_check
      _
    $region19: #{vilt_forward.1} parent=1 // pred_check_branch
      %21 = sbr.rel (0) target = $region21
    $region20: #{vilt_forward.1} parent=1 // pred_region
      _
    $region21: #{vilt_forward.1} parent=1 // pred_fallthru
      _
    // Predicated region
    $region22: #{vilt_forward.1} parent=1 // pred_check
      _
    $region23: #{vilt_forward.1} parent=1 // pred_check_branch
      %23 = sbr.rel (0) target = $region25
    $region24: #{vilt_forward.1} parent=1 // pred_region
      _
    $region25: #{vilt_forward.1} parent=1 // pred_fallthru
      _
    %v24 = vld [vmem:[%s3] sm:$0xff]
    %v25 = vld [vmem:[%s3 + $0x8] sm:$0xff]
    %v26 = vld [vmem:[%s3 + $0x10] sm:$0xff]
    %v27 = vld [vmem:[%s3 + $0x18] sm:$0xff]
    %v28 = vld [vmem:[%s3 + $0x20] sm:$0xff]
    %v29 = vld [vmem:[%s3 + $0x28] sm:$0xff]
    %v30 = vld [vmem:[%s3 + $0x30] sm:$0xff]
    %v31 = vld [vmem:[%s3 + $0x38] sm:$0xff]
    %v32 = vld [vmem:[%s3 + $0x40] sm:$0xff]
    %v33 = vld [vmem:[%s3 + $0x48] sm:$0xff]
    %v34 = vld [vmem:[%s3 + $0x50] sm:$0xff]
    %v35 = vld [vmem:[%s3 + $0x58] sm:$0xf]
    %v36 = vld [vmem:[%s0] sm:$0xff]
    %v37 = vld [vmem:[%s0 + $0x8] sm:$0xff]
    %vm38 = vcmask 457728
    %v40 = vsel %vm38, %v36, 0
    %v43 = vsel %vm38, %v37, 0
    %45 = vmatpush.msra.mxu0 0.0
    %46 = vmatpush.msra.mxu0 0.0
    %47 = vmatpush.msra.mxu0 0.0
    %48 = vmatpush.msra.mxu0 0.0
    %49 = vmatpush.msra.mxu0 0.0
    %50 = vmatpush.msra.mxu0 0.0
    %51 = vmatpush.msra.mxu0 0.0
    %52 = vmatpush.msra.mxu0 0.0
    %53 = vmatpush.msra.mxu0 0.0
    %54 = vmatpush.msra.mxu0 %v30
    %55 = vmatpush.msra.mxu0 %v29
    %56 = vmatpush.msra.mxu0 %v28
    %57 = vmatpush.msra.mxu0 %v27
    %58 = vmatpush.msra.mxu0 %v26
    %59 = vmatpush.msra.mxu0 %v25
    %60 = vmatpush.msra.mxu0 %v24
    %61 = vmatmul.f32.gmra.mxu0 %v40
    %v62 = vpop.f32.mrf.mxu0
    %v63 = vadd.f32 %v31, %v62
    %64 = vmatmul.f32.gmra.mxu0 %v43
    %v65 = vpop.f32.mrf.mxu0
    %v66 = vadd.f32 %v32, %v65
    %67 = vdwg.mxu0
    %vm68 = vcmask 261120
    %v69 = vsel %vm68, %v63, 0.0
    %70 = vadd.xlane.f32.xlu0 %v69
    %v71 = vpop.xlane.xlu0 %70
    %v72 = vsel %vm68, %v66, 0.0
    %73 = vadd.xlane.f32.xlu0 %v72
    %v74 = vpop.xlane.xlu0 %73
    %v75 = vrcp.pop 32.0
    %v76 = vmul.f32 32.0, %v75
    %v77 = vsub.f32 1.0, %v76
    %v78 = vmul.f32 %v75, %v77
    %v79 = vadd.f32 %v75, %v78
    %vm80 = vweird.f32 %v75
    %v81 = vsel %vm80, %v75, %v79
    %v82 = vmul.f32 %v71, %v81
    %v83 = vmul.f32 %v74, %v81
    %v84 = vsub.f32 %v63, %v82
    %v85 = vsub.f32 %v66, %v83
    %v86 = vmul.f32 %v84, %v84
    %v87 = vmul.f32 %v85, %v85
    %v88 = vsel %vm68, %v86, 0.0
    %89 = vadd.xlane.f32.xlu0 %v88
    %v90 = vpop.xlane.xlu0 %89
    %v91 = vsel %vm68, %v87, 0.0
    %92 = vadd.xlane.f32.xlu0 %v91
    %v93 = vpop.xlane.xlu0 %92
    %v94 = vmul.f32 %v90, %v81
    %v95 = vmul.f32 %v93, %v81
    %v96 = vadd.f32 %v94, 1e-05
    %v97 = vadd.f32 %v95, 1e-05
    %v98 = vrsqrt.pop %v96
    %v99 = vmul.f32 %v98, %v96
    %v100 = vmul.f32 %v99, %v98
    %v101 = vmul.f32 0.5, %v100
    %v102 = vsub.f32 1.5, %v101
    %v103 = vmul.f32 %v98, %v102
    %vm104 = vweird.f32 %v96
    %vm105 = vweird.f32 %v98
    %vm106 = vmor %vm104, %vm105
    %v107 = vsel %vm106, %v98, %v103
    %v108 = vrsqrt.pop %v97
    %v109 = vmul.f32 %v108, %v97
    %v110 = vmul.f32 %v109, %v108
    %v111 = vmul.f32 0.5, %v110
    %v112 = vsub.f32 1.5, %v111
    %v113 = vmul.f32 %v108, %v112
    %vm114 = vweird.f32 %v97
    %vm115 = vweird.f32 %v108
    %vm116 = vmor %vm114, %vm115
    %v117 = vsel %vm116, %v108, %v113
    %v118 = vmul.f32 %v84, %v107
    %v119 = vmul.f32 %v85, %v117
    %v120 = vperm.slane %v35, 0
    %v121 = vmul.f32 %v118, %v120
    %v122 = vmul.f32 %v119, %v120
    %v123 = vperm.slane %v35, 1
    %v124 = vadd.f32 %v121, %v123
    %v125 = vadd.f32 %v122, %v123
    %v126 = vld [vmem:[%s1] sm:$0xff]
    %v127 = vld [vmem:[%s1 + $0x8] sm:$0xff]
    %v128 = vadd.f32 %v126, %v33
    %v129 = vadd.f32 %v127, %v34
    %v130 = vsel %vm68, %v128, 0.0
    %131 = vadd.xlane.f32.xlu0 %v130
    %v132 = vpop.xlane.xlu0 %131
    %v133 = vsel %vm68, %v129, 0.0
    %134 = vadd.xlane.f32.xlu0 %v133
    %v135 = vpop.xlane.xlu0 %134
    %v136 = vmul.f32 %v132, %v81
    %v137 = vmul.f32 %v135, %v81
    %v138 = vsub.f32 %v128, %v136
    %v139 = vsub.f32 %v129, %v137
    %v140 = vmul.f32 %v138, %v138
    %v141 = vmul.f32 %v139, %v139
    %v142 = vsel %vm68, %v140, 0.0
    %143 = vadd.xlane.f32.xlu0 %v142
    %v144 = vpop.xlane.xlu0 %143
    %v145 = vsel %vm68, %v141, 0.0
    %146 = vadd.xlane.f32.xlu0 %v145
    %v147 = vpop.xlane.xlu0 %146
    %v148 = vmul.f32 %v144, %v81
    %v149 = vmul.f32 %v147, %v81
    %v150 = vadd.f32 %v148, 1e-05
    %v151 = vadd.f32 %v149, 1e-05
    %v152 = vrsqrt.pop %v150
    %v153 = vmul.f32 %v152, %v150
    %v154 = vmul.f32 %v153, %v152
    %v155 = vmul.f32 0.5, %v154
    %v156 = vsub.f32 1.5, %v155
    %v157 = vmul.f32 %v152, %v156
    %vm158 = vweird.f32 %v150
    %vm159 = vweird.f32 %v152
    %vm160 = vmor %vm158, %vm159
    %v161 = vsel %vm160, %v152, %v157
    %v162 = vrsqrt.pop %v151
    %v163 = vmul.f32 %v162, %v151
    %v164 = vmul.f32 %v163, %v162
    %v165 = vmul.f32 0.5, %v164
    %v166 = vsub.f32 1.5, %v165
    %v167 = vmul.f32 %v162, %v166
    %vm168 = vweird.f32 %v151
    %vm169 = vweird.f32 %v162
    %vm170 = vmor %vm168, %vm169
    %v171 = vsel %vm170, %v162, %v167
    %v172 = vmul.f32 %v138, %v161
    %v173 = vmul.f32 %v139, %v171
    %v174 = vperm.slane %v35, 2
    %v175 = vmul.f32 %v172, %v174
    %v176 = vmul.f32 %v173, %v174
    %v177 = vperm.slane %v35, 3
    %v178 = vadd.f32 %v175, %v177
    %v179 = vadd.f32 %v176, %v177
    %v180 = vld [vmem:[%s2] sm:$0xff]
    %v181 = vld [vmem:[%s2 + $0x8] sm:$0xff]
    %v182 = vld [vmem:[%s2 + $0x10] sm:$0xff]
    %v183 = vld [vmem:[%s2 + $0x18] sm:$0xff]
    %v184 = vld [vmem:[%s2 + $0x20] sm:$0xff]
    %v185 = vld [vmem:[%s2 + $0x28] sm:$0xff]
    %v186 = vld [vmem:[%s2 + $0x30] sm:$0xff]
    %v187 = vld [vmem:[%s2 + $0x38] sm:$0xff]
    %v188 = vld [vmem:[%s2 + $0x40] sm:$0xff]
    %v189 = vld [vmem:[%s2 + $0x48] sm:$0xff]
    %v190 = vld [vmem:[%s2 + $0x50] sm:$0xff]
    %v191 = vld [vmem:[%s2 + $0x58] sm:$0xff]
    %v192 = vld [vmem:[%s2 + $0x60] sm:$0xff]
    %v193 = vld [vmem:[%s2 + $0x68] sm:$0xff]
    %v194 = vld [vmem:[%s2 + $0x70] sm:$0xff]
    %v195 = vld [vmem:[%s2 + $0x78] sm:$0xff]
    %v196 = vld [vmem:[%s4] sm:$0xff]
    %v197 = vld [vmem:[%s4 + $0x8] sm:$0xff]
    %v198 = vld [vmem:[%s4 + $0x10] sm:$0xff]
    %v199 = vld [vmem:[%s4 + $0x18] sm:$0xff]
    %v200 = vld [vmem:[%s4 + $0x20] sm:$0xff]
    %v201 = vld [vmem:[%s4 + $0x28] sm:$0xff]
    %v202 = vld [vmem:[%s4 + $0x30] sm:$0xff]
    %v203 = vld [vmem:[%s4 + $0x38] sm:$0xff]
    %v204 = vld [vmem:[%s4 + $0x40] sm:$0xff]
    %v205 = vld [vmem:[%s5] sm:$0xff]
    %v206 = vld [vmem:[%s5 + $0x8] sm:$0xff]
    %v207 = vld [vmem:[%s5 + $0x10] sm:$0xff]
    %v208 = vld [vmem:[%s5 + $0x18] sm:$0xff]
    %v209 = vld [vmem:[%s5 + $0x20] sm:$0xff]
    %v210 = vld [vmem:[%s5 + $0x28] sm:$0xff]
    %v211 = vld [vmem:[%s5 + $0x30] sm:$0xff]
    %v212 = vld [vmem:[%s5 + $0x38] sm:$0xff]
    %v213 = vld [vmem:[%s5 + $0x40] sm:$0xff]
    %v214 = vld [vmem:[%s5 + $0x48] sm:$0xff]
    %v215 = vld [vmem:[%s5 + $0x50] sm:$0xff]
    %v216 = vld [vmem:[%s5 + $0x58] sm:$0xff]
    %v217 = vld [vmem:[%s5 + $0x60] sm:$0xff]
    %v218 = vld [vmem:[%s5 + $0x68] sm:$0xff]
    %v219 = vld [vmem:[%s5 + $0x70] sm:$0xff]
    %v220 = vld [vmem:[%s5 + $0x78] sm:$0xff]
    %v221 = vld [vmem:[%s5 + $0x80] sm:$0xff]
    %v222 = vld [vmem:[%s5 + $0x88] sm:$0xff]
    %v223 = vld [vmem:[%s5 + $0x90] sm:$0xff]
    %v224 = vld [vmem:[%s5 + $0x98] sm:$0xff]
    %v225 = vsel %vm68, %v178, 0.0
    %226 = vadd.xlane.f32.xlu0 %v225
    %v227 = vpop.xlane.xlu0 %226
    %v228 = vsel %vm68, %v124, 0.0
    %229 = vadd.xlane.f32.xlu0 %v228
    %v230 = vpop.xlane.xlu0 %229
    %v231 = vsel %vm68, %v179, 0.0
    %232 = vadd.xlane.f32.xlu0 %v231
    %v233 = vpop.xlane.xlu0 %232
    %v234 = vsel %vm68, %v125, 0.0
    %235 = vadd.xlane.f32.xlu0 %v234
    %v236 = vpop.xlane.xlu0 %235
    %v237 = vmul.f32 %v227, %v81
    %v238 = vmul.f32 %v230, %v81
    %v239 = vmul.f32 %v233, %v81
    %v240 = vmul.f32 %v236, %v81
    %v241 = vsub.f32 %v178, %v237
    %v242 = vsub.f32 %v124, %v238
    %v243 = vsub.f32 %v179, %v239
    %v244 = vsub.f32 %v125, %v240
    %v245 = vmul.f32 %v241, %v241
    %v246 = vmul.f32 %v242, %v242
    %v247 = vmul.f32 %v243, %v243
    %v248 = vmul.f32 %v244, %v244
    %v249 = vsel %vm68, %v245, 0.0
    %250 = vadd.xlane.f32.xlu0 %v249
    %v251 = vpop.xlane.xlu0 %250
    %v252 = vsel %vm68, %v246, 0.0
    %253 = vadd.xlane.f32.xlu0 %v252
    %v254 = vpop.xlane.xlu0 %253
    %v255 = vsel %vm68, %v247, 0.0
    %256 = vadd.xlane.f32.xlu0 %v255
    %v257 = vpop.xlane.xlu0 %256
    %v258 = vsel %vm68, %v248, 0.0
    %259 = vadd.xlane.f32.xlu0 %v258
    %v260 = vpop.xlane.xlu0 %259
    %v261 = vmul.f32 %v251, %v81
    %v262 = vmul.f32 %v254, %v81
    %v263 = vmul.f32 %v257, %v81
    %v264 = vmul.f32 %v260, %v81
    %v265 = vadd.f32 %v261, 1e-06
    %v266 = vadd.f32 %v262, 1e-06
    %v267 = vadd.f32 %v263, 1e-06
    %v268 = vadd.f32 %v264, 1e-06
    %v269 = vrsqrt.pop %v265
    %v270 = vmul.f32 %v269, %v265
    %v271 = vmul.f32 %v270, %v269
    %v272 = vmul.f32 0.5, %v271
    %v273 = vsub.f32 1.5, %v272
    %v274 = vmul.f32 %v269, %v273
    %vm275 = vweird.f32 %v265
    %vm276 = vweird.f32 %v269
    %vm277 = vmor %vm275, %vm276
    %v278 = vsel %vm277, %v269, %v274
    %v279 = vrsqrt.pop %v266
    %v280 = vmul.f32 %v279, %v266
    %v281 = vmul.f32 %v280, %v279
    %v282 = vmul.f32 0.5, %v281
    %v283 = vsub.f32 1.5, %v282
    %v284 = vmul.f32 %v279, %v283
    %vm285 = vweird.f32 %v266
    %vm286 = vweird.f32 %v279
    %vm287 = vmor %vm285, %vm286
    %v288 = vsel %vm287, %v279, %v284
    %v289 = vrsqrt.pop %v267
    %v290 = vmul.f32 %v289, %v267
    %v291 = vmul.f32 %v290, %v289
    %v292 = vmul.f32 0.5, %v291
    %v293 = vsub.f32 1.5, %v292
    %v294 = vmul.f32 %v289, %v293
    %vm295 = vweird.f32 %v267
    %vm296 = vweird.f32 %v289
    %vm297 = vmor %vm295, %vm296
    %v298 = vsel %vm297, %v289, %v294
    %v299 = vrsqrt.pop %v268
    %v300 = vmul.f32 %v299, %v268
    %v301 = vmul.f32 %v300, %v299
    %v302 = vmul.f32 0.5, %v301
    %v303 = vsub.f32 1.5, %v302
    %v304 = vmul.f32 %v299, %v303
    %vm305 = vweird.f32 %v268
    %vm306 = vweird.f32 %v299
    %vm307 = vmor %vm305, %vm306
    %v308 = vsel %vm307, %v299, %v304
    %v309 = vmul.f32 %v241, %v278
    %v310 = vmul.f32 %v242, %v288
    %v311 = vmul.f32 %v243, %v298
    %v312 = vmul.f32 %v244, %v308
    %v313 = vperm.slane %v204, 0
    %v314 = vmul.f32 %v309, %v313
    %v315 = vmul.f32 %v310, %v313
    %v316 = vmul.f32 %v311, %v313
    %v317 = vmul.f32 %v312, %v313
    %v318 = vperm.slane %v204, 1
    %v319 = vadd.f32 %v314, %v318
    %v320 = vadd.f32 %v315, %v318
    %v321 = vadd.f32 %v316, %v318
    %v322 = vadd.f32 %v317, %v318
    %v323 = vperm.slane %v204, 2
    %v325 = vsel %vm68, %v319, 0
    %v328 = vsel %vm68, %v320, 0
    %v331 = vsel %vm68, %v321, 0
    %v334 = vsel %vm68, %v322, 0
    %336 = vmatpush.msra.mxu0 0.0
    %337 = vmatpush.msra.mxu0 0.0
    %338 = vmatpush.msra.mxu0 0.0
    %339 = vmatpush.msra.mxu0 0.0
    %340 = vmatpush.msra.mxu0 0.0
    %341 = vmatpush.msra.mxu0 0.0
    %342 = vmatpush.msra.mxu0 0.0
    %343 = vmatpush.msra.mxu0 0.0
    %344 = vmatpush.msra.mxu0 0.0
    %345 = vmatpush.msra.mxu0 0.0
    %346 = vmatpush.msra.mxu0 0.0
    %347 = vmatpush.msra.mxu0 0.0
    %348 = vmatpush.msra.mxu0 %v199
    %349 = vmatpush.msra.mxu0 %v198
    %350 = vmatpush.msra.mxu0 %v197
    %351 = vmatpush.msra.mxu0 %v196
    %352 = vmatmul.f32.gmra.mxu0 %v325
    %v353 = vpop.f32.mrf.mxu0
    %v354 = vadd.f32 %v323, %v353
    %355 = vmatmul.f32.gmra.mxu0 %v328
    %v356 = vpop.f32.mrf.mxu0
    %v357 = vadd.f32 %v323, %v356
    %358 = vmatmul.f32.gmra.mxu0 %v331
    %v359 = vpop.f32.mrf.mxu0
    %v360 = vadd.f32 %v323, %v359
    %361 = vmatmul.f32.gmra.mxu0 %v334
    %v362 = vpop.f32.mrf.mxu0
    %v363 = vadd.f32 %v323, %v362
    %364 = vdwg.mxu0
    %367 = vrot.lane.b32.xlu0 %v354, 96
    %v368 = vpop.permute.xlu0 %367
    %369 = vrot.lane.b32.xlu0 %v357, 96
    %v370 = vpop.permute.xlu0 %369
    %vm371 = vcmask 64512
    %v372 = vsel %vm371, %v354, 0
    %v374 = vsel %vm371, %v357, 0
    %v376 = vsel %vm371, %v368, 0
    %v378 = vsel %vm371, %v370, 0
    %380 = vmatpush.xpose.msra.mxu0 0.0
    %381 = vmatpush.xpose.msra.mxu0 0.0
    %382 = vmatpush.xpose.msra.mxu0 0.0
    %383 = vmatpush.xpose.msra.mxu0 0.0
    %384 = vmatpush.xpose.msra.mxu0 0.0
    %385 = vmatpush.xpose.msra.mxu0 0.0
    %386 = vmatpush.xpose.msra.mxu0 0.0
    %387 = vmatpush.xpose.msra.mxu0 0.0
    %388 = vmatpush.xpose.msra.mxu0 0.0
    %389 = vmatpush.xpose.msra.mxu0 0.0
    %390 = vmatpush.xpose.msra.mxu0 0.0
    %391 = vmatpush.xpose.msra.mxu0 0.0
    %392 = vmatpush.xpose.msra.mxu0 0.0
    %393 = vmatpush.xpose.msra.mxu0 0.0
    %394 = vmatpush.xpose.msra.mxu0 %v378
    %395 = vmatpush.xpose.msra.mxu0 %v376
    %396 = vmatmul.f32.gmra.mxu0 %v372
    %v397 = vpop.f32.mrf.mxu0
    %v398 = vadd.f32 0.0, %v397
    %399 = vmatmul.f32.gmra.mxu0 %v374
    %v400 = vpop.f32.mrf.mxu0
    %v401 = vadd.f32 0.0, %v400
    %402 = vdwg.mxu0
    %403 = vrot.lane.b32.xlu0 %v354, 120
    %v404 = vpop.permute.xlu0 %403
    %405 = vrot.lane.b32.xlu0 %v357, 120
    %v406 = vpop.permute.xlu0 %405
    %407 = vrot.lane.b32.xlu0 %v354, 88
    %v408 = vpop.permute.xlu0 %407
    %409 = vrot.lane.b32.xlu0 %v357, 88
    %v410 = vpop.permute.xlu0 %409
    %v411 = vsel %vm371, %v404, 0
    %v413 = vsel %vm371, %v406, 0
    %v415 = vsel %vm371, %v408, 0
    %v417 = vsel %vm371, %v410, 0
    %419 = vmatpush.xpose.msra.mxu0 0.0
    %420 = vmatpush.xpose.msra.mxu0 0.0
    %421 = vmatpush.xpose.msra.mxu0 0.0
    %422 = vmatpush.xpose.msra.mxu0 0.0
    %423 = vmatpush.xpose.msra.mxu0 0.0
    %424 = vmatpush.xpose.msra.mxu0 0.0
    %425 = vmatpush.xpose.msra.mxu0 0.0
    %426 = vmatpush.xpose.msra.mxu0 0.0
    %427 = vmatpush.xpose.msra.mxu0 0.0
    %428 = vmatpush.xpose.msra.mxu0 0.0
    %429 = vmatpush.xpose.msra.mxu0 0.0
    %430 = vmatpush.xpose.msra.mxu0 0.0
    %431 = vmatpush.xpose.msra.mxu0 0.0
    %432 = vmatpush.xpose.msra.mxu0 0.0
    %433 = vmatpush.xpose.msra.mxu0 %v417
    %434 = vmatpush.xpose.msra.mxu0 %v415
    %435 = vmatmul.f32.gmra.mxu0 %v411
    %v436 = vpop.f32.mrf.mxu0
    %v437 = vadd.f32 0.0, %v436
    %438 = vmatmul.f32.gmra.mxu0 %v413
    %v439 = vpop.f32.mrf.mxu0
    %v440 = vadd.f32 0.0, %v439
    %441 = vdwg.mxu0
    %442 = vrot.lane.b32.xlu0 %v354, 112
    %v443 = vpop.permute.xlu0 %442
    %444 = vrot.lane.b32.xlu0 %v357, 112
    %v445 = vpop.permute.xlu0 %444
    %446 = vrot.lane.b32.xlu0 %v354, 80
    %v447 = vpop.permute.xlu0 %446
    %448 = vrot.lane.b32.xlu0 %v357, 80
    %v449 = vpop.permute.xlu0 %448
    %v450 = vsel %vm371, %v443, 0
    %v452 = vsel %vm371, %v445, 0
    %v454 = vsel %vm371, %v447, 0
    %v456 = vsel %vm371, %v449, 0
    %458 = vmatpush.xpose.msra.mxu0 0.0
    %459 = vmatpush.xpose.msra.mxu0 0.0
    %460 = vmatpush.xpose.msra.mxu0 0.0
    %461 = vmatpush.xpose.msra.mxu0 0.0
    %462 = vmatpush.xpose.msra.mxu0 0.0
    %463 = vmatpush.xpose.msra.mxu0 0.0
    %464 = vmatpush.xpose.msra.mxu0 0.0
    %465 = vmatpush.xpose.msra.mxu0 0.0
    %466 = vmatpush.xpose.msra.mxu0 0.0
    %467 = vmatpush.xpose.msra.mxu0 0.0
    %468 = vmatpush.xpose.msra.mxu0 0.0
    %469 = vmatpush.xpose.msra.mxu0 0.0
    %470 = vmatpush.xpose.msra.mxu0 0.0
    %471 = vmatpush.xpose.msra.mxu0 0.0
    %472 = vmatpush.xpose.msra.mxu0 %v456
    %473 = vmatpush.xpose.msra.mxu0 %v454
    %474 = vmatmul.f32.gmra.mxu0 %v450
    %v475 = vpop.f32.mrf.mxu0
    %v476 = vadd.f32 0.0, %v475
    %477 = vmatmul.f32.gmra.mxu0 %v452
    %v478 = vpop.f32.mrf.mxu0
    %v479 = vadd.f32 0.0, %v478
    %480 = vdwg.mxu0
    %481 = vrot.lane.b32.xlu0 %v354, 104
    %v482 = vpop.permute.xlu0 %481
    %483 = vrot.lane.b32.xlu0 %v357, 104
    %v484 = vpop.permute.xlu0 %483
    %485 = vrot.lane.b32.xlu0 %v354, 72
    %v486 = vpop.permute.xlu0 %485
    %487 = vrot.lane.b32.xlu0 %v357, 72
    %v488 = vpop.permute.xlu0 %487
    %v489 = vsel %vm371, %v482, 0
    %v491 = vsel %vm371, %v484, 0
    %v493 = vsel %vm371, %v486, 0
    %v495 = vsel %vm371, %v488, 0
    %497 = vmatpush.xpose.msra.mxu0 0.0
    %498 = vmatpush.xpose.msra.mxu0 0.0
    %499 = vmatpush.xpose.msra.mxu0 0.0
    %500 = vmatpush.xpose.msra.mxu0 0.0
    %501 = vmatpush.xpose.msra.mxu0 0.0
    %502 = vmatpush.xpose.msra.mxu0 0.0
    %503 = vmatpush.xpose.msra.mxu0 0.0
    %504 = vmatpush.xpose.msra.mxu0 0.0
    %505 = vmatpush.xpose.msra.mxu0 0.0
    %506 = vmatpush.xpose.msra.mxu0 0.0
    %507 = vmatpush.xpose.msra.mxu0 0.0
    %508 = vmatpush.xpose.msra.mxu0 0.0
    %509 = vmatpush.xpose.msra.mxu0 0.0
    %510 = vmatpush.xpose.msra.mxu0 0.0
    %511 = vmatpush.xpose.msra.mxu0 %v495
    %512 = vmatpush.xpose.msra.mxu0 %v493
    %513 = vmatmul.f32.gmra.mxu0 %v489
    %v514 = vpop.f32.mrf.mxu0
    %v515 = vadd.f32 0.0, %v514
    %516 = vmatmul.f32.gmra.mxu0 %v491
    %v517 = vpop.f32.mrf.mxu0
    %v518 = vadd.f32 0.0, %v517
    %519 = vdwg.mxu0
    %522 = vrot.lane.b32.xlu0 %v360, 96
    %v523 = vpop.permute.xlu0 %522
    %524 = vrot.lane.b32.xlu0 %v363, 96
    %v525 = vpop.permute.xlu0 %524
    %v526 = vsel %vm371, %v360, 0
    %v528 = vsel %vm371, %v363, 0
    %v530 = vsel %vm371, %v523, 0
    %v532 = vsel %vm371, %v525, 0
    %534 = vmatpush.xpose.msra.mxu0 0.0
    %535 = vmatpush.xpose.msra.mxu0 0.0
    %536 = vmatpush.xpose.msra.mxu0 0.0
    %537 = vmatpush.xpose.msra.mxu0 0.0
    %538 = vmatpush.xpose.msra.mxu0 0.0
    %539 = vmatpush.xpose.msra.mxu0 0.0
    %540 = vmatpush.xpose.msra.mxu0 0.0
    %541 = vmatpush.xpose.msra.mxu0 0.0
    %542 = vmatpush.xpose.msra.mxu0 0.0
    %543 = vmatpush.xpose.msra.mxu0 0.0
    %544 = vmatpush.xpose.msra.mxu0 0.0
    %545 = vmatpush.xpose.msra.mxu0 0.0
    %546 = vmatpush.xpose.msra.mxu0 0.0
    %547 = vmatpush.xpose.msra.mxu0 0.0
    %548 = vmatpush.xpose.msra.mxu0 %v532
    %549 = vmatpush.xpose.msra.mxu0 %v530
    %550 = vmatmul.f32.gmra.mxu0 %v526
    %v551 = vpop.f32.mrf.mxu0
    %v552 = vadd.f32 0.0, %v551
    %553 = vmatmul.f32.gmra.mxu0 %v528
    %v554 = vpop.f32.mrf.mxu0
    %v555 = vadd.f32 0.0, %v554
    %556 = vdwg.mxu0
    %557 = vrot.lane.b32.xlu0 %v360, 120
    %v558 = vpop.permute.xlu0 %557
    %559 = vrot.lane.b32.xlu0 %v363, 120
    %v560 = vpop.permute.xlu0 %559
    %561 = vrot.lane.b32.xlu0 %v360, 88
    %v562 = vpop.permute.xlu0 %561
    %563 = vrot.lane.b32.xlu0 %v363, 88
    %v564 = vpop.permute.xlu0 %563
    %v565 = vsel %vm371, %v558, 0
    %v567 = vsel %vm371, %v560, 0
    %v569 = vsel %vm371, %v562, 0
    %v571 = vsel %vm371, %v564, 0
    %573 = vmatpush.xpose.msra.mxu0 0.0
    %574 = vmatpush.xpose.msra.mxu0 0.0
    %575 = vmatpush.xpose.msra.mxu0 0.0
    %576 = vmatpush.xpose.msra.mxu0 0.0
    %577 = vmatpush.xpose.msra.mxu0 0.0
    %578 = vmatpush.xpose.msra.mxu0 0.0
    %579 = vmatpush.xpose.msra.mxu0 0.0
    %580 = vmatpush.xpose.msra.mxu0 0.0
    %581 = vmatpush.xpose.msra.mxu0 0.0
    %582 = vmatpush.xpose.msra.mxu0 0.0
    %583 = vmatpush.xpose.msra.mxu0 0.0
    %584 = vmatpush.xpose.msra.mxu0 0.0
    %585 = vmatpush.xpose.msra.mxu0 0.0
    %586 = vmatpush.xpose.msra.mxu0 0.0
    %587 = vmatpush.xpose.msra.mxu0 %v571
    %588 = vmatpush.xpose.msra.mxu0 %v569
    %589 = vmatmul.f32.gmra.mxu0 %v565
    %v590 = vpop.f32.mrf.mxu0
    %v591 = vadd.f32 0.0, %v590
    %592 = vmatmul.f32.gmra.mxu0 %v567
    %v593 = vpop.f32.mrf.mxu0
    %v594 = vadd.f32 0.0, %v593
    %595 = vdwg.mxu0
    %596 = vrot.lane.b32.xlu0 %v360, 112
    %v597 = vpop.permute.xlu0 %596
    %598 = vrot.lane.b32.xlu0 %v363, 112
    %v599 = vpop.permute.xlu0 %598
    %600 = vrot.lane.b32.xlu0 %v360, 80
    %v601 = vpop.permute.xlu0 %600
    %602 = vrot.lane.b32.xlu0 %v363, 80
    %v603 = vpop.permute.xlu0 %602
    %v604 = vsel %vm371, %v597, 0
    %v606 = vsel %vm371, %v599, 0
    %v608 = vsel %vm371, %v601, 0
    %v610 = vsel %vm371, %v603, 0
    %612 = vmatpush.xpose.msra.mxu0 0.0
    %613 = vmatpush.xpose.msra.mxu0 0.0
    %614 = vmatpush.xpose.msra.mxu0 0.0
    %615 = vmatpush.xpose.msra.mxu0 0.0
    %616 = vmatpush.xpose.msra.mxu0 0.0
    %617 = vmatpush.xpose.msra.mxu0 0.0
    %618 = vmatpush.xpose.msra.mxu0 0.0
    %619 = vmatpush.xpose.msra.mxu0 0.0
    %620 = vmatpush.xpose.msra.mxu0 0.0
    %621 = vmatpush.xpose.msra.mxu0 0.0
    %622 = vmatpush.xpose.msra.mxu0 0.0
    %623 = vmatpush.xpose.msra.mxu0 0.0
    %624 = vmatpush.xpose.msra.mxu0 0.0
    %625 = vmatpush.xpose.msra.mxu0 0.0
    %626 = vmatpush.xpose.msra.mxu0 %v610
    %627 = vmatpush.xpose.msra.mxu0 %v608
    %628 = vmatmul.f32.gmra.mxu0 %v604
    %v629 = vpop.f32.mrf.mxu0
    %v630 = vadd.f32 0.0, %v629
    %631 = vmatmul.f32.gmra.mxu0 %v606
    %v632 = vpop.f32.mrf.mxu0
    %v633 = vadd.f32 0.0, %v632
    %634 = vdwg.mxu0
    %635 = vrot.lane.b32.xlu0 %v360, 104
    %v636 = vpop.permute.xlu0 %635
    %637 = vrot.lane.b32.xlu0 %v363, 104
    %v638 = vpop.permute.xlu0 %637
    %639 = vrot.lane.b32.xlu0 %v360, 72
    %v640 = vpop.permute.xlu0 %639
    %641 = vrot.lane.b32.xlu0 %v363, 72
    %v642 = vpop.permute.xlu0 %641
    %v643 = vsel %vm371, %v636, 0
    %v645 = vsel %vm371, %v638, 0
    %v647 = vsel %vm371, %v640, 0
    %v649 = vsel %vm371, %v642, 0
    %651 = vmatpush.xpose.msra.mxu0 0.0
    %652 = vmatpush.xpose.msra.mxu0 0.0
    %653 = vmatpush.xpose.msra.mxu0 0.0
    %654 = vmatpush.xpose.msra.mxu0 0.0
    %655 = vmatpush.xpose.msra.mxu0 0.0
    %656 = vmatpush.xpose.msra.mxu0 0.0
    %657 = vmatpush.xpose.msra.mxu0 0.0
    %658 = vmatpush.xpose.msra.mxu0 0.0
    %659 = vmatpush.xpose.msra.mxu0 0.0
    %660 = vmatpush.xpose.msra.mxu0 0.0
    %661 = vmatpush.xpose.msra.mxu0 0.0
    %662 = vmatpush.xpose.msra.mxu0 0.0
    %663 = vmatpush.xpose.msra.mxu0 0.0
    %664 = vmatpush.xpose.msra.mxu0 0.0
    %665 = vmatpush.xpose.msra.mxu0 %v649
    %666 = vmatpush.xpose.msra.mxu0 %v647
    %667 = vmatmul.f32.gmra.mxu0 %v643
    %v668 = vpop.f32.mrf.mxu0
    %v669 = vadd.f32 0.0, %v668
    %670 = vmatmul.f32.gmra.mxu0 %v645
    %v671 = vpop.f32.mrf.mxu0
    %v672 = vadd.f32 0.0, %v671
    %673 = vdwg.mxu0
    %v674 = vadd.f32 %v398, %v180
    %v675 = vadd.f32 %v401, %v181
    %v676 = vadd.f32 %v437, %v182
    %v677 = vadd.f32 %v440, %v183
    %v678 = vadd.f32 %v476, %v184
    %v679 = vadd.f32 %v479, %v185
    %v680 = vadd.f32 %v515, %v186
    %v681 = vadd.f32 %v518, %v187
    %v682 = vadd.f32 %v552, %v188
    %v683 = vadd.f32 %v555, %v189
    %v684 = vadd.f32 %v591, %v190
    %v685 = vadd.f32 %v594, %v191
    %v686 = vadd.f32 %v630, %v192
    %v687 = vadd.f32 %v633, %v193
    %v688 = vadd.f32 %v669, %v194
    %v689 = vadd.f32 %v672, %v195
    %vm690 = vcmask 130048
    %v691 = vsel %vm690, %v674, -inf
    %692 = vmax.xlane.f32.xlu0 %v691
    %v693 = vpop.xlane.xlu0 %692
    %v694 = vsel %vm690, %v675, -inf
    %695 = vmax.xlane.f32.xlu0 %v694
    %v696 = vpop.xlane.xlu0 %695
    %v697 = vsel %vm690, %v676, -inf
    %698 = vmax.xlane.f32.xlu0 %v697
    %v699 = vpop.xlane.xlu0 %698
    %v700 = vsel %vm690, %v677, -inf
    %701 = vmax.xlane.f32.xlu0 %v700
    %v702 = vpop.xlane.xlu0 %701
    %v703 = vsel %vm690, %v678, -inf
    %704 = vmax.xlane.f32.xlu0 %v703
    %v705 = vpop.xlane.xlu0 %704
    %v706 = vsel %vm690, %v679, -inf
    %707 = vmax.xlane.f32.xlu0 %v706
    %v708 = vpop.xlane.xlu0 %707
    %v709 = vsel %vm690, %v680, -inf
    %710 = vmax.xlane.f32.xlu0 %v709
    %v711 = vpop.xlane.xlu0 %710
    %v712 = vsel %vm690, %v681, -inf
    %713 = vmax.xlane.f32.xlu0 %v712
    %v714 = vpop.xlane.xlu0 %713
    %v715 = vsel %vm690, %v682, -inf
    %716 = vmax.xlane.f32.xlu0 %v715
    %v717 = vpop.xlane.xlu0 %716
    %v718 = vsel %vm690, %v683, -inf
    %719 = vmax.xlane.f32.xlu0 %v718
    %v720 = vpop.xlane.xlu0 %719
    %v721 = vsel %vm690, %v684, -inf
    %722 = vmax.xlane.f32.xlu0 %v721
    %v723 = vpop.xlane.xlu0 %722
    %v724 = vsel %vm690, %v685, -inf
    %725 = vmax.xlane.f32.xlu0 %v724
    %v726 = vpop.xlane.xlu0 %725
    %v727 = vsel %vm690, %v686, -inf
    %728 = vmax.xlane.f32.xlu0 %v727
    %v729 = vpop.xlane.xlu0 %728
    %v730 = vsel %vm690, %v687, -inf
    %731 = vmax.xlane.f32.xlu0 %v730
    %v732 = vpop.xlane.xlu0 %731
    %v733 = vsel %vm690, %v688, -inf
    %734 = vmax.xlane.f32.xlu0 %v733
    %v735 = vpop.xlane.xlu0 %734
    %v736 = vsel %vm690, %v689, -inf
    %737 = vmax.xlane.f32.xlu0 %v736
    %v738 = vpop.xlane.xlu0 %737
    %v739 = vsub.f32 %v674, %v693
    %v740 = vsub.f32 %v675, %v696
    %v741 = vsub.f32 %v676, %v699
    %v742 = vsub.f32 %v677, %v702
    %v743 = vsub.f32 %v678, %v705
    %v744 = vsub.f32 %v679, %v708
    %v745 = vsub.f32 %v680, %v711
    %v746 = vsub.f32 %v681, %v714
    %v747 = vsub.f32 %v682, %v717
    %v748 = vsub.f32 %v683, %v720
    %v749 = vsub.f32 %v684, %v723
    %v750 = vsub.f32 %v685, %v726
    %v751 = vsub.f32 %v686, %v729
    %v752 = vsub.f32 %v687, %v732
    %v753 = vsub.f32 %v688, %v735
    %v754 = vsub.f32 %v689, %v738
    %v755 = vmul.f32 %v739, 1.442695
    %v756 = vpow.pop %v755
    %v757 = vmul.f32 %v740, 1.442695
    %v758 = vpow.pop %v757
    %v759 = vmul.f32 %v741, 1.442695
    %v760 = vpow.pop %v759
    %v761 = vmul.f32 %v742, 1.442695
    %v762 = vpow.pop %v761
    %v763 = vmul.f32 %v743, 1.442695
    %v764 = vpow.pop %v763
    %v765 = vmul.f32 %v744, 1.442695
    %v766 = vpow.pop %v765
    %v767 = vmul.f32 %v745, 1.442695
    %v768 = vpow.pop %v767
    %v769 = vmul.f32 %v746, 1.442695
    %v770 = vpow.pop %v769
    %v771 = vmul.f32 %v747, 1.442695
    %v772 = vpow.pop %v771
    %v773 = vmul.f32 %v748, 1.442695
    %v774 = vpow.pop %v773
    %v775 = vmul.f32 %v749, 1.442695
    %v776 = vpow.pop %v775
    %v777 = vmul.f32 %v750, 1.442695
    %v778 = vpow.pop %v777
    %v779 = vmul.f32 %v751, 1.442695
    %v780 = vpow.pop %v779
    %v781 = vmul.f32 %v752, 1.442695
    %v782 = vpow.pop %v781
    %v783 = vmul.f32 %v753, 1.442695
    %v784 = vpow.pop %v783
    %v785 = vmul.f32 %v754, 1.442695
    %v786 = vpow.pop %v785
    %v787 = vsel %vm690, %v756, 0.0
    %788 = vadd.xlane.f32.xlu0 %v787
    %v789 = vpop.xlane.xlu0 %788
    %v790 = vsel %vm690, %v758, 0.0
    %791 = vadd.xlane.f32.xlu0 %v790
    %v792 = vpop.xlane.xlu0 %791
    %v793 = vsel %vm690, %v760, 0.0
    %794 = vadd.xlane.f32.xlu0 %v793
    %v795 = vpop.xlane.xlu0 %794
    %v796 = vsel %vm690, %v762, 0.0
    %797 = vadd.xlane.f32.xlu0 %v796
    %v798 = vpop.xlane.xlu0 %797
    %v799 = vsel %vm690, %v764, 0.0
    %800 = vadd.xlane.f32.xlu0 %v799
    %v801 = vpop.xlane.xlu0 %800
    %v802 = vsel %vm690, %v766, 0.0
    %803 = vadd.xlane.f32.xlu0 %v802
    %v804 = vpop.xlane.xlu0 %803
    %v805 = vsel %vm690, %v768, 0.0
    %806 = vadd.xlane.f32.xlu0 %v805
    %v807 = vpop.xlane.xlu0 %806
    %v808 = vsel %vm690, %v770, 0.0
    %809 = vadd.xlane.f32.xlu0 %v808
    %v810 = vpop.xlane.xlu0 %809
    %v811 = vsel %vm690, %v772, 0.0
    %812 = vadd.xlane.f32.xlu0 %v811
    %v813 = vpop.xlane.xlu0 %812
    %v814 = vsel %vm690, %v774, 0.0
    %815 = vadd.xlane.f32.xlu0 %v814
    %v816 = vpop.xlane.xlu0 %815
    %v817 = vsel %vm690, %v776, 0.0
    %818 = vadd.xlane.f32.xlu0 %v817
    %v819 = vpop.xlane.xlu0 %818
    %v820 = vsel %vm690, %v778, 0.0
    %821 = vadd.xlane.f32.xlu0 %v820
    %v822 = vpop.xlane.xlu0 %821
    %v823 = vsel %vm690, %v780, 0.0
    %824 = vadd.xlane.f32.xlu0 %v823
    %v825 = vpop.xlane.xlu0 %824
    %v826 = vsel %vm690, %v782, 0.0
    %827 = vadd.xlane.f32.xlu0 %v826
    %v828 = vpop.xlane.xlu0 %827
    %v829 = vsel %vm690, %v784, 0.0
    %830 = vadd.xlane.f32.xlu0 %v829
    %v831 = vpop.xlane.xlu0 %830
    %v832 = vsel %vm690, %v786, 0.0
    %833 = vadd.xlane.f32.xlu0 %v832
    %v834 = vpop.xlane.xlu0 %833
    %v835 = vrcp.pop %v789
    %v836 = vrcp.pop %v792
    %v837 = vrcp.pop %v795
    %v838 = vrcp.pop %v798
    %v839 = vrcp.pop %v801
    %v840 = vrcp.pop %v804
    %v841 = vrcp.pop %v807
    %v842 = vrcp.pop %v810
    %v843 = vrcp.pop %v813
    %v844 = vrcp.pop %v816
    %v845 = vrcp.pop %v819
    %v846 = vrcp.pop %v822
    %v847 = vrcp.pop %v825
    %v848 = vrcp.pop %v828
    %v849 = vrcp.pop %v831
    %v850 = vrcp.pop %v834
    %v851 = vmul.f32 %v756, %v835
    %v852 = vmul.f32 %v758, %v836
    %v853 = vmul.f32 %v760, %v837
    %v854 = vmul.f32 %v762, %v838
    %v855 = vmul.f32 %v764, %v839
    %v856 = vmul.f32 %v766, %v840
    %v857 = vmul.f32 %v768, %v841
    %v858 = vmul.f32 %v770, %v842
    %v859 = vmul.f32 %v772, %v843
    %v860 = vmul.f32 %v774, %v844
    %v861 = vmul.f32 %v776, %v845
    %v862 = vmul.f32 %v778, %v846
    %v863 = vmul.f32 %v780, %v847
    %v864 = vmul.f32 %v782, %v848
    %v865 = vmul.f32 %v784, %v849
    %v866 = vmul.f32 %v786, %v850
    %867 = vrot.lane.b32.xlu0 %v354, 64
    %v868 = vpop.permute.xlu0 %867
    %869 = vrot.lane.b32.xlu0 %v357, 64
    %v870 = vpop.permute.xlu0 %869
    %v874 = vsel %vm690, %v851, 0
    %v877 = vsel %vm690, %v852, 0
    %879 = vmatpush.msra.mxu0 0.0
    %880 = vmatpush.msra.mxu0 0.0
    %881 = vmatpush.msra.mxu0 0.0
    %882 = vmatpush.msra.mxu0 0.0
    %883 = vmatpush.msra.mxu0 0.0
    %884 = vmatpush.msra.mxu0 0.0
    %885 = vmatpush.msra.mxu0 0.0
    %886 = vmatpush.msra.mxu0 0.0
    %887 = vmatpush.msra.mxu0 0.0
    %888 = vmatpush.msra.mxu0 0.0
    %889 = vmatpush.msra.mxu0 0.0
    %890 = vmatpush.msra.mxu0 0.0
    %891 = vmatpush.msra.mxu0 0.0
    %892 = vmatpush.msra.mxu0 0.0
    %893 = vmatpush.msra.mxu0 %v870
    %894 = vmatpush.msra.mxu0 %v868
    %895 = vmatmul.f32.gmra.mxu0 %v874
    %v896 = vpop.f32.mrf.mxu0
    %v897 = vadd.f32 0.0, %v896
    %898 = vmatmul.f32.gmra.mxu0 %v877
    %v899 = vpop.f32.mrf.mxu0
    %v900 = vadd.f32 0.0, %v899
    %901 = vdwg.mxu0
    %902 = vrot.lane.b32.xlu0 %v354, 56
    %v903 = vpop.permute.xlu0 %902
    %904 = vrot.lane.b32.xlu0 %v357, 56
    %v905 = vpop.permute.xlu0 %904
    %v909 = vsel %vm690, %v853, 0
    %v912 = vsel %vm690, %v854, 0
    %914 = vmatpush.msra.mxu0 0.0
    %915 = vmatpush.msra.mxu0 0.0
    %916 = vmatpush.msra.mxu0 0.0
    %917 = vmatpush.msra.mxu0 0.0
    %918 = vmatpush.msra.mxu0 0.0
    %919 = vmatpush.msra.mxu0 0.0
    %920 = vmatpush.msra.mxu0 0.0
    %921 = vmatpush.msra.mxu0 0.0
    %922 = vmatpush.msra.mxu0 0.0
    %923 = vmatpush.msra.mxu0 0.0
    %924 = vmatpush.msra.mxu0 0.0
    %925 = vmatpush.msra.mxu0 0.0
    %926 = vmatpush.msra.mxu0 0.0
    %927 = vmatpush.msra.mxu0 0.0
    %928 = vmatpush.msra.mxu0 %v905
    %929 = vmatpush.msra.mxu0 %v903
    %930 = vmatmul.f32.gmra.mxu0 %v909
    %v931 = vpop.f32.mrf.mxu0
    %v932 = vadd.f32 0.0, %v931
    %933 = vmatmul.f32.gmra.mxu0 %v912
    %v934 = vpop.f32.mrf.mxu0
    %v935 = vadd.f32 0.0, %v934
    %936 = vdwg.mxu0
    %937 = vrot.lane.b32.xlu0 %v354, 48
    %v938 = vpop.permute.xlu0 %937
    %939 = vrot.lane.b32.xlu0 %v357, 48
    %v940 = vpop.permute.xlu0 %939
    %v944 = vsel %vm690, %v855, 0
    %v947 = vsel %vm690, %v856, 0
    %949 = vmatpush.msra.mxu0 0.0
    %950 = vmatpush.msra.mxu0 0.0
    %951 = vmatpush.msra.mxu0 0.0
    %952 = vmatpush.msra.mxu0 0.0
    %953 = vmatpush.msra.mxu0 0.0
    %954 = vmatpush.msra.mxu0 0.0
    %955 = vmatpush.msra.mxu0 0.0
    %956 = vmatpush.msra.mxu0 0.0
    %957 = vmatpush.msra.mxu0 0.0
    %958 = vmatpush.msra.mxu0 0.0
    %959 = vmatpush.msra.mxu0 0.0
    %960 = vmatpush.msra.mxu0 0.0
    %961 = vmatpush.msra.mxu0 0.0
    %962 = vmatpush.msra.mxu0 0.0
    %963 = vmatpush.msra.mxu0 %v940
    %964 = vmatpush.msra.mxu0 %v938
    %965 = vmatmul.f32.gmra.mxu0 %v944
    %v966 = vpop.f32.mrf.mxu0
    %v967 = vadd.f32 0.0, %v966
    %968 = vmatmul.f32.gmra.mxu0 %v947
    %v969 = vpop.f32.mrf.mxu0
    %v970 = vadd.f32 0.0, %v969
    %971 = vdwg.mxu0
    %972 = vrot.lane.b32.xlu0 %v354, 40
    %v973 = vpop.permute.xlu0 %972
    %974 = vrot.lane.b32.xlu0 %v357, 40
    %v975 = vpop.permute.xlu0 %974
    %v979 = vsel %vm690, %v857, 0
    %v982 = vsel %vm690, %v858, 0
    %984 = vmatpush.msra.mxu0 0.0
    %985 = vmatpush.msra.mxu0 0.0
    %986 = vmatpush.msra.mxu0 0.0
    %987 = vmatpush.msra.mxu0 0.0
    %988 = vmatpush.msra.mxu0 0.0
    %989 = vmatpush.msra.mxu0 0.0
    %990 = vmatpush.msra.mxu0 0.0
    %991 = vmatpush.msra.mxu0 0.0
    %992 = vmatpush.msra.mxu0 0.0
    %993 = vmatpush.msra.mxu0 0.0
    %994 = vmatpush.msra.mxu0 0.0
    %995 = vmatpush.msra.mxu0 0.0
    %996 = vmatpush.msra.mxu0 0.0
    %997 = vmatpush.msra.mxu0 0.0
    %998 = vmatpush.msra.mxu0 %v975
    %999 = vmatpush.msra.mxu0 %v973
    %1000 = vmatmul.f32.gmra.mxu0 %v979
    %v1001 = vpop.f32.mrf.mxu0
    %v1002 = vadd.f32 0.0, %v1001
    %1003 = vmatmul.f32.gmra.mxu0 %v982
    %v1004 = vpop.f32.mrf.mxu0
    %v1005 = vadd.f32 0.0, %v1004
    %1006 = vdwg.mxu0
    %1009 = vrot.lane.b32.xlu0 %v932, 8
    %v1010 = vpop.permute.xlu0 %1009
    %1011 = vrot.lane.b32.xlu0 %v935, 8
    %v1012 = vpop.permute.xlu0 %1011
    %1017 = vrot.lane.b32.xlu0 %v967, 16
    %v1018 = vpop.permute.xlu0 %1017
    %1019 = vrot.lane.b32.xlu0 %v970, 16
    %v1020 = vpop.permute.xlu0 %1019
    %1025 = vrot.lane.b32.xlu0 %v1002, 24
    %v1026 = vpop.permute.xlu0 %1025
    %1027 = vrot.lane.b32.xlu0 %v1005, 24
    %v1028 = vpop.permute.xlu0 %1027
    %v1031 = vsel %vm371, %v897, %v1010
    %v1032 = vsel %vm371, %v900, %v1012
    %v1033 = vsel %vm690, %v1031, %v1018
    %v1034 = vsel %vm690, %v1032, %v1020
    %vm1035 = vcmask 195584
    %v1036 = vsel %vm1035, %v1033, %v1026
    %v1037 = vsel %vm1035, %v1034, %v1028
    %1038 = vrot.lane.b32.xlu0 %v360, 64
    %v1039 = vpop.permute.xlu0 %1038
    %1040 = vrot.lane.b32.xlu0 %v363, 64
    %v1041 = vpop.permute.xlu0 %1040
    %v1045 = vsel %vm690, %v859, 0
    %v1048 = vsel %vm690, %v860, 0
    %1050 = vmatpush.msra.mxu0 0.0
    %1051 = vmatpush.msra.mxu0 0.0
    %1052 = vmatpush.msra.mxu0 0.0
    %1053 = vmatpush.msra.mxu0 0.0
    %1054 = vmatpush.msra.mxu0 0.0
    %1055 = vmatpush.msra.mxu0 0.0
    %1056 = vmatpush.msra.mxu0 0.0
    %1057 = vmatpush.msra.mxu0 0.0
    %1058 = vmatpush.msra.mxu0 0.0
    %1059 = vmatpush.msra.mxu0 0.0
    %1060 = vmatpush.msra.mxu0 0.0
    %1061 = vmatpush.msra.mxu0 0.0
    %1062 = vmatpush.msra.mxu0 0.0
    %1063 = vmatpush.msra.mxu0 0.0
    %1064 = vmatpush.msra.mxu0 %v1041
    %1065 = vmatpush.msra.mxu0 %v1039
    %1066 = vmatmul.f32.gmra.mxu0 %v1045
    %v1067 = vpop.f32.mrf.mxu0
    %v1068 = vadd.f32 0.0, %v1067
    %1069 = vmatmul.f32.gmra.mxu0 %v1048
    %v1070 = vpop.f32.mrf.mxu0
    %v1071 = vadd.f32 0.0, %v1070
    %1072 = vdwg.mxu0
    %1073 = vrot.lane.b32.xlu0 %v360, 56
    %v1074 = vpop.permute.xlu0 %1073
    %1075 = vrot.lane.b32.xlu0 %v363, 56
    %v1076 = vpop.permute.xlu0 %1075
    %v1080 = vsel %vm690, %v861, 0
    %v1083 = vsel %vm690, %v862, 0
    %1085 = vmatpush.msra.mxu0 0.0
    %1086 = vmatpush.msra.mxu0 0.0
    %1087 = vmatpush.msra.mxu0 0.0
    %1088 = vmatpush.msra.mxu0 0.0
    %1089 = vmatpush.msra.mxu0 0.0
    %1090 = vmatpush.msra.mxu0 0.0
    %1091 = vmatpush.msra.mxu0 0.0
    %1092 = vmatpush.msra.mxu0 0.0
    %1093 = vmatpush.msra.mxu0 0.0
    %1094 = vmatpush.msra.mxu0 0.0
    %1095 = vmatpush.msra.mxu0 0.0
    %1096 = vmatpush.msra.mxu0 0.0
    %1097 = vmatpush.msra.mxu0 0.0
    %1098 = vmatpush.msra.mxu0 0.0
    %1099 = vmatpush.msra.mxu0 %v1076
    %1100 = vmatpush.msra.mxu0 %v1074
    %1101 = vmatmul.f32.gmra.mxu0 %v1080
    %v1102 = vpop.f32.mrf.mxu0
    %v1103 = vadd.f32 0.0, %v1102
    %1104 = vmatmul.f32.gmra.mxu0 %v1083
    %v1105 = vpop.f32.mrf.mxu0
    %v1106 = vadd.f32 0.0, %v1105
    %1107 = vdwg.mxu0
    %1108 = vrot.lane.b32.xlu0 %v360, 48
    %v1109 = vpop.permute.xlu0 %1108
    %1110 = vrot.lane.b32.xlu0 %v363, 48
    %v1111 = vpop.permute.xlu0 %1110
    %v1115 = vsel %vm690, %v863, 0
    %v1118 = vsel %vm690, %v864, 0
    %1120 = vmatpush.msra.mxu0 0.0
    %1121 = vmatpush.msra.mxu0 0.0
    %1122 = vmatpush.msra.mxu0 0.0
    %1123 = vmatpush.msra.mxu0 0.0
    %1124 = vmatpush.msra.mxu0 0.0
    %1125 = vmatpush.msra.mxu0 0.0
    %1126 = vmatpush.msra.mxu0 0.0
    %1127 = vmatpush.msra.mxu0 0.0
    %1128 = vmatpush.msra.mxu0 0.0
    %1129 = vmatpush.msra.mxu0 0.0
    %1130 = vmatpush.msra.mxu0 0.0
    %1131 = vmatpush.msra.mxu0 0.0
    %1132 = vmatpush.msra.mxu0 0.0
    %1133 = vmatpush.msra.mxu0 0.0
    %1134 = vmatpush.msra.mxu0 %v1111
    %1135 = vmatpush.msra.mxu0 %v1109
    %1136 = vmatmul.f32.gmra.mxu0 %v1115
    %v1137 = vpop.f32.mrf.mxu0
    %v1138 = vadd.f32 0.0, %v1137
    %1139 = vmatmul.f32.gmra.mxu0 %v1118
    %v1140 = vpop.f32.mrf.mxu0
    %v1141 = vadd.f32 0.0, %v1140
    %1142 = vdwg.mxu0
    %1143 = vrot.lane.b32.xlu0 %v360, 40
    %v1144 = vpop.permute.xlu0 %1143
    %1145 = vrot.lane.b32.xlu0 %v363, 40
    %v1146 = vpop.permute.xlu0 %1145
    %v1150 = vsel %vm690, %v865, 0
    %v1153 = vsel %vm690, %v866, 0
    %1155 = vmatpush.msra.mxu0 0.0
    %1156 = vmatpush.msra.mxu0 0.0
    %1157 = vmatpush.msra.mxu0 0.0
    %1158 = vmatpush.msra.mxu0 0.0
    %1159 = vmatpush.msra.mxu0 0.0
    %1160 = vmatpush.msra.mxu0 0.0
    %1161 = vmatpush.msra.mxu0 0.0
    %1162 = vmatpush.msra.mxu0 0.0
    %1163 = vmatpush.msra.mxu0 0.0
    %1164 = vmatpush.msra.mxu0 0.0
    %1165 = vmatpush.msra.mxu0 0.0
    %1166 = vmatpush.msra.mxu0 0.0
    %1167 = vmatpush.msra.mxu0 0.0
    %1168 = vmatpush.msra.mxu0 0.0
    %1169 = vmatpush.msra.mxu0 %v1146
    %1170 = vmatpush.msra.mxu0 %v1144
    %1171 = vmatmul.f32.gmra.mxu0 %v1150
    %v1172 = vpop.f32.mrf.mxu0
    %v1173 = vadd.f32 0.0, %v1172
    %1174 = vmatmul.f32.gmra.mxu0 %v1153
    %v1175 = vpop.f32.mrf.mxu0
    %v1176 = vadd.f32 0.0, %v1175
    %1177 = vdwg.mxu0
    %1180 = vrot.lane.b32.xlu0 %v1103, 8
    %v1181 = vpop.permute.xlu0 %1180
    %1182 = vrot.lane.b32.xlu0 %v1106, 8
    %v1183 = vpop.permute.xlu0 %1182
    %1188 = vrot.lane.b32.xlu0 %v1138, 16
    %v1189 = vpop.permute.xlu0 %1188
    %1190 = vrot.lane.b32.xlu0 %v1141, 16
    %v1191 = vpop.permute.xlu0 %1190
    %1196 = vrot.lane.b32.xlu0 %v1173, 24
    %v1197 = vpop.permute.xlu0 %1196
    %1198 = vrot.lane.b32.xlu0 %v1176, 24
    %v1199 = vpop.permute.xlu0 %1198
    %v1202 = vsel %vm371, %v1068, %v1181
    %v1203 = vsel %vm371, %v1071, %v1183
    %v1204 = vsel %vm690, %v1202, %v1189
    %v1205 = vsel %vm690, %v1203, %v1191
    %v1206 = vsel %vm1035, %v1204, %v1197
    %v1207 = vsel %vm1035, %v1205, %v1199
    %v1209 = vsel %vm68, %v1036, 0
    %v1212 = vsel %vm68, %v1037, 0
    %v1215 = vsel %vm68, %v1206, 0
    %v1218 = vsel %vm68, %v1207, 0
    %1220 = vmatpush.msra.mxu0 0.0
    %1221 = vmatpush.msra.mxu0 0.0
    %1222 = vmatpush.msra.mxu0 0.0
    %1223 = vmatpush.msra.mxu0 0.0
    %1224 = vmatpush.msra.mxu0 0.0
    %1225 = vmatpush.msra.mxu0 0.0
    %1226 = vmatpush.msra.mxu0 0.0
    %1227 = vmatpush.msra.mxu0 0.0
    %1228 = vmatpush.msra.mxu0 0.0
    %1229 = vmatpush.msra.mxu0 0.0
    %1230 = vmatpush.msra.mxu0 0.0
    %1231 = vmatpush.msra.mxu0 0.0
    %1232 = vmatpush.msra.mxu0 %v208
    %1233 = vmatpush.msra.mxu0 %v207
    %1234 = vmatpush.msra.mxu0 %v206
    %1235 = vmatpush.msra.mxu0 %v205
    %1236 = vmatmul.f32.gmra.mxu0 %v1209
    %v1237 = vpop.f32.mrf.mxu0
    %v1238 = vadd.f32 0.0, %v1237
    %1239 = vmatmul.f32.gmra.mxu0 %v1212
    %v1240 = vpop.f32.mrf.mxu0
    %v1241 = vadd.f32 0.0, %v1240
    %1242 = vmatmul.f32.gmra.mxu0 %v1215
    %v1243 = vpop.f32.mrf.mxu0
    %v1244 = vadd.f32 0.0, %v1243
    %1245 = vmatmul.f32.gmra.mxu0 %v1218
    %v1246 = vpop.f32.mrf.mxu0
    %v1247 = vadd.f32 0.0, %v1246
    %1248 = vdwg.mxu0
    %v1249 = vadd.f32 %v178, %v1238
    %v1250 = vadd.f32 %v124, %v1241
    %v1251 = vadd.f32 %v179, %v1244
    %v1252 = vadd.f32 %v125, %v1247
    %v1253 = vperm.slane %v204, 3
    %v1254 = vadd.f32 %v1249, %v1253
    %v1255 = vadd.f32 %v1250, %v1253
    %v1256 = vadd.f32 %v1251, %v1253
    %v1257 = vadd.f32 %v1252, %v1253
    %v1258 = vsel %vm68, %v1254, 0.0
    %1259 = vadd.xlane.f32.xlu0 %v1258
    %v1260 = vpop.xlane.xlu0 %1259
    %v1261 = vsel %vm68, %v1255, 0.0
    %1262 = vadd.xlane.f32.xlu0 %v1261
    %v1263 = vpop.xlane.xlu0 %1262
    %v1264 = vsel %vm68, %v1256, 0.0
    %1265 = vadd.xlane.f32.xlu0 %v1264
    %v1266 = vpop.xlane.xlu0 %1265
    %v1267 = vsel %vm68, %v1257, 0.0
    %1268 = vadd.xlane.f32.xlu0 %v1267
    %v1269 = vpop.xlane.xlu0 %1268
    %v1270 = vmul.f32 %v1260, %v81
    %v1271 = vmul.f32 %v1263, %v81
    %v1272 = vmul.f32 %v1266, %v81
    %v1273 = vmul.f32 %v1269, %v81
    %v1274 = vsub.f32 %v1254, %v1270
    %v1275 = vsub.f32 %v1255, %v1271
    %v1276 = vsub.f32 %v1256, %v1272
    %v1277 = vsub.f32 %v1257, %v1273
    %v1278 = vmul.f32 %v1274, %v1274
    %v1279 = vmul.f32 %v1275, %v1275
    %v1280 = vmul.f32 %v1276, %v1276
    %v1281 = vmul.f32 %v1277, %v1277
    %v1282 = vsel %vm68, %v1278, 0.0
    %1283 = vadd.xlane.f32.xlu0 %v1282
    %v1284 = vpop.xlane.xlu0 %1283
    %v1285 = vsel %vm68, %v1279, 0.0
    %1286 = vadd.xlane.f32.xlu0 %v1285
    %v1287 = vpop.xlane.xlu0 %1286
    %v1288 = vsel %vm68, %v1280, 0.0
    %1289 = vadd.xlane.f32.xlu0 %v1288
    %v1290 = vpop.xlane.xlu0 %1289
    %v1291 = vsel %vm68, %v1281, 0.0
    %1292 = vadd.xlane.f32.xlu0 %v1291
    %v1293 = vpop.xlane.xlu0 %1292
    %v1294 = vmul.f32 %v1284, %v81
    %v1295 = vmul.f32 %v1287, %v81
    %v1296 = vmul.f32 %v1290, %v81
    %v1297 = vmul.f32 %v1293, %v81
    %v1298 = vadd.f32 %v1294, 1e-06
    %v1299 = vadd.f32 %v1295, 1e-06
    %v1300 = vadd.f32 %v1296, 1e-06
    %v1301 = vadd.f32 %v1297, 1e-06
    %v1302 = vrsqrt.pop %v1298
    %v1303 = vmul.f32 %v1302, %v1298
    %v1304 = vmul.f32 %v1303, %v1302
    %v1305 = vmul.f32 0.5, %v1304
    %v1306 = vsub.f32 1.5, %v1305
    %v1307 = vmul.f32 %v1302, %v1306
    %vm1308 = vweird.f32 %v1298
    %vm1309 = vweird.f32 %v1302
    %vm1310 = vmor %vm1308, %vm1309
    %v1311 = vsel %vm1310, %v1302, %v1307
    %v1312 = vrsqrt.pop %v1299
    %v1313 = vmul.f32 %v1312, %v1299
    %v1314 = vmul.f32 %v1313, %v1312
    %v1315 = vmul.f32 0.5, %v1314
    %v1316 = vsub.f32 1.5, %v1315
    %v1317 = vmul.f32 %v1312, %v1316
    %vm1318 = vweird.f32 %v1299
    %vm1319 = vweird.f32 %v1312
    %vm1320 = vmor %vm1318, %vm1319
    %v1321 = vsel %vm1320, %v1312, %v1317
    %v1322 = vrsqrt.pop %v1300
    %v1323 = vmul.f32 %v1322, %v1300
    %v1324 = vmul.f32 %v1323, %v1322
    %v1325 = vmul.f32 0.5, %v1324
    %v1326 = vsub.f32 1.5, %v1325
    %v1327 = vmul.f32 %v1322, %v1326
    %vm1328 = vweird.f32 %v1300
    %vm1329 = vweird.f32 %v1322
    %vm1330 = vmor %vm1328, %vm1329
    %v1331 = vsel %vm1330, %v1322, %v1327
    %v1332 = vrsqrt.pop %v1301
    %v1333 = vmul.f32 %v1332, %v1301
    %v1334 = vmul.f32 %v1333, %v1332
    %v1335 = vmul.f32 0.5, %v1334
    %v1336 = vsub.f32 1.5, %v1335
    %v1337 = vmul.f32 %v1332, %v1336
    %vm1338 = vweird.f32 %v1301
    %vm1339 = vweird.f32 %v1332
    %vm1340 = vmor %vm1338, %vm1339
    %v1341 = vsel %vm1340, %v1332, %v1337
    %v1342 = vmul.f32 %v1274, %v1311
    %v1343 = vmul.f32 %v1275, %v1321
    %v1344 = vmul.f32 %v1276, %v1331
    %v1345 = vmul.f32 %v1277, %v1341
    %v1346 = vperm.slane %v204, 4
    %v1347 = vmul.f32 %v1342, %v1346
    %v1348 = vmul.f32 %v1343, %v1346
    %v1349 = vmul.f32 %v1344, %v1346
    %v1350 = vmul.f32 %v1345, %v1346
    %v1351 = vperm.slane %v204, 5
    %v1352 = vadd.f32 %v1347, %v1351
    %v1353 = vadd.f32 %v1348, %v1351
    %v1354 = vadd.f32 %v1349, %v1351
    %v1355 = vadd.f32 %v1350, %v1351
    %v1356 = vperm.slane %v204, 6
    %v1358 = vsel %vm68, %v1352, 0
    %v1361 = vsel %vm68, %v1353, 0
    %v1364 = vsel %vm68, %v1354, 0
    %v1367 = vsel %vm68, %v1355, 0
    %1369 = vmatpush.msra.mxu0 0.0
    %1370 = vmatpush.msra.mxu0 0.0
    %1371 = vmatpush.msra.mxu0 0.0
    %1372 = vmatpush.msra.mxu0 0.0
    %1373 = vmatpush.msra.mxu0 0.0
    %1374 = vmatpush.msra.mxu0 0.0
    %1375 = vmatpush.msra.mxu0 0.0
    %1376 = vmatpush.msra.mxu0 0.0
    %1377 = vmatpush.msra.mxu0 0.0
    %1378 = vmatpush.msra.mxu0 0.0
    %1379 = vmatpush.msra.mxu0 0.0
    %1380 = vmatpush.msra.mxu0 0.0
    %1381 = vmatpush.msra.mxu0 %v203
    %1382 = vmatpush.msra.mxu0 %v202
    %1383 = vmatpush.msra.mxu0 %v201
    %1384 = vmatpush.msra.mxu0 %v200
    %1385 = vmatmul.f32.gmra.mxu0 %v1358
    %v1386 = vpop.f32.mrf.mxu0
    %v1387 = vadd.f32 %v1356, %v1386
    %1388 = vmatmul.f32.gmra.mxu0 %v1361
    %v1389 = vpop.f32.mrf.mxu0
    %v1390 = vadd.f32 %v1356, %v1389
    %1391 = vmatmul.f32.gmra.mxu0 %v1364
    %v1392 = vpop.f32.mrf.mxu0
    %v1393 = vadd.f32 %v1356, %v1392
    %1394 = vmatmul.f32.gmra.mxu0 %v1367
    %v1395 = vpop.f32.mrf.mxu0
    %v1396 = vadd.f32 %v1356, %v1395
    %1397 = vdwg.mxu0
    %v1398 = vmul.f32 %v1387, %v1387
    %v1399 = vmul.f32 %v1390, %v1390
    %v1400 = vmul.f32 %v1393, %v1393
    %v1401 = vmul.f32 %v1396, %v1396
    %v1402 = vmul.f32 %v1387, %v1398
    %v1403 = vmul.f32 %v1390, %v1399
    %v1404 = vmul.f32 %v1393, %v1400
    %v1405 = vmul.f32 %v1396, %v1401
    %v1406 = vmul.f32 %v1402, 0.044715
    %v1407 = vmul.f32 %v1403, 0.044715
    %v1408 = vmul.f32 %v1404, 0.044715
    %v1409 = vmul.f32 %v1405, 0.044715
    %v1410 = vadd.f32 %v1387, %v1406
    %v1411 = vadd.f32 %v1390, %v1407
    %v1412 = vadd.f32 %v1393, %v1408
    %v1413 = vadd.f32 %v1396, %v1409
    %v1414 = vmul.f32 %v1410, 0.7978846
    %v1415 = vmul.f32 %v1411, 0.7978846
    %v1416 = vmul.f32 %v1412, 0.7978846
    %v1417 = vmul.f32 %v1413, 0.7978846
    %v1418 = vtanh.pop %v1414
    %v1419 = vtanh.pop %v1415
    %v1420 = vtanh.pop %v1416
    %v1421 = vtanh.pop %v1417
    %v1422 = vadd.f32 %v1418, 1.0
    %v1423 = vadd.f32 %v1419, 1.0
    %v1424 = vadd.f32 %v1420, 1.0
    %v1425 = vadd.f32 %v1421, 1.0
    %v1426 = vmul.f32 %v1422, 0.5
    %v1427 = vmul.f32 %v1423, 0.5
    %v1428 = vmul.f32 %v1424, 0.5
    %v1429 = vmul.f32 %v1425, 0.5
    %v1430 = vmul.f32 %v1387, %v1426
    %v1431 = vmul.f32 %v1390, %v1427
    %v1432 = vmul.f32 %v1393, %v1428
    %v1433 = vmul.f32 %v1396, %v1429
    %1434 = vmatpush.msra.mxu0 %v224
    %1435 = vmatpush.msra.mxu0 %v223
    %1436 = vmatpush.msra.mxu0 %v222
    %1437 = vmatpush.msra.mxu0 %v221
    %1438 = vmatpush.msra.mxu0 %v220
    %1439 = vmatpush.msra.mxu0 %v219
    %1440 = vmatpush.msra.mxu0 %v218
    %1441 = vmatpush.msra.mxu0 %v217
    %1442 = vmatpush.msra.mxu0 %v216
    %1443 = vmatpush.msra.mxu0 %v215
    %1444 = vmatpush.msra.mxu0 %v214
    %1445 = vmatpush.msra.mxu0 %v213
    %1446 = vmatpush.msra.mxu0 %v212
    %1447 = vmatpush.msra.mxu0 %v211
    %1448 = vmatpush.msra.mxu0 %v210
    %1449 = vmatpush.msra.mxu0 %v209
    %1450 = vmatmul.f32.gmra.mxu0 %v1430
    %v1451 = vpop.f32.mrf.mxu0
    %v1452 = vadd.f32 0.0, %v1451
    %1453 = vmatmul.f32.gmra.mxu0 %v1431
    %v1454 = vpop.f32.mrf.mxu0
    %v1455 = vadd.f32 0.0, %v1454
    %1456 = vmatmul.f32.gmra.mxu0 %v1432
    %v1457 = vpop.f32.mrf.mxu0
    %v1458 = vadd.f32 0.0, %v1457
    %1459 = vmatmul.f32.gmra.mxu0 %v1433
    %v1460 = vpop.f32.mrf.mxu0
    %v1461 = vadd.f32 0.0, %v1460
    %1462 = vdwg.mxu0
    %v1463 = vadd.f32 %v1254, %v1452
    %v1464 = vadd.f32 %v1255, %v1455
    %v1465 = vadd.f32 %v1256, %v1458
    %v1466 = vadd.f32 %v1257, %v1461
    %v1467 = vperm.slane %v204, 7
    %v1468 = vadd.f32 %v1463, %v1467
    %v1469 = vadd.f32 %v1464, %v1467
    %v1470 = vadd.f32 %v1465, %v1467
    %v1471 = vadd.f32 %v1466, %v1467
    %s1472 = scalar_lea.vmem %s4, 72
    %v1473 = vld [vmem:[%s1472] sm:$0xff]
    %v1474 = vld [vmem:[%s1472 + $0x8] sm:$0xff]
    %v1475 = vld [vmem:[%s1472 + $0x10] sm:$0xff]
    %v1476 = vld [vmem:[%s1472 + $0x18] sm:$0xff]
    %v1477 = vld [vmem:[%s1472 + $0x20] sm:$0xff]
    %v1478 = vld [vmem:[%s1472 + $0x28] sm:$0xff]
    %v1479 = vld [vmem:[%s1472 + $0x30] sm:$0xff]
    %v1480 = vld [vmem:[%s1472 + $0x38] sm:$0xff]
    %v1481 = vld [vmem:[%s1472 + $0x40] sm:$0xff]
    %s1482 = scalar_lea.vmem %s5, 160
    %v1483 = vld [vmem:[%s1482] sm:$0xff]
    %v1484 = vld [vmem:[%s1482 + $0x8] sm:$0xff]
    %v1485 = vld [vmem:[%s1482 + $0x10] sm:$0xff]
    %v1486 = vld [vmem:[%s1482 + $0x18] sm:$0xff]
    %v1487 = vld [vmem:[%s1482 + $0x20] sm:$0xff]
    %v1488 = vld [vmem:[%s1482 + $0x28] sm:$0xff]
    %v1489 = vld [vmem:[%s1482 + $0x30] sm:$0xff]
    %v1490 = vld [vmem:[%s1482 + $0x38] sm:$0xff]
    %v1491 = vld [vmem:[%s1482 + $0x40] sm:$0xff]
    %v1492 = vld [vmem:[%s1482 + $0x48] sm:$0xff]
    %v1493 = vld [vmem:[%s1482 + $0x50] sm:$0xff]
    %v1494 = vld [vmem:[%s1482 + $0x58] sm:$0xff]
    %v1495 = vld [vmem:[%s1482 + $0x60] sm:$0xff]
    %v1496 = vld [vmem:[%s1482 + $0x68] sm:$0xff]
    %v1497 = vld [vmem:[%s1482 + $0x70] sm:$0xff]
    %v1498 = vld [vmem:[%s1482 + $0x78] sm:$0xff]
    %v1499 = vld [vmem:[%s1482 + $0x80] sm:$0xff]
    %v1500 = vld [vmem:[%s1482 + $0x88] sm:$0xff]
    %v1501 = vld [vmem:[%s1482 + $0x90] sm:$0xff]
    %v1502 = vld [vmem:[%s1482 + $0x98] sm:$0xff]
    %v1503 = vsel %vm68, %v1468, 0.0
    %1504 = vadd.xlane.f32.xlu0 %v1503
    %v1505 = vpop.xlane.xlu0 %1504
    %v1506 = vsel %vm68, %v1469, 0.0
    %1507 = vadd.xlane.f32.xlu0 %v1506
    %v1508 = vpop.xlane.xlu0 %1507
    %v1509 = vsel %vm68, %v1470, 0.0
    %1510 = vadd.xlane.f32.xlu0 %v1509
    %v1511 = vpop.xlane.xlu0 %1510
    %v1512 = vsel %vm68, %v1471, 0.0
    %1513 = vadd.xlane.f32.xlu0 %v1512
    %v1514 = vpop.xlane.xlu0 %1513
    %v1515 = vmul.f32 %v1505, %v81
    %v1516 = vmul.f32 %v1508, %v81
    %v1517 = vmul.f32 %v1511, %v81
    %v1518 = vmul.f32 %v1514, %v81
    %v1519 = vsub.f32 %v1468, %v1515
    %v1520 = vsub.f32 %v1469, %v1516
    %v1521 = vsub.f32 %v1470, %v1517
    %v1522 = vsub.f32 %v1471, %v1518
    %v1523 = vmul.f32 %v1519, %v1519
    %v1524 = vmul.f32 %v1520, %v1520
    %v1525 = vmul.f32 %v1521, %v1521
    %v1526 = vmul.f32 %v1522, %v1522
    %v1527 = vsel %vm68, %v1523, 0.0
    %1528 = vadd.xlane.f32.xlu0 %v1527
    %v1529 = vpop.xlane.xlu0 %1528
    %v1530 = vsel %vm68, %v1524, 0.0
    %1531 = vadd.xlane.f32.xlu0 %v1530
    %v1532 = vpop.xlane.xlu0 %1531
    %v1533 = vsel %vm68, %v1525, 0.0
    %1534 = vadd.xlane.f32.xlu0 %v1533
    %v1535 = vpop.xlane.xlu0 %1534
    %v1536 = vsel %vm68, %v1526, 0.0
    %1537 = vadd.xlane.f32.xlu0 %v1536
    %v1538 = vpop.xlane.xlu0 %1537
    %v1539 = vmul.f32 %v1529, %v81
    %v1540 = vmul.f32 %v1532, %v81
    %v1541 = vmul.f32 %v1535, %v81
    %v1542 = vmul.f32 %v1538, %v81
    %v1543 = vadd.f32 %v1539, 1e-06
    %v1544 = vadd.f32 %v1540, 1e-06
    %v1545 = vadd.f32 %v1541, 1e-06
    %v1546 = vadd.f32 %v1542, 1e-06
    %v1547 = vrsqrt.pop %v1543
    %v1548 = vmul.f32 %v1547, %v1543
    %v1549 = vmul.f32 %v1548, %v1547
    %v1550 = vmul.f32 0.5, %v1549
    %v1551 = vsub.f32 1.5, %v1550
    %v1552 = vmul.f32 %v1547, %v1551
    %vm1553 = vweird.f32 %v1543
    %vm1554 = vweird.f32 %v1547
    %vm1555 = vmor %vm1553, %vm1554
    %v1556 = vsel %vm1555, %v1547, %v1552
    %v1557 = vrsqrt.pop %v1544
    %v1558 = vmul.f32 %v1557, %v1544
    %v1559 = vmul.f32 %v1558, %v1557
    %v1560 = vmul.f32 0.5, %v1559
    %v1561 = vsub.f32 1.5, %v1560
    %v1562 = vmul.f32 %v1557, %v1561
    %vm1563 = vweird.f32 %v1544
    %vm1564 = vweird.f32 %v1557
    %vm1565 = vmor %vm1563, %vm1564
    %v1566 = vsel %vm1565, %v1557, %v1562
    %v1567 = vrsqrt.pop %v1545
    %v1568 = vmul.f32 %v1567, %v1545
    %v1569 = vmul.f32 %v1568, %v1567
    %v1570 = vmul.f32 0.5, %v1569
    %v1571 = vsub.f32 1.5, %v1570
    %v1572 = vmul.f32 %v1567, %v1571
    %vm1573 = vweird.f32 %v1545
    %vm1574 = vweird.f32 %v1567
    %vm1575 = vmor %vm1573, %vm1574
    %v1576 = vsel %vm1575, %v1567, %v1572
    %v1577 = vrsqrt.pop %v1546
    %v1578 = vmul.f32 %v1577, %v1546
    %v1579 = vmul.f32 %v1578, %v1577
    %v1580 = vmul.f32 0.5, %v1579
    %v1581 = vsub.f32 1.5, %v1580
    %v1582 = vmul.f32 %v1577, %v1581
    %vm1583 = vweird.f32 %v1546
    %vm1584 = vweird.f32 %v1577
    %vm1585 = vmor %vm1583, %vm1584
    %v1586 = vsel %vm1585, %v1577, %v1582
    %v1587 = vmul.f32 %v1519, %v1556
    %v1588 = vmul.f32 %v1520, %v1566
    %v1589 = vmul.f32 %v1521, %v1576
    %v1590 = vmul.f32 %v1522, %v1586
    %v1591 = vperm.slane %v1481, 0
    %v1592 = vmul.f32 %v1587, %v1591
    %v1593 = vmul.f32 %v1588, %v1591
    %v1594 = vmul.f32 %v1589, %v1591
    %v1595 = vmul.f32 %v1590, %v1591
    %v1596 = vperm.slane %v1481, 1
    %v1597 = vadd.f32 %v1592, %v1596
    %v1598 = vadd.f32 %v1593, %v1596
    %v1599 = vadd.f32 %v1594, %v1596
    %v1600 = vadd.f32 %v1595, %v1596
    %v1601 = vperm.slane %v1481, 2
    %v1603 = vsel %vm68, %v1597, 0
    %v1606 = vsel %vm68, %v1598, 0
    %v1609 = vsel %vm68, %v1599, 0
    %v1612 = vsel %vm68, %v1600, 0
    %1614 = vmatpush.msra.mxu0 0.0
    %1615 = vmatpush.msra.mxu0 0.0
    %1616 = vmatpush.msra.mxu0 0.0
    %1617 = vmatpush.msra.mxu0 0.0
    %1618 = vmatpush.msra.mxu0 0.0
    %1619 = vmatpush.msra.mxu0 0.0
    %1620 = vmatpush.msra.mxu0 0.0
    %1621 = vmatpush.msra.mxu0 0.0
    %1622 = vmatpush.msra.mxu0 0.0
    %1623 = vmatpush.msra.mxu0 0.0
    %1624 = vmatpush.msra.mxu0 0.0
    %1625 = vmatpush.msra.mxu0 0.0
    %1626 = vmatpush.msra.mxu0 %v1476
    %1627 = vmatpush.msra.mxu0 %v1475
    %1628 = vmatpush.msra.mxu0 %v1474
    %1629 = vmatpush.msra.mxu0 %v1473
    %1630 = vmatmul.f32.gmra.mxu0 %v1603
    %v1631 = vpop.f32.mrf.mxu0
    %v1632 = vadd.f32 %v1601, %v1631
    %1633 = vmatmul.f32.gmra.mxu0 %v1606
    %v1634 = vpop.f32.mrf.mxu0
    %v1635 = vadd.f32 %v1601, %v1634
    %1636 = vmatmul.f32.gmra.mxu0 %v1609
    %v1637 = vpop.f32.mrf.mxu0
    %v1638 = vadd.f32 %v1601, %v1637
    %1639 = vmatmul.f32.gmra.mxu0 %v1612
    %v1640 = vpop.f32.mrf.mxu0
    %v1641 = vadd.f32 %v1601, %v1640
    %1642 = vdwg.mxu0
    %1645 = vrot.lane.b32.xlu0 %v1632, 96
    %v1646 = vpop.permute.xlu0 %1645
    %1647 = vrot.lane.b32.xlu0 %v1635, 96
    %v1648 = vpop.permute.xlu0 %1647
    %v1649 = vsel %vm371, %v1632, 0
    %v1651 = vsel %vm371, %v1635, 0
    %v1653 = vsel %vm371, %v1646, 0
    %v1655 = vsel %vm371, %v1648, 0
    %1657 = vmatpush.xpose.msra.mxu0 0.0
    %1658 = vmatpush.xpose.msra.mxu0 0.0
    %1659 = vmatpush.xpose.msra.mxu0 0.0
    %1660 = vmatpush.xpose.msra.mxu0 0.0
    %1661 = vmatpush.xpose.msra.mxu0 0.0
    %1662 = vmatpush.xpose.msra.mxu0 0.0
    %1663 = vmatpush.xpose.msra.mxu0 0.0
    %1664 = vmatpush.xpose.msra.mxu0 0.0
    %1665 = vmatpush.xpose.msra.mxu0 0.0
    %1666 = vmatpush.xpose.msra.mxu0 0.0
    %1667 = vmatpush.xpose.msra.mxu0 0.0
    %1668 = vmatpush.xpose.msra.mxu0 0.0
    %1669 = vmatpush.xpose.msra.mxu0 0.0
    %1670 = vmatpush.xpose.msra.mxu0 0.0
    %1671 = vmatpush.xpose.msra.mxu0 %v1655
    %1672 = vmatpush.xpose.msra.mxu0 %v1653
    %1673 = vmatmul.f32.gmra.mxu0 %v1649
    %v1674 = vpop.f32.mrf.mxu0
    %v1675 = vadd.f32 0.0, %v1674
    %1676 = vmatmul.f32.gmra.mxu0 %v1651
    %v1677 = vpop.f32.mrf.mxu0
    %v1678 = vadd.f32 0.0, %v1677
    %1679 = vdwg.mxu0
    %1680 = vrot.lane.b32.xlu0 %v1632, 120
    %v1681 = vpop.permute.xlu0 %1680
    %1682 = vrot.lane.b32.xlu0 %v1635, 120
    %v1683 = vpop.permute.xlu0 %1682
    %1684 = vrot.lane.b32.xlu0 %v1632, 88
    %v1685 = vpop.permute.xlu0 %1684
    %1686 = vrot.lane.b32.xlu0 %v1635, 88
    %v1687 = vpop.permute.xlu0 %1686
    %v1688 = vsel %vm371, %v1681, 0
    %v1690 = vsel %vm371, %v1683, 0
    %v1692 = vsel %vm371, %v1685, 0
    %v1694 = vsel %vm371, %v1687, 0
    %1696 = vmatpush.xpose.msra.mxu0 0.0
    %1697 = vmatpush.xpose.msra.mxu0 0.0
    %1698 = vmatpush.xpose.msra.mxu0 0.0
    %1699 = vmatpush.xpose.msra.mxu0 0.0
    %1700 = vmatpush.xpose.msra.mxu0 0.0
    %1701 = vmatpush.xpose.msra.mxu0 0.0
    %1702 = vmatpush.xpose.msra.mxu0 0.0
    %1703 = vmatpush.xpose.msra.mxu0 0.0
    %1704 = vmatpush.xpose.msra.mxu0 0.0
    %1705 = vmatpush.xpose.msra.mxu0 0.0
    %1706 = vmatpush.xpose.msra.mxu0 0.0
    %1707 = vmatpush.xpose.msra.mxu0 0.0
    %1708 = vmatpush.xpose.msra.mxu0 0.0
    %1709 = vmatpush.xpose.msra.mxu0 0.0
    %1710 = vmatpush.xpose.msra.mxu0 %v1694
    %1711 = vmatpush.xpose.msra.mxu0 %v1692
    %1712 = vmatmul.f32.gmra.mxu0 %v1688
    %v1713 = vpop.f32.mrf.mxu0
    %v1714 = vadd.f32 0.0, %v1713
    %1715 = vmatmul.f32.gmra.mxu0 %v1690
    %v1716 = vpop.f32.mrf.mxu0
    %v1717 = vadd.f32 0.0, %v1716
    %1718 = vdwg.mxu0
    %1719 = vrot.lane.b32.xlu0 %v1632, 112
    %v1720 = vpop.permute.xlu0 %1719
    %1721 = vrot.lane.b32.xlu0 %v1635, 112
    %v1722 = vpop.permute.xlu0 %1721
    %1723 = vrot.lane.b32.xlu0 %v1632, 80
    %v1724 = vpop.permute.xlu0 %1723
    %1725 = vrot.lane.b32.xlu0 %v1635, 80
    %v1726 = vpop.permute.xlu0 %1725
    %v1727 = vsel %vm371, %v1720, 0
    %v1729 = vsel %vm371, %v1722, 0
    %v1731 = vsel %vm371, %v1724, 0
    %v1733 = vsel %vm371, %v1726, 0
    %1735 = vmatpush.xpose.msra.mxu0 0.0
    %1736 = vmatpush.xpose.msra.mxu0 0.0
    %1737 = vmatpush.xpose.msra.mxu0 0.0
    %1738 = vmatpush.xpose.msra.mxu0 0.0
    %1739 = vmatpush.xpose.msra.mxu0 0.0
    %1740 = vmatpush.xpose.msra.mxu0 0.0
    %1741 = vmatpush.xpose.msra.mxu0 0.0
    %1742 = vmatpush.xpose.msra.mxu0 0.0
    %1743 = vmatpush.xpose.msra.mxu0 0.0
    %1744 = vmatpush.xpose.msra.mxu0 0.0
    %1745 = vmatpush.xpose.msra.mxu0 0.0
    %1746 = vmatpush.xpose.msra.mxu0 0.0
    %1747 = vmatpush.xpose.msra.mxu0 0.0
    %1748 = vmatpush.xpose.msra.mxu0 0.0
    %1749 = vmatpush.xpose.msra.mxu0 %v1733
    %1750 = vmatpush.xpose.msra.mxu0 %v1731
    %1751 = vmatmul.f32.gmra.mxu0 %v1727
    %v1752 = vpop.f32.mrf.mxu0
    %v1753 = vadd.f32 0.0, %v1752
    %1754 = vmatmul.f32.gmra.mxu0 %v1729
    %v1755 = vpop.f32.mrf.mxu0
    %v1756 = vadd.f32 0.0, %v1755
    %1757 = vdwg.mxu0
    %1758 = vrot.lane.b32.xlu0 %v1632, 104
    %v1759 = vpop.permute.xlu0 %1758
    %1760 = vrot.lane.b32.xlu0 %v1635, 104
    %v1761 = vpop.permute.xlu0 %1760
    %1762 = vrot.lane.b32.xlu0 %v1632, 72
    %v1763 = vpop.permute.xlu0 %1762
    %1764 = vrot.lane.b32.xlu0 %v1635, 72
    %v1765 = vpop.permute.xlu0 %1764
    %v1766 = vsel %vm371, %v1759, 0
    %v1768 = vsel %vm371, %v1761, 0
    %v1770 = vsel %vm371, %v1763, 0
    %v1772 = vsel %vm371, %v1765, 0
    %1774 = vmatpush.xpose.msra.mxu0 0.0
    %1775 = vmatpush.xpose.msra.mxu0 0.0
    %1776 = vmatpush.xpose.msra.mxu0 0.0
    %1777 = vmatpush.xpose.msra.mxu0 0.0
    %1778 = vmatpush.xpose.msra.mxu0 0.0
    %1779 = vmatpush.xpose.msra.mxu0 0.0
    %1780 = vmatpush.xpose.msra.mxu0 0.0
    %1781 = vmatpush.xpose.msra.mxu0 0.0
    %1782 = vmatpush.xpose.msra.mxu0 0.0
    %1783 = vmatpush.xpose.msra.mxu0 0.0
    %1784 = vmatpush.xpose.msra.mxu0 0.0
    %1785 = vmatpush.xpose.msra.mxu0 0.0
    %1786 = vmatpush.xpose.msra.mxu0 0.0
    %1787 = vmatpush.xpose.msra.mxu0 0.0
    %1788 = vmatpush.xpose.msra.mxu0 %v1772
    %1789 = vmatpush.xpose.msra.mxu0 %v1770
    %1790 = vmatmul.f32.gmra.mxu0 %v1766
    %v1791 = vpop.f32.mrf.mxu0
    %v1792 = vadd.f32 0.0, %v1791
    %1793 = vmatmul.f32.gmra.mxu0 %v1768
    %v1794 = vpop.f32.mrf.mxu0
    %v1795 = vadd.f32 0.0, %v1794
    %1796 = vdwg.mxu0
    %1799 = vrot.lane.b32.xlu0 %v1638, 96
    %v1800 = vpop.permute.xlu0 %1799
    %1801 = vrot.lane.b32.xlu0 %v1641, 96
    %v1802 = vpop.permute.xlu0 %1801
    %v1803 = vsel %vm371, %v1638, 0
    %v1805 = vsel %vm371, %v1641, 0
    %v1807 = vsel %vm371, %v1800, 0
    %v1809 = vsel %vm371, %v1802, 0
    %1811 = vmatpush.xpose.msra.mxu0 0.0
    %1812 = vmatpush.xpose.msra.mxu0 0.0
    %1813 = vmatpush.xpose.msra.mxu0 0.0
    %1814 = vmatpush.xpose.msra.mxu0 0.0
    %1815 = vmatpush.xpose.msra.mxu0 0.0
    %1816 = vmatpush.xpose.msra.mxu0 0.0
    %1817 = vmatpush.xpose.msra.mxu0 0.0
    %1818 = vmatpush.xpose.msra.mxu0 0.0
    %1819 = vmatpush.xpose.msra.mxu0 0.0
    %1820 = vmatpush.xpose.msra.mxu0 0.0
    %1821 = vmatpush.xpose.msra.mxu0 0.0
    %1822 = vmatpush.xpose.msra.mxu0 0.0
    %1823 = vmatpush.xpose.msra.mxu0 0.0
    %1824 = vmatpush.xpose.msra.mxu0 0.0
    %1825 = vmatpush.xpose.msra.mxu0 %v1809
    %1826 = vmatpush.xpose.msra.mxu0 %v1807
    %1827 = vmatmul.f32.gmra.mxu0 %v1803
    %v1828 = vpop.f32.mrf.mxu0
    %v1829 = vadd.f32 0.0, %v1828
    %1830 = vmatmul.f32.gmra.mxu0 %v1805
    %v1831 = vpop.f32.mrf.mxu0
    %v1832 = vadd.f32 0.0, %v1831
    %1833 = vdwg.mxu0
    %1834 = vrot.lane.b32.xlu0 %v1638, 120
    %v1835 = vpop.permute.xlu0 %1834
    %1836 = vrot.lane.b32.xlu0 %v1641, 120
    %v1837 = vpop.permute.xlu0 %1836
    %1838 = vrot.lane.b32.xlu0 %v1638, 88
    %v1839 = vpop.permute.xlu0 %1838
    %1840 = vrot.lane.b32.xlu0 %v1641, 88
    %v1841 = vpop.permute.xlu0 %1840
    %v1842 = vsel %vm371, %v1835, 0
    %v1844 = vsel %vm371, %v1837, 0
    %v1846 = vsel %vm371, %v1839, 0
    %v1848 = vsel %vm371, %v1841, 0
    %1850 = vmatpush.xpose.msra.mxu0 0.0
    %1851 = vmatpush.xpose.msra.mxu0 0.0
    %1852 = vmatpush.xpose.msra.mxu0 0.0
    %1853 = vmatpush.xpose.msra.mxu0 0.0
    %1854 = vmatpush.xpose.msra.mxu0 0.0
    %1855 = vmatpush.xpose.msra.mxu0 0.0
    %1856 = vmatpush.xpose.msra.mxu0 0.0
    %1857 = vmatpush.xpose.msra.mxu0 0.0
    %1858 = vmatpush.xpose.msra.mxu0 0.0
    %1859 = vmatpush.xpose.msra.mxu0 0.0
    %1860 = vmatpush.xpose.msra.mxu0 0.0
    %1861 = vmatpush.xpose.msra.mxu0 0.0
    %1862 = vmatpush.xpose.msra.mxu0 0.0
    %1863 = vmatpush.xpose.msra.mxu0 0.0
    %1864 = vmatpush.xpose.msra.mxu0 %v1848
    %1865 = vmatpush.xpose.msra.mxu0 %v1846
    %1866 = vmatmul.f32.gmra.mxu0 %v1842
    %v1867 = vpop.f32.mrf.mxu0
    %v1868 = vadd.f32 0.0, %v1867
    %1869 = vmatmul.f32.gmra.mxu0 %v1844
    %v1870 = vpop.f32.mrf.mxu0
    %v1871 = vadd.f32 0.0, %v1870
    %1872 = vdwg.mxu0
    %1873 = vrot.lane.b32.xlu0 %v1638, 112
    %v1874 = vpop.permute.xlu0 %1873
    %1875 = vrot.lane.b32.xlu0 %v1641, 112
    %v1876 = vpop.permute.xlu0 %1875
    %1877 = vrot.lane.b32.xlu0 %v1638, 80
    %v1878 = vpop.permute.xlu0 %1877
    %1879 = vrot.lane.b32.xlu0 %v1641, 80
    %v1880 = vpop.permute.xlu0 %1879
    %v1881 = vsel %vm371, %v1874, 0
    %v1883 = vsel %vm371, %v1876, 0
    %v1885 = vsel %vm371, %v1878, 0
    %v1887 = vsel %vm371, %v1880, 0
    %1889 = vmatpush.xpose.msra.mxu0 0.0
    %1890 = vmatpush.xpose.msra.mxu0 0.0
    %1891 = vmatpush.xpose.msra.mxu0 0.0
    %1892 = vmatpush.xpose.msra.mxu0 0.0
    %1893 = vmatpush.xpose.msra.mxu0 0.0
    %1894 = vmatpush.xpose.msra.mxu0 0.0
    %1895 = vmatpush.xpose.msra.mxu0 0.0
    %1896 = vmatpush.xpose.msra.mxu0 0.0
    %1897 = vmatpush.xpose.msra.mxu0 0.0
    %1898 = vmatpush.xpose.msra.mxu0 0.0
    %1899 = vmatpush.xpose.msra.mxu0 0.0
    %1900 = vmatpush.xpose.msra.mxu0 0.0
    %1901 = vmatpush.xpose.msra.mxu0 0.0
    %1902 = vmatpush.xpose.msra.mxu0 0.0
    %1903 = vmatpush.xpose.msra.mxu0 %v1887
    %1904 = vmatpush.xpose.msra.mxu0 %v1885
    %1905 = vmatmul.f32.gmra.mxu0 %v1881
    %v1906 = vpop.f32.mrf.mxu0
    %v1907 = vadd.f32 0.0, %v1906
    %1908 = vmatmul.f32.gmra.mxu0 %v1883
    %v1909 = vpop.f32.mrf.mxu0
    %v1910 = vadd.f32 0.0, %v1909
    %1911 = vdwg.mxu0
    %1912 = vrot.lane.b32.xlu0 %v1638, 104
    %v1913 = vpop.permute.xlu0 %1912
    %1914 = vrot.lane.b32.xlu0 %v1641, 104
    %v1915 = vpop.permute.xlu0 %1914
    %1916 = vrot.lane.b32.xlu0 %v1638, 72
    %v1917 = vpop.permute.xlu0 %1916
    %1918 = vrot.lane.b32.xlu0 %v1641, 72
    %v1919 = vpop.permute.xlu0 %1918
    %v1920 = vsel %vm371, %v1913, 0
    %v1922 = vsel %vm371, %v1915, 0
    %v1924 = vsel %vm371, %v1917, 0
    %v1926 = vsel %vm371, %v1919, 0
    %1928 = vmatpush.xpose.msra.mxu0 0.0
    %1929 = vmatpush.xpose.msra.mxu0 0.0
    %1930 = vmatpush.xpose.msra.mxu0 0.0
    %1931 = vmatpush.xpose.msra.mxu0 0.0
    %1932 = vmatpush.xpose.msra.mxu0 0.0
    %1933 = vmatpush.xpose.msra.mxu0 0.0
    %1934 = vmatpush.xpose.msra.mxu0 0.0
    %1935 = vmatpush.xpose.msra.mxu0 0.0
    %1936 = vmatpush.xpose.msra.mxu0 0.0
    %1937 = vmatpush.xpose.msra.mxu0 0.0
    %1938 = vmatpush.xpose.msra.mxu0 0.0
    %1939 = vmatpush.xpose.msra.mxu0 0.0
    %1940 = vmatpush.xpose.msra.mxu0 0.0
    %1941 = vmatpush.xpose.msra.mxu0 0.0
    %1942 = vmatpush.xpose.msra.mxu0 %v1926
    %1943 = vmatpush.xpose.msra.mxu0 %v1924
    %1944 = vmatmul.f32.gmra.mxu0 %v1920
    %v1945 = vpop.f32.mrf.mxu0
    %v1946 = vadd.f32 0.0, %v1945
    %1947 = vmatmul.f32.gmra.mxu0 %v1922
    %v1948 = vpop.f32.mrf.mxu0
    %v1949 = vadd.f32 0.0, %v1948
    %1950 = vdwg.mxu0
    %v1951 = vadd.f32 %v1675, %v180
    %v1952 = vadd.f32 %v1678, %v181
    %v1953 = vadd.f32 %v1714, %v182
    %v1954 = vadd.f32 %v1717, %v183
    %v1955 = vadd.f32 %v1753, %v184
    %v1956 = vadd.f32 %v1756, %v185
    %v1957 = vadd.f32 %v1792, %v186
    %v1958 = vadd.f32 %v1795, %v187
    %v1959 = vadd.f32 %v1829, %v188
    %v1960 = vadd.f32 %v1832, %v189
    %v1961 = vadd.f32 %v1868, %v190
    %v1962 = vadd.f32 %v1871, %v191
    %v1963 = vadd.f32 %v1907, %v192
    %v1964 = vadd.f32 %v1910, %v193
    %v1965 = vadd.f32 %v1946, %v194
    %v1966 = vadd.f32 %v1949, %v195
    %v1967 = vsel %vm690, %v1951, -inf
    %1968 = vmax.xlane.f32.xlu0 %v1967
    %v1969 = vpop.xlane.xlu0 %1968
    %v1970 = vsel %vm690, %v1952, -inf
    %1971 = vmax.xlane.f32.xlu0 %v1970
    %v1972 = vpop.xlane.xlu0 %1971
    %v1973 = vsel %vm690, %v1953, -inf
    %1974 = vmax.xlane.f32.xlu0 %v1973
    %v1975 = vpop.xlane.xlu0 %1974
    %v1976 = vsel %vm690, %v1954, -inf
    %1977 = vmax.xlane.f32.xlu0 %v1976
    %v1978 = vpop.xlane.xlu0 %1977
    %v1979 = vsel %vm690, %v1955, -inf
    %1980 = vmax.xlane.f32.xlu0 %v1979
    %v1981 = vpop.xlane.xlu0 %1980
    %v1982 = vsel %vm690, %v1956, -inf
    %1983 = vmax.xlane.f32.xlu0 %v1982
    %v1984 = vpop.xlane.xlu0 %1983
    %v1985 = vsel %vm690, %v1957, -inf
    %1986 = vmax.xlane.f32.xlu0 %v1985
    %v1987 = vpop.xlane.xlu0 %1986
    %v1988 = vsel %vm690, %v1958, -inf
    %1989 = vmax.xlane.f32.xlu0 %v1988
    %v1990 = vpop.xlane.xlu0 %1989
    %v1991 = vsel %vm690, %v1959, -inf
    %1992 = vmax.xlane.f32.xlu0 %v1991
    %v1993 = vpop.xlane.xlu0 %1992
    %v1994 = vsel %vm690, %v1960, -inf
    %1995 = vmax.xlane.f32.xlu0 %v1994
    %v1996 = vpop.xlane.xlu0 %1995
    %v1997 = vsel %vm690, %v1961, -inf
    %1998 = vmax.xlane.f32.xlu0 %v1997
    %v1999 = vpop.xlane.xlu0 %1998
    %v2000 = vsel %vm690, %v1962, -inf
    %2001 = vmax.xlane.f32.xlu0 %v2000
    %v2002 = vpop.xlane.xlu0 %2001
    %v2003 = vsel %vm690, %v1963, -inf
    %2004 = vmax.xlane.f32.xlu0 %v2003
    %v2005 = vpop.xlane.xlu0 %2004
    %v2006 = vsel %vm690, %v1964, -inf
    %2007 = vmax.xlane.f32.xlu0 %v2006
    %v2008 = vpop.xlane.xlu0 %2007
    %v2009 = vsel %vm690, %v1965, -inf
    %2010 = vmax.xlane.f32.xlu0 %v2009
    %v2011 = vpop.xlane.xlu0 %2010
    %v2012 = vsel %vm690, %v1966, -inf
    %2013 = vmax.xlane.f32.xlu0 %v2012
    %v2014 = vpop.xlane.xlu0 %2013
    %v2015 = vsub.f32 %v1951, %v1969
    %v2016 = vsub.f32 %v1952, %v1972
    %v2017 = vsub.f32 %v1953, %v1975
    %v2018 = vsub.f32 %v1954, %v1978
    %v2019 = vsub.f32 %v1955, %v1981
    %v2020 = vsub.f32 %v1956, %v1984
    %v2021 = vsub.f32 %v1957, %v1987
    %v2022 = vsub.f32 %v1958, %v1990
    %v2023 = vsub.f32 %v1959, %v1993
    %v2024 = vsub.f32 %v1960, %v1996
    %v2025 = vsub.f32 %v1961, %v1999
    %v2026 = vsub.f32 %v1962, %v2002
    %v2027 = vsub.f32 %v1963, %v2005
    %v2028 = vsub.f32 %v1964, %v2008
    %v2029 = vsub.f32 %v1965, %v2011
    %v2030 = vsub.f32 %v1966, %v2014
    %v2031 = vmul.f32 %v2015, 1.442695
    %v2032 = vpow.pop %v2031
    %v2033 = vmul.f32 %v2016, 1.442695
    %v2034 = vpow.pop %v2033
    %v2035 = vmul.f32 %v2017, 1.442695
    %v2036 = vpow.pop %v2035
    %v2037 = vmul.f32 %v2018, 1.442695
    %v2038 = vpow.pop %v2037
    %v2039 = vmul.f32 %v2019, 1.442695
    %v2040 = vpow.pop %v2039
    %v2041 = vmul.f32 %v2020, 1.442695
    %v2042 = vpow.pop %v2041
    %v2043 = vmul.f32 %v2021, 1.442695
    %v2044 = vpow.pop %v2043
    %v2045 = vmul.f32 %v2022, 1.442695
    %v2046 = vpow.pop %v2045
    %v2047 = vmul.f32 %v2023, 1.442695
    %v2048 = vpow.pop %v2047
    %v2049 = vmul.f32 %v2024, 1.442695
    %v2050 = vpow.pop %v2049
    %v2051 = vmul.f32 %v2025, 1.442695
    %v2052 = vpow.pop %v2051
    %v2053 = vmul.f32 %v2026, 1.442695
    %v2054 = vpow.pop %v2053
    %v2055 = vmul.f32 %v2027, 1.442695
    %v2056 = vpow.pop %v2055
    %v2057 = vmul.f32 %v2028, 1.442695
    %v2058 = vpow.pop %v2057
    %v2059 = vmul.f32 %v2029, 1.442695
    %v2060 = vpow.pop %v2059
    %v2061 = vmul.f32 %v2030, 1.442695
    %v2062 = vpow.pop %v2061
    %v2063 = vsel %vm690, %v2032, 0.0
    %2064 = vadd.xlane.f32.xlu0 %v2063
    %v2065 = vpop.xlane.xlu0 %2064
    %v2066 = vsel %vm690, %v2034, 0.0
    %2067 = vadd.xlane.f32.xlu0 %v2066
    %v2068 = vpop.xlane.xlu0 %2067
    %v2069 = vsel %vm690, %v2036, 0.0
    %2070 = vadd.xlane.f32.xlu0 %v2069
    %v2071 = vpop.xlane.xlu0 %2070
    %v2072 = vsel %vm690, %v2038, 0.0
    %2073 = vadd.xlane.f32.xlu0 %v2072
    %v2074 = vpop.xlane.xlu0 %2073
    %v2075 = vsel %vm690, %v2040, 0.0
    %2076 = vadd.xlane.f32.xlu0 %v2075
    %v2077 = vpop.xlane.xlu0 %2076
    %v2078 = vsel %vm690, %v2042, 0.0
    %2079 = vadd.xlane.f32.xlu0 %v2078
    %v2080 = vpop.xlane.xlu0 %2079
    %v2081 = vsel %vm690, %v2044, 0.0
    %2082 = vadd.xlane.f32.xlu0 %v2081
    %v2083 = vpop.xlane.xlu0 %2082
    %v2084 = vsel %vm690, %v2046, 0.0
    %2085 = vadd.xlane.f32.xlu0 %v2084
    %v2086 = vpop.xlane.xlu0 %2085
    %v2087 = vsel %vm690, %v2048, 0.0
    %2088 = vadd.xlane.f32.xlu0 %v2087
    %v2089 = vpop.xlane.xlu0 %2088
    %v2090 = vsel %vm690, %v2050, 0.0
    %2091 = vadd.xlane.f32.xlu0 %v2090
    %v2092 = vpop.xlane.xlu0 %2091
    %v2093 = vsel %vm690, %v2052, 0.0
    %2094 = vadd.xlane.f32.xlu0 %v2093
    %v2095 = vpop.xlane.xlu0 %2094
    %v2096 = vsel %vm690, %v2054, 0.0
    %2097 = vadd.xlane.f32.xlu0 %v2096
    %v2098 = vpop.xlane.xlu0 %2097
    %v2099 = vsel %vm690, %v2056, 0.0
    %2100 = vadd.xlane.f32.xlu0 %v2099
    %v2101 = vpop.xlane.xlu0 %2100
    %v2102 = vsel %vm690, %v2058, 0.0
    %2103 = vadd.xlane.f32.xlu0 %v2102
    %v2104 = vpop.xlane.xlu0 %2103
    %v2105 = vsel %vm690, %v2060, 0.0
    %2106 = vadd.xlane.f32.xlu0 %v2105
    %v2107 = vpop.xlane.xlu0 %2106
    %v2108 = vsel %vm690, %v2062, 0.0
    %2109 = vadd.xlane.f32.xlu0 %v2108
    %v2110 = vpop.xlane.xlu0 %2109
    %v2111 = vrcp.pop %v2065
    %v2112 = vrcp.pop %v2068
    %v2113 = vrcp.pop %v2071
    %v2114 = vrcp.pop %v2074
    %v2115 = vrcp.pop %v2077
    %v2116 = vrcp.pop %v2080
    %v2117 = vrcp.pop %v2083
    %v2118 = vrcp.pop %v2086
    %v2119 = vrcp.pop %v2089
    %v2120 = vrcp.pop %v2092
    %v2121 = vrcp.pop %v2095
    %v2122 = vrcp.pop %v2098
    %v2123 = vrcp.pop %v2101
    %v2124 = vrcp.pop %v2104
    %v2125 = vrcp.pop %v2107
    %v2126 = vrcp.pop %v2110
    %v2127 = vmul.f32 %v2032, %v2111
    %v2128 = vmul.f32 %v2034, %v2112
    %v2129 = vmul.f32 %v2036, %v2113
    %v2130 = vmul.f32 %v2038, %v2114
    %v2131 = vmul.f32 %v2040, %v2115
    %v2132 = vmul.f32 %v2042, %v2116
    %v2133 = vmul.f32 %v2044, %v2117
    %v2134 = vmul.f32 %v2046, %v2118
    %v2135 = vmul.f32 %v2048, %v2119
    %v2136 = vmul.f32 %v2050, %v2120
    %v2137 = vmul.f32 %v2052, %v2121
    %v2138 = vmul.f32 %v2054, %v2122
    %v2139 = vmul.f32 %v2056, %v2123
    %v2140 = vmul.f32 %v2058, %v2124
    %v2141 = vmul.f32 %v2060, %v2125
    %v2142 = vmul.f32 %v2062, %v2126
    %2143 = vrot.lane.b32.xlu0 %v1632, 64
    %v2144 = vpop.permute.xlu0 %2143
    %2145 = vrot.lane.b32.xlu0 %v1635, 64
    %v2146 = vpop.permute.xlu0 %2145
    %v2150 = vsel %vm690, %v2127, 0
    %v2153 = vsel %vm690, %v2128, 0
    %2155 = vmatpush.msra.mxu0 0.0
    %2156 = vmatpush.msra.mxu0 0.0
    %2157 = vmatpush.msra.mxu0 0.0
    %2158 = vmatpush.msra.mxu0 0.0
    %2159 = vmatpush.msra.mxu0 0.0
    %2160 = vmatpush.msra.mxu0 0.0
    %2161 = vmatpush.msra.mxu0 0.0
    %2162 = vmatpush.msra.mxu0 0.0
    %2163 = vmatpush.msra.mxu0 0.0
    %2164 = vmatpush.msra.mxu0 0.0
    %2165 = vmatpush.msra.mxu0 0.0
    %2166 = vmatpush.msra.mxu0 0.0
    %2167 = vmatpush.msra.mxu0 0.0
    %2168 = vmatpush.msra.mxu0 0.0
    %2169 = vmatpush.msra.mxu0 %v2146
    %2170 = vmatpush.msra.mxu0 %v2144
    %2171 = vmatmul.f32.gmra.mxu0 %v2150
    %v2172 = vpop.f32.mrf.mxu0
    %v2173 = vadd.f32 0.0, %v2172
    %2174 = vmatmul.f32.gmra.mxu0 %v2153
    %v2175 = vpop.f32.mrf.mxu0
    %v2176 = vadd.f32 0.0, %v2175
    %2177 = vdwg.mxu0
    %2178 = vrot.lane.b32.xlu0 %v1632, 56
    %v2179 = vpop.permute.xlu0 %2178
    %2180 = vrot.lane.b32.xlu0 %v1635, 56
    %v2181 = vpop.permute.xlu0 %2180
    %v2185 = vsel %vm690, %v2129, 0
    %v2188 = vsel %vm690, %v2130, 0
    %2190 = vmatpush.msra.mxu0 0.0
    %2191 = vmatpush.msra.mxu0 0.0
    %2192 = vmatpush.msra.mxu0 0.0
    %2193 = vmatpush.msra.mxu0 0.0
    %2194 = vmatpush.msra.mxu0 0.0
    %2195 = vmatpush.msra.mxu0 0.0
    %2196 = vmatpush.msra.mxu0 0.0
    %2197 = vmatpush.msra.mxu0 0.0
    %2198 = vmatpush.msra.mxu0 0.0
    %2199 = vmatpush.msra.mxu0 0.0
    %2200 = vmatpush.msra.mxu0 0.0
    %2201 = vmatpush.msra.mxu0 0.0
    %2202 = vmatpush.msra.mxu0 0.0
    %2203 = vmatpush.msra.mxu0 0.0
    %2204 = vmatpush.msra.mxu0 %v2181
    %2205 = vmatpush.msra.mxu0 %v2179
    %2206 = vmatmul.f32.gmra.mxu0 %v2185
    %v2207 = vpop.f32.mrf.mxu0
    %v2208 = vadd.f32 0.0, %v2207
    %2209 = vmatmul.f32.gmra.mxu0 %v2188
    %v2210 = vpop.f32.mrf.mxu0
    %v2211 = vadd.f32 0.0, %v2210
    %2212 = vdwg.mxu0
    %2213 = vrot.lane.b32.xlu0 %v1632, 48
    %v2214 = vpop.permute.xlu0 %2213
    %2215 = vrot.lane.b32.xlu0 %v1635, 48
    %v2216 = vpop.permute.xlu0 %2215
    %v2220 = vsel %vm690, %v2131, 0
    %v2223 = vsel %vm690, %v2132, 0
    %2225 = vmatpush.msra.mxu0 0.0
    %2226 = vmatpush.msra.mxu0 0.0
    %2227 = vmatpush.msra.mxu0 0.0
    %2228 = vmatpush.msra.mxu0 0.0
    %2229 = vmatpush.msra.mxu0 0.0
    %2230 = vmatpush.msra.mxu0 0.0
    %2231 = vmatpush.msra.mxu0 0.0
    %2232 = vmatpush.msra.mxu0 0.0
    %2233 = vmatpush.msra.mxu0 0.0
    %2234 = vmatpush.msra.mxu0 0.0
    %2235 = vmatpush.msra.mxu0 0.0
    %2236 = vmatpush.msra.mxu0 0.0
    %2237 = vmatpush.msra.mxu0 0.0
    %2238 = vmatpush.msra.mxu0 0.0
    %2239 = vmatpush.msra.mxu0 %v2216
    %2240 = vmatpush.msra.mxu0 %v2214
    %2241 = vmatmul.f32.gmra.mxu0 %v2220
    %v2242 = vpop.f32.mrf.mxu0
    %v2243 = vadd.f32 0.0, %v2242
    %2244 = vmatmul.f32.gmra.mxu0 %v2223
    %v2245 = vpop.f32.mrf.mxu0
    %v2246 = vadd.f32 0.0, %v2245
    %2247 = vdwg.mxu0
    %2248 = vrot.lane.b32.xlu0 %v1632, 40
    %v2249 = vpop.permute.xlu0 %2248
    %2250 = vrot.lane.b32.xlu0 %v1635, 40
    %v2251 = vpop.permute.xlu0 %2250
    %v2255 = vsel %vm690, %v2133, 0
    %v2258 = vsel %vm690, %v2134, 0
    %2260 = vmatpush.msra.mxu0 0.0
    %2261 = vmatpush.msra.mxu0 0.0
    %2262 = vmatpush.msra.mxu0 0.0
    %2263 = vmatpush.msra.mxu0 0.0
    %2264 = vmatpush.msra.mxu0 0.0
    %2265 = vmatpush.msra.mxu0 0.0
    %2266 = vmatpush.msra.mxu0 0.0
    %2267 = vmatpush.msra.mxu0 0.0
    %2268 = vmatpush.msra.mxu0 0.0
    %2269 = vmatpush.msra.mxu0 0.0
    %2270 = vmatpush.msra.mxu0 0.0
    %2271 = vmatpush.msra.mxu0 0.0
    %2272 = vmatpush.msra.mxu0 0.0
    %2273 = vmatpush.msra.mxu0 0.0
    %2274 = vmatpush.msra.mxu0 %v2251
    %2275 = vmatpush.msra.mxu0 %v2249
    %2276 = vmatmul.f32.gmra.mxu0 %v2255
    %v2277 = vpop.f32.mrf.mxu0
    %v2278 = vadd.f32 0.0, %v2277
    %2279 = vmatmul.f32.gmra.mxu0 %v2258
    %v2280 = vpop.f32.mrf.mxu0
    %v2281 = vadd.f32 0.0, %v2280
    %2282 = vdwg.mxu0
    %2285 = vrot.lane.b32.xlu0 %v2208, 8
    %v2286 = vpop.permute.xlu0 %2285
    %2287 = vrot.lane.b32.xlu0 %v2211, 8
    %v2288 = vpop.permute.xlu0 %2287
    %2293 = vrot.lane.b32.xlu0 %v2243, 16
    %v2294 = vpop.permute.xlu0 %2293
    %2295 = vrot.lane.b32.xlu0 %v2246, 16
    %v2296 = vpop.permute.xlu0 %2295
    %2301 = vrot.lane.b32.xlu0 %v2278, 24
    %v2302 = vpop.permute.xlu0 %2301
    %2303 = vrot.lane.b32.xlu0 %v2281, 24
    %v2304 = vpop.permute.xlu0 %2303
    %v2307 = vsel %vm371, %v2173, %v2286
    %v2308 = vsel %vm371, %v2176, %v2288
    %v2309 = vsel %vm690, %v2307, %v2294
    %v2310 = vsel %vm690, %v2308, %v2296
    %v2311 = vsel %vm1035, %v2309, %v2302
    %v2312 = vsel %vm1035, %v2310, %v2304
    %2313 = vrot.lane.b32.xlu0 %v1638, 64
    %v2314 = vpop.permute.xlu0 %2313
    %2315 = vrot.lane.b32.xlu0 %v1641, 64
    %v2316 = vpop.permute.xlu0 %2315
    %v2320 = vsel %vm690, %v2135, 0
    %v2323 = vsel %vm690, %v2136, 0
    %2325 = vmatpush.msra.mxu0 0.0
    %2326 = vmatpush.msra.mxu0 0.0
    %2327 = vmatpush.msra.mxu0 0.0
    %2328 = vmatpush.msra.mxu0 0.0
    %2329 = vmatpush.msra.mxu0 0.0
    %2330 = vmatpush.msra.mxu0 0.0
    %2331 = vmatpush.msra.mxu0 0.0
    %2332 = vmatpush.msra.mxu0 0.0
    %2333 = vmatpush.msra.mxu0 0.0
    %2334 = vmatpush.msra.mxu0 0.0
    %2335 = vmatpush.msra.mxu0 0.0
    %2336 = vmatpush.msra.mxu0 0.0
    %2337 = vmatpush.msra.mxu0 0.0
    %2338 = vmatpush.msra.mxu0 0.0
    %2339 = vmatpush.msra.mxu0 %v2316
    %2340 = vmatpush.msra.mxu0 %v2314
    %2341 = vmatmul.f32.gmra.mxu0 %v2320
    %v2342 = vpop.f32.mrf.mxu0
    %v2343 = vadd.f32 0.0, %v2342
    %2344 = vmatmul.f32.gmra.mxu0 %v2323
    %v2345 = vpop.f32.mrf.mxu0
    %v2346 = vadd.f32 0.0, %v2345
    %2347 = vdwg.mxu0
    %2348 = vrot.lane.b32.xlu0 %v1638, 56
    %v2349 = vpop.permute.xlu0 %2348
    %2350 = vrot.lane.b32.xlu0 %v1641, 56
    %v2351 = vpop.permute.xlu0 %2350
    %v2355 = vsel %vm690, %v2137, 0
    %v2358 = vsel %vm690, %v2138, 0
    %2360 = vmatpush.msra.mxu0 0.0
    %2361 = vmatpush.msra.mxu0 0.0
    %2362 = vmatpush.msra.mxu0 0.0
    %2363 = vmatpush.msra.mxu0 0.0
    %2364 = vmatpush.msra.mxu0 0.0
    %2365 = vmatpush.msra.mxu0 0.0
    %2366 = vmatpush.msra.mxu0 0.0
    %2367 = vmatpush.msra.mxu0 0.0
    %2368 = vmatpush.msra.mxu0 0.0
    %2369 = vmatpush.msra.mxu0 0.0
    %2370 = vmatpush.msra.mxu0 0.0
    %2371 = vmatpush.msra.mxu0 0.0
    %2372 = vmatpush.msra.mxu0 0.0
    %2373 = vmatpush.msra.mxu0 0.0
    %2374 = vmatpush.msra.mxu0 %v2351
    %2375 = vmatpush.msra.mxu0 %v2349
    %2376 = vmatmul.f32.gmra.mxu0 %v2355
    %v2377 = vpop.f32.mrf.mxu0
    %v2378 = vadd.f32 0.0, %v2377
    %2379 = vmatmul.f32.gmra.mxu0 %v2358
    %v2380 = vpop.f32.mrf.mxu0
    %v2381 = vadd.f32 0.0, %v2380
    %2382 = vdwg.mxu0
    %2383 = vrot.lane.b32.xlu0 %v1638, 48
    %v2384 = vpop.permute.xlu0 %2383
    %2385 = vrot.lane.b32.xlu0 %v1641, 48
    %v2386 = vpop.permute.xlu0 %2385
    %v2390 = vsel %vm690, %v2139, 0
    %v2393 = vsel %vm690, %v2140, 0
    %2395 = vmatpush.msra.mxu0 0.0
    %2396 = vmatpush.msra.mxu0 0.0
    %2397 = vmatpush.msra.mxu0 0.0
    %2398 = vmatpush.msra.mxu0 0.0
    %2399 = vmatpush.msra.mxu0 0.0
    %2400 = vmatpush.msra.mxu0 0.0
    %2401 = vmatpush.msra.mxu0 0.0
    %2402 = vmatpush.msra.mxu0 0.0
    %2403 = vmatpush.msra.mxu0 0.0
    %2404 = vmatpush.msra.mxu0 0.0
    %2405 = vmatpush.msra.mxu0 0.0
    %2406 = vmatpush.msra.mxu0 0.0
    %2407 = vmatpush.msra.mxu0 0.0
    %2408 = vmatpush.msra.mxu0 0.0
    %2409 = vmatpush.msra.mxu0 %v2386
    %2410 = vmatpush.msra.mxu0 %v2384
    %2411 = vmatmul.f32.gmra.mxu0 %v2390
    %v2412 = vpop.f32.mrf.mxu0
    %v2413 = vadd.f32 0.0, %v2412
    %2414 = vmatmul.f32.gmra.mxu0 %v2393
    %v2415 = vpop.f32.mrf.mxu0
    %v2416 = vadd.f32 0.0, %v2415
    %2417 = vdwg.mxu0
    %2418 = vrot.lane.b32.xlu0 %v1638, 40
    %v2419 = vpop.permute.xlu0 %2418
    %2420 = vrot.lane.b32.xlu0 %v1641, 40
    %v2421 = vpop.permute.xlu0 %2420
    %v2425 = vsel %vm690, %v2141, 0
    %v2428 = vsel %vm690, %v2142, 0
    %2430 = vmatpush.msra.mxu0 0.0
    %2431 = vmatpush.msra.mxu0 0.0
    %2432 = vmatpush.msra.mxu0 0.0
    %2433 = vmatpush.msra.mxu0 0.0
    %2434 = vmatpush.msra.mxu0 0.0
    %2435 = vmatpush.msra.mxu0 0.0
    %2436 = vmatpush.msra.mxu0 0.0
    %2437 = vmatpush.msra.mxu0 0.0
    %2438 = vmatpush.msra.mxu0 0.0
    %2439 = vmatpush.msra.mxu0 0.0
    %2440 = vmatpush.msra.mxu0 0.0
    %2441 = vmatpush.msra.mxu0 0.0
    %2442 = vmatpush.msra.mxu0 0.0
    %2443 = vmatpush.msra.mxu0 0.0
    %2444 = vmatpush.msra.mxu0 %v2421
    %2445 = vmatpush.msra.mxu0 %v2419
    %2446 = vmatmul.f32.gmra.mxu0 %v2425
    %v2447 = vpop.f32.mrf.mxu0
    %v2448 = vadd.f32 0.0, %v2447
    %2449 = vmatmul.f32.gmra.mxu0 %v2428
    %v2450 = vpop.f32.mrf.mxu0
    %v2451 = vadd.f32 0.0, %v2450
    %2452 = vdwg.mxu0
    %2455 = vrot.lane.b32.xlu0 %v2378, 8
    %v2456 = vpop.permute.xlu0 %2455
    %2457 = vrot.lane.b32.xlu0 %v2381, 8
    %v2458 = vpop.permute.xlu0 %2457
    %2463 = vrot.lane.b32.xlu0 %v2413, 16
    %v2464 = vpop.permute.xlu0 %2463
    %2465 = vrot.lane.b32.xlu0 %v2416, 16
    %v2466 = vpop.permute.xlu0 %2465
    %2471 = vrot.lane.b32.xlu0 %v2448, 24
    %v2472 = vpop.permute.xlu0 %2471
    %2473 = vrot.lane.b32.xlu0 %v2451, 24
    %v2474 = vpop.permute.xlu0 %2473
    %v2477 = vsel %vm371, %v2343, %v2456
    %v2478 = vsel %vm371, %v2346, %v2458
    %v2479 = vsel %vm690, %v2477, %v2464
    %v2480 = vsel %vm690, %v2478, %v2466
    %v2481 = vsel %vm1035, %v2479, %v2472
    %v2482 = vsel %vm1035, %v2480, %v2474
    %v2484 = vsel %vm68, %v2311, 0
    %v2487 = vsel %vm68, %v2312, 0
    %v2490 = vsel %vm68, %v2481, 0
    %v2493 = vsel %vm68, %v2482, 0
    %2495 = vmatpush.msra.mxu0 0.0
    %2496 = vmatpush.msra.mxu0 0.0
    %2497 = vmatpush.msra.mxu0 0.0
    %2498 = vmatpush.msra.mxu0 0.0
    %2499 = vmatpush.msra.mxu0 0.0
    %2500 = vmatpush.msra.mxu0 0.0
    %2501 = vmatpush.msra.mxu0 0.0
    %2502 = vmatpush.msra.mxu0 0.0
    %2503 = vmatpush.msra.mxu0 0.0
    %2504 = vmatpush.msra.mxu0 0.0
    %2505 = vmatpush.msra.mxu0 0.0
    %2506 = vmatpush.msra.mxu0 0.0
    %2507 = vmatpush.msra.mxu0 %v1486
    %2508 = vmatpush.msra.mxu0 %v1485
    %2509 = vmatpush.msra.mxu0 %v1484
    %2510 = vmatpush.msra.mxu0 %v1483
    %2511 = vmatmul.f32.gmra.mxu0 %v2484
    %v2512 = vpop.f32.mrf.mxu0
    %v2513 = vadd.f32 0.0, %v2512
    %2514 = vmatmul.f32.gmra.mxu0 %v2487
    %v2515 = vpop.f32.mrf.mxu0
    %v2516 = vadd.f32 0.0, %v2515
    %2517 = vmatmul.f32.gmra.mxu0 %v2490
    %v2518 = vpop.f32.mrf.mxu0
    %v2519 = vadd.f32 0.0, %v2518
    %2520 = vmatmul.f32.gmra.mxu0 %v2493
    %v2521 = vpop.f32.mrf.mxu0
    %v2522 = vadd.f32 0.0, %v2521
    %2523 = vdwg.mxu0
    %v2524 = vadd.f32 %v1468, %v2513
    %v2525 = vadd.f32 %v1469, %v2516
    %v2526 = vadd.f32 %v1470, %v2519
    %v2527 = vadd.f32 %v1471, %v2522
    %v2528 = vperm.slane %v1481, 3
    %v2529 = vadd.f32 %v2524, %v2528
    %v2530 = vadd.f32 %v2525, %v2528
    %v2531 = vadd.f32 %v2526, %v2528
    %v2532 = vadd.f32 %v2527, %v2528
    %v2533 = vsel %vm68, %v2529, 0.0
    %2534 = vadd.xlane.f32.xlu0 %v2533
    %v2535 = vpop.xlane.xlu0 %2534
    %v2536 = vsel %vm68, %v2530, 0.0
    %2537 = vadd.xlane.f32.xlu0 %v2536
    %v2538 = vpop.xlane.xlu0 %2537
    %v2539 = vsel %vm68, %v2531, 0.0
    %2540 = vadd.xlane.f32.xlu0 %v2539
    %v2541 = vpop.xlane.xlu0 %2540
    %v2542 = vsel %vm68, %v2532, 0.0
    %2543 = vadd.xlane.f32.xlu0 %v2542
    %v2544 = vpop.xlane.xlu0 %2543
    %v2545 = vmul.f32 %v2535, %v81
    %v2546 = vmul.f32 %v2538, %v81
    %v2547 = vmul.f32 %v2541, %v81
    %v2548 = vmul.f32 %v2544, %v81
    %v2549 = vsub.f32 %v2529, %v2545
    %v2550 = vsub.f32 %v2530, %v2546
    %v2551 = vsub.f32 %v2531, %v2547
    %v2552 = vsub.f32 %v2532, %v2548
    %v2553 = vmul.f32 %v2549, %v2549
    %v2554 = vmul.f32 %v2550, %v2550
    %v2555 = vmul.f32 %v2551, %v2551
    %v2556 = vmul.f32 %v2552, %v2552
    %v2557 = vsel %vm68, %v2553, 0.0
    %2558 = vadd.xlane.f32.xlu0 %v2557
    %v2559 = vpop.xlane.xlu0 %2558
    %v2560 = vsel %vm68, %v2554, 0.0
    %2561 = vadd.xlane.f32.xlu0 %v2560
    %v2562 = vpop.xlane.xlu0 %2561
    %v2563 = vsel %vm68, %v2555, 0.0
    %2564 = vadd.xlane.f32.xlu0 %v2563
    %v2565 = vpop.xlane.xlu0 %2564
    %v2566 = vsel %vm68, %v2556, 0.0
    %2567 = vadd.xlane.f32.xlu0 %v2566
    %v2568 = vpop.xlane.xlu0 %2567
    %v2569 = vmul.f32 %v2559, %v81
    %v2570 = vmul.f32 %v2562, %v81
    %v2571 = vmul.f32 %v2565, %v81
    %v2572 = vmul.f32 %v2568, %v81
    %v2573 = vadd.f32 %v2569, 1e-06
    %v2574 = vadd.f32 %v2570, 1e-06
    %v2575 = vadd.f32 %v2571, 1e-06
    %v2576 = vadd.f32 %v2572, 1e-06
    %v2577 = vrsqrt.pop %v2573
    %v2578 = vmul.f32 %v2577, %v2573
    %v2579 = vmul.f32 %v2578, %v2577
    %v2580 = vmul.f32 0.5, %v2579
    %v2581 = vsub.f32 1.5, %v2580
    %v2582 = vmul.f32 %v2577, %v2581
    %vm2583 = vweird.f32 %v2573
    %vm2584 = vweird.f32 %v2577
    %vm2585 = vmor %vm2583, %vm2584
    %v2586 = vsel %vm2585, %v2577, %v2582
    %v2587 = vrsqrt.pop %v2574
    %v2588 = vmul.f32 %v2587, %v2574
    %v2589 = vmul.f32 %v2588, %v2587
    %v2590 = vmul.f32 0.5, %v2589
    %v2591 = vsub.f32 1.5, %v2590
    %v2592 = vmul.f32 %v2587, %v2591
    %vm2593 = vweird.f32 %v2574
    %vm2594 = vweird.f32 %v2587
    %vm2595 = vmor %vm2593, %vm2594
    %v2596 = vsel %vm2595, %v2587, %v2592
    %v2597 = vrsqrt.pop %v2575
    %v2598 = vmul.f32 %v2597, %v2575
    %v2599 = vmul.f32 %v2598, %v2597
    %v2600 = vmul.f32 0.5, %v2599
    %v2601 = vsub.f32 1.5, %v2600
    %v2602 = vmul.f32 %v2597, %v2601
    %vm2603 = vweird.f32 %v2575
    %vm2604 = vweird.f32 %v2597
    %vm2605 = vmor %vm2603, %vm2604
    %v2606 = vsel %vm2605, %v2597, %v2602
    %v2607 = vrsqrt.pop %v2576
    %v2608 = vmul.f32 %v2607, %v2576
    %v2609 = vmul.f32 %v2608, %v2607
    %v2610 = vmul.f32 0.5, %v2609
    %v2611 = vsub.f32 1.5, %v2610
    %v2612 = vmul.f32 %v2607, %v2611
    %vm2613 = vweird.f32 %v2576
    %vm2614 = vweird.f32 %v2607
    %vm2615 = vmor %vm2613, %vm2614
    %v2616 = vsel %vm2615, %v2607, %v2612
    %v2617 = vmul.f32 %v2549, %v2586
    %v2618 = vmul.f32 %v2550, %v2596
    %v2619 = vmul.f32 %v2551, %v2606
    %v2620 = vmul.f32 %v2552, %v2616
    %v2621 = vperm.slane %v1481, 4
    %v2622 = vmul.f32 %v2617, %v2621
    %v2623 = vmul.f32 %v2618, %v2621
    %v2624 = vmul.f32 %v2619, %v2621
    %v2625 = vmul.f32 %v2620, %v2621
    %v2626 = vperm.slane %v1481, 5
    %v2627 = vadd.f32 %v2622, %v2626
    %v2628 = vadd.f32 %v2623, %v2626
    %v2629 = vadd.f32 %v2624, %v2626
    %v2630 = vadd.f32 %v2625, %v2626
    %v2631 = vperm.slane %v1481, 6
    %v2633 = vsel %vm68, %v2627, 0
    %v2636 = vsel %vm68, %v2628, 0
    %v2639 = vsel %vm68, %v2629, 0
    %v2642 = vsel %vm68, %v2630, 0
    %2644 = vmatpush.msra.mxu0 0.0
    %2645 = vmatpush.msra.mxu0 0.0
    %2646 = vmatpush.msra.mxu0 0.0
    %2647 = vmatpush.msra.mxu0 0.0
    %2648 = vmatpush.msra.mxu0 0.0
    %2649 = vmatpush.msra.mxu0 0.0
    %2650 = vmatpush.msra.mxu0 0.0
    %2651 = vmatpush.msra.mxu0 0.0
    %2652 = vmatpush.msra.mxu0 0.0
    %2653 = vmatpush.msra.mxu0 0.0
    %2654 = vmatpush.msra.mxu0 0.0
    %2655 = vmatpush.msra.mxu0 0.0
    %2656 = vmatpush.msra.mxu0 %v1480
    %2657 = vmatpush.msra.mxu0 %v1479
    %2658 = vmatpush.msra.mxu0 %v1478
    %2659 = vmatpush.msra.mxu0 %v1477
    %2660 = vmatmul.f32.gmra.mxu0 %v2633
    %v2661 = vpop.f32.mrf.mxu0
    %v2662 = vadd.f32 %v2631, %v2661
    %2663 = vmatmul.f32.gmra.mxu0 %v2636
    %v2664 = vpop.f32.mrf.mxu0
    %v2665 = vadd.f32 %v2631, %v2664
    %2666 = vmatmul.f32.gmra.mxu0 %v2639
    %v2667 = vpop.f32.mrf.mxu0
    %v2668 = vadd.f32 %v2631, %v2667
    %2669 = vmatmul.f32.gmra.mxu0 %v2642
    %v2670 = vpop.f32.mrf.mxu0
    %v2671 = vadd.f32 %v2631, %v2670
    %2672 = vdwg.mxu0
    %v2673 = vmul.f32 %v2662, %v2662
    %v2674 = vmul.f32 %v2665, %v2665
    %v2675 = vmul.f32 %v2668, %v2668
    %v2676 = vmul.f32 %v2671, %v2671
    %v2677 = vmul.f32 %v2662, %v2673
    %v2678 = vmul.f32 %v2665, %v2674
    %v2679 = vmul.f32 %v2668, %v2675
    %v2680 = vmul.f32 %v2671, %v2676
    %v2681 = vmul.f32 %v2677, 0.044715
    %v2682 = vmul.f32 %v2678, 0.044715
    %v2683 = vmul.f32 %v2679, 0.044715
    %v2684 = vmul.f32 %v2680, 0.044715
    %v2685 = vadd.f32 %v2662, %v2681
    %v2686 = vadd.f32 %v2665, %v2682
    %v2687 = vadd.f32 %v2668, %v2683
    %v2688 = vadd.f32 %v2671, %v2684
    %v2689 = vmul.f32 %v2685, 0.7978846
    %v2690 = vmul.f32 %v2686, 0.7978846
    %v2691 = vmul.f32 %v2687, 0.7978846
    %v2692 = vmul.f32 %v2688, 0.7978846
    %v2693 = vtanh.pop %v2689
    %v2694 = vtanh.pop %v2690
    %v2695 = vtanh.pop %v2691
    %v2696 = vtanh.pop %v2692
    %v2697 = vadd.f32 %v2693, 1.0
    %v2698 = vadd.f32 %v2694, 1.0
    %v2699 = vadd.f32 %v2695, 1.0
    %v2700 = vadd.f32 %v2696, 1.0
    %v2701 = vmul.f32 %v2697, 0.5
    %v2702 = vmul.f32 %v2698, 0.5
    %v2703 = vmul.f32 %v2699, 0.5
    %v2704 = vmul.f32 %v2700, 0.5
    %v2705 = vmul.f32 %v2662, %v2701
    %v2706 = vmul.f32 %v2665, %v2702
    %v2707 = vmul.f32 %v2668, %v2703
    %v2708 = vmul.f32 %v2671, %v2704
    %2709 = vmatpush.msra.mxu0 %v1502
    %2710 = vmatpush.msra.mxu0 %v1501
    %2711 = vmatpush.msra.mxu0 %v1500
    %2712 = vmatpush.msra.mxu0 %v1499
    %2713 = vmatpush.msra.mxu0 %v1498
    %2714 = vmatpush.msra.mxu0 %v1497
    %2715 = vmatpush.msra.mxu0 %v1496
    %2716 = vmatpush.msra.mxu0 %v1495
    %2717 = vmatpush.msra.mxu0 %v1494
    %2718 = vmatpush.msra.mxu0 %v1493
    %2719 = vmatpush.msra.mxu0 %v1492
    %2720 = vmatpush.msra.mxu0 %v1491
    %2721 = vmatpush.msra.mxu0 %v1490
    %2722 = vmatpush.msra.mxu0 %v1489
    %2723 = vmatpush.msra.mxu0 %v1488
    %2724 = vmatpush.msra.mxu0 %v1487
    %2725 = vmatmul.f32.gmra.mxu0 %v2705
    %v2726 = vpop.f32.mrf.mxu0
    %v2727 = vadd.f32 0.0, %v2726
    %2728 = vmatmul.f32.gmra.mxu0 %v2706
    %v2729 = vpop.f32.mrf.mxu0
    %v2730 = vadd.f32 0.0, %v2729
    %2731 = vmatmul.f32.gmra.mxu0 %v2707
    %v2732 = vpop.f32.mrf.mxu0
    %v2733 = vadd.f32 0.0, %v2732
    %2734 = vmatmul.f32.gmra.mxu0 %v2708
    %v2735 = vpop.f32.mrf.mxu0
    %v2736 = vadd.f32 0.0, %v2735
    %2737 = vdwg.mxu0
    %v2738 = vadd.f32 %v2529, %v2727
    %v2739 = vadd.f32 %v2530, %v2730
    %v2740 = vadd.f32 %v2531, %v2733
    %v2741 = vadd.f32 %v2532, %v2736
    %v2742 = vperm.slane %v1481, 7
    %v2743 = vadd.f32 %v2738, %v2742
    %v2744 = vadd.f32 %v2739, %v2742
    %v2745 = vadd.f32 %v2740, %v2742
    %v2746 = vadd.f32 %v2741, %v2742
    %2747 = vst.msk [vmem:[#allocation2] sm:$0xff] %vm68, %v2743
    %2748 = vst.msk [vmem:[#allocation2 + $0x8] sm:$0xff] %vm68, %v2744
    %2749 = vst.msk [vmem:[#allocation2 + $0x10] sm:$0xff] %vm68, %v2745
    %2750 = vst.msk [vmem:[#allocation2 + $0x18] sm:$0xff] %vm68, %v2746
    // Predicated region
    $region26: #{vilt_forward.1} parent=1 // pred_check
      _
    $region27: #{vilt_forward.1} parent=1 // pred_check_branch
      %2752 = sbr.rel (0) target = $region29
    $region28: #{vilt_forward.1} parent=1 // pred_region
      %2754 = vsyncadd [#allocation3], 0
      %s2755 = sshll.u32 [#allocation2], 4
      %s2756 = int_to_ptr.vmem [resolvable:$true] %s2755
      %s2757 = sshll.u32 %s6, 4
      %s2758 = int_to_ptr.hbm [resolvable:$true] %s2757
      %2763 = dma.vmem_to_hbm [thread:$0]  %s2756, 512, %s2758, [#allocation3], 128, 128, 8
    $region29: #{vilt_forward.1} parent=1 // pred_fallthru
      _
    // Predicated region
    $region30: #{vilt_forward.1} parent=1 // pred_check
      _
    $region31: #{vilt_forward.1} parent=1 // pred_check_branch
      %2765 = sbr.rel (0) target = $region33
    $region32: #{vilt_forward.1} parent=1 // pred_region
      %2767 = dma.done [#allocation3], 512
    $region33: #{vilt_forward.1} parent=1 // pred_fallthru
      _
    %2768 = vsyncpa [#allocation3], 1

</llo_original>
